<compile_context>
chip_gen: v7x
topology: tpu7x:2x2x1
jax: 0.10.0
libtpu: 0.0.40
codegen_flags: <defaults>
</compile_context>

<pallas_src>
import functools

import jax
import jax.numpy as jnp
from jax.experimental import pallas as pl
from jax.experimental.pallas import tpu as pltpu

# ---------------- SNN hyper-parameters (from the PyTorch file) ------------
THRESH = 0.25
DECAY = 0.1
TIME_STEPS = 4

# (in_planes, out_planes, stride, padding, kernel_size)
CFG_CNN = [
    (2, 8, 1, 1, 3),
    (8, 8, 1, 1, 3),
    (8, 16, 1, 1, 3),
    (16, 16, 1, 1, 3),
    (16, 16, 1, 1, 3),
]
CFG_KERNEL = [16, 16, 8, 4, 4]   # spatial size of each conv layer's state
CFG_FC = [64, 32, 10]

MARGIN = 128  # lane margin on both sides of every shift-read VMEM buffer


# ---------------- fully fused per-time-step kernel --------------------------
def _scnn_kernel(Bc,
                 x_ref,
                 w1, b1, w2, b2, w3, b3, w4, b4, w5, b5,
                 m16, m8, m4, pool1, pool2,
                 wf1, bf1, wf2, bf2, wf3, bf3,
                 out_ref,
                 src1, spk1, mem1, spk2, mem2,
                 in3, spk3, mem3,
                 in4, mem4, spk4, mem5, spk5,
                 win,
                 memh1, spkh1, memh2, spkh2, memh3, spkh3):
    t = pl.program_id(1)
    P1, P3, P4 = Bc * 256, Bc * 64, Bc * 16

    @pl.when(t == 0)
    def _init():
        # NOTE: the MARGIN regions of src1/spk1/in3/in4/spk4/spk5 must stay
        # zero after this init -- they provide the implicit zero padding for
        # the shifted-window reads.  Only their interiors are rewritten below.
        for r in (src1, spk1, spk2, in3, spk3, in4, spk4, spk5,
                  mem1, mem2, mem3, mem4, mem5,
                  memh1, spkh1, memh2, spkh2, memh3, spkh3):
            r[...] = jnp.zeros_like(r)
        out_ref[...] = jnp.zeros_like(out_ref)

    # Stage the Bernoulli-encoded frame into the margin-padded conv1 source.
    src1[:, MARGIN:MARGIN + P1] = x_ref[...]

    def conv3x3(src_ref, mask_ref, w_ref, b_ref, cin, img_w, P):
        """3x3 'same' conv as ONE matmul: (Cout, 9*Cin) @ (9*Cin, P)."""
        j = 0
        for dh in (-1, 0, 1):
            for dw in (-1, 0, 1):
                delta = dh * img_w + dw
                shifted = src_ref[:, MARGIN + delta:MARGIN + delta + P]
                win[j * cin:(j + 1) * cin, 0:P] = shifted * mask_ref[j:j + 1, :]
                j += 1
        acc = jnp.dot(w_ref[...], win[0:9 * cin, 0:P],
                      preferred_element_type=jnp.float32)
        return acc + b_ref[...]

    def lif(mem_ref, spike_prev_f32, outx_f32):
        """mem = mem*decay*(1-spike) + outx ; spike = (mem > thresh)."""
        mem_new = mem_ref[...] * (DECAY * (1.0 - spike_prev_f32)) + outx_f32
        mem_ref[...] = mem_new
        return (mem_new > THRESH).astype(jnp.bfloat16)

    # ---- conv1 (2 -> 8, 16x16) ----
    o1 = conv3x3(src1, m16, w1, b1, 2, 16, P1)
    s1 = lif(mem1, spk1[:, MARGIN:MARGIN + P1].astype(jnp.float32), o1)
    spk1[:, MARGIN:MARGIN + P1] = s1

    # ---- conv2 (8 -> 8, 16x16) ----
    o2 = conv3x3(spk1, m16, w2, b2, 8, 16, P1)
    s2 = lif(mem2, spk2[...].astype(jnp.float32), o2)
    spk2[...] = s2

    # ---- 2x2 avg pool 16x16 -> 8x8 (per-batch matmul, batch-independent 0.25 matrix)
    for b in range(Bc):
        blk = spk2[:, b * 256:(b + 1) * 256]
        pooled = jnp.dot(blk, pool1[...], preferred_element_type=jnp.float32)
        in3[:, MARGIN + b * 64:MARGIN + (b + 1) * 64] = pooled.astype(jnp.bfloat16)

    # ---- conv3 (8 -> 16, 8x8) ----
    o3 = conv3x3(in3, m8, w3, b3, 8, 8, P3)
    s3 = lif(mem3, spk3[...].astype(jnp.float32), o3)
    spk3[...] = s3

    # ---- 2x2 avg pool 8x8 -> 4x4 ----
    for b in range(Bc):
        blk = spk3[:, b * 64:(b + 1) * 64]
        pooled = jnp.dot(blk, pool2[...], preferred_element_type=jnp.float32)
        in4[:, MARGIN + b * 16:MARGIN + (b + 1) * 16] = pooled.astype(jnp.bfloat16)

    # ---- conv4 (16 -> 16, 4x4) ----
    o4 = conv3x3(in4, m4, w4, b4, 16, 4, P4)
    s4 = lif(mem4, spk4[:, MARGIN:MARGIN + P4].astype(jnp.float32), o4)
    spk4[:, MARGIN:MARGIN + P4] = s4

    # ---- conv5 (16 -> 16, 4x4) ----
    o5 = conv3x3(spk4, m4, w5, b5, 16, 4, P4)
    s5 = lif(mem5, spk5[:, MARGIN:MARGIN + P4].astype(jnp.float32), o5)
    spk5[:, MARGIN:MARGIN + P4] = s5

    # ---- fc1: x.view(batch, -1) realised as 16 lane shifts of conv5 spikes
    # into a (256, P4) stacked buffer + a permuted fc1 weight.  Only lanes
    # b*16 of the FC pipeline carry valid data; the rest is harmless garbage
    # that the host discards.
    for hw in range(16):
        win[hw * 16:(hw + 1) * 16, 0:P4] = spk5[:, MARGIN + hw:MARGIN + hw + P4]
    h1 = jnp.dot(wf1[...], win[0:256, 0:P4],
                 preferred_element_type=jnp.float32) + bf1[...]
    sh1 = lif(memh1, spkh1[...].astype(jnp.float32), h1)
    spkh1[...] = sh1

    # ---- fc2 ----
    h2 = jnp.dot(wf2[...], sh1, preferred_element_type=jnp.float32) + bf2[...]
    sh2 = lif(memh2, spkh2[...].astype(jnp.float32), h2)
    spkh2[...] = sh2

    # ---- fc3 + h3_sumspike accumulation ----
    h3 = jnp.dot(wf3[...], sh2, preferred_element_type=jnp.float32) + bf3[...]
    mh3 = memh3[...] * (DECAY * (1.0 - spkh3[...])) + h3
    sh3 = (mh3 > THRESH).astype(jnp.float32)
    memh3[...] = mh3
    spkh3[...] = sh3
    out_ref[...] = out_ref[...] + sh3


def _make_scnn_call(Bc, NC, T):
    P1, P3, P4 = Bc * 256, Bc * 64, Bc * 16
    Mb1 = MARGIN + P1 + MARGIN
    Mb3 = MARGIN + P3 + MARGIN
    Mb4 = MARGIN + P4 + MARGIN
    n1, n2, n3 = CFG_FC
    bf, f32 = jnp.bfloat16, jnp.float32

    c2 = lambda nc, t: (0, 0)

    in_specs = [
        pl.BlockSpec((None, None, 2, P1), lambda nc, t: (nc, t, 0, 0)),   # encoded frame
        pl.BlockSpec((8, 18), c2),   pl.BlockSpec((8, 1), c2),            # conv1 w/b
        pl.BlockSpec((8, 72), c2),   pl.BlockSpec((8, 1), c2),            # conv2 w/b
        pl.BlockSpec((16, 72), c2),  pl.BlockSpec((16, 1), c2),           # conv3 w/b
        pl.BlockSpec((16, 144), c2), pl.BlockSpec((16, 1), c2),           # conv4 w/b
        pl.BlockSpec((16, 144), c2), pl.BlockSpec((16, 1), c2),           # conv5 w/b
        pl.BlockSpec((9, P1), c2),                                        # border masks 16x16
        pl.BlockSpec((9, P3), c2),                                        # border masks 8x8
        pl.BlockSpec((9, P4), c2),                                        # border masks 4x4
        pl.BlockSpec((256, 64), c2), pl.BlockSpec((64, 16), c2),          # pool matrices
        pl.BlockSpec((n1, 256), c2), pl.BlockSpec((n1, 1), c2),           # fc1 w/b
        pl.BlockSpec((n2, n1), c2),  pl.BlockSpec((n2, 1), c2),           # fc2 w/b
        pl.BlockSpec((n3, n2), c2),  pl.BlockSpec((n3, 1), c2),           # fc3 w/b
    ]
    out_spec = pl.BlockSpec((None, n3, P4), lambda nc, t: (nc, 0, 0))

    scratch = [
        pltpu.VMEM((2, Mb1), bf),      # src1   (margin-padded conv1 source)
        pltpu.VMEM((8, Mb1), bf),      # spk1   (margin-padded)
        pltpu.VMEM((8, P1), f32),      # mem1
        pltpu.VMEM((8, P1), bf),       # spk2
        pltpu.VMEM((8, P1), f32),      # mem2
        pltpu.VMEM((8, Mb3), bf),      # in3    (pooled spk2, margin-padded)
        pltpu.VMEM((16, P3), bf),      # spk3
        pltpu.VMEM((16, P3), f32),     # mem3
        pltpu.VMEM((16, Mb4), bf),     # in4    (pooled spk3, margin-padded)
        pltpu.VMEM((16, P4), f32),     # mem4
        pltpu.VMEM((16, Mb4), bf),     # spk4   (margin-padded)
        pltpu.VMEM((16, P4), f32),     # mem5
        pltpu.VMEM((16, Mb4), bf),     # spk5   (margin-padded, for the FC flatten)
        pltpu.VMEM((256, P1), bf),     # shared stacked-window buffer
        pltpu.VMEM((n1, P4), f32),     # memh1
        pltpu.VMEM((n1, P4), bf),      # spkh1
        pltpu.VMEM((n2, P4), f32),     # memh2
        pltpu.VMEM((n2, P4), bf),      # spkh2
        pltpu.VMEM((n3, P4), f32),     # memh3
        pltpu.VMEM((n3, P4), f32),     # spkh3
    ]

    grid_spec = pltpu.PrefetchScalarGridSpec(
        num_scalar_prefetch=0, grid=(NC, T),
        in_specs=in_specs, out_specs=out_spec, scratch_shapes=scratch)

    return pl.pallas_call(
        functools.partial(_scnn_kernel, Bc),
        out_shape=jax.ShapeDtypeStruct((NC, CFG_FC[-1], P4), jnp.float32),
        grid_spec=grid_spec,
        compiler_params=pltpu.CompilerParams(
            dimension_semantics=("parallel", "arbitrary")),
    )


# ---------------- host-side prep (done once per call, outside the T loop) --
def _pack_conv(w):
    """(cout, cin, 3, 3) -> (cout, 9*cin) bf16, offset-major ((kh,kw) outer)."""
    cout, cin, k, _ = w.shape
    return jnp.transpose(w, (0, 2, 3, 1)).reshape(cout, k * k * cin).astype(jnp.bfloat16)


def _border_masks(Bc, H, W):
    """(9, Bc*H*W) validity masks for the 9 shifted-window reads."""
    P = Bc * H * W
    p = jnp.arange(P)
    h = (p // W) % H
    w = p % W
    rows = []
    for dh in (-1, 0, 1):
        for dw in (-1, 0, 1):
            ok = (h + dh >= 0) & (h + dh < H) & (w + dw >= 0) & (w + dw < W)
            rows.append(ok)
    return jnp.stack(rows).astype(jnp.bfloat16)


def _pool_matrix(H, W):
    """Exact 2x2 average pooling as a batch-independent (H*W, Ho*Wo) matmul."""
    Ho, Wo = H // 2, W // 2
    idx = jnp.arange(H * W)
    h, w = idx // W, idx % W
    tgt = (h // 2) * Wo + (w // 2)
    return (jax.nn.one_hot(tgt, Ho * Wo, dtype=jnp.float32) * 0.25).astype(jnp.bfloat16)


# ---------------- Parameter init (deterministic, PyTorch layouts/bounds) ----
def init_params(key):
    params = {}
    for i, (cin, cout, _s, _p, k) in enumerate(CFG_CNN):
        key, kw, kb = jax.random.split(key, 3)
        bound = 1.0 / (cin * k * k) ** 0.5
        params[f"conv{i + 1}_w"] = jax.random.uniform(
            kw, (cout, cin, k, k), jnp.float32, -bound, bound)
        params[f"conv{i + 1}_b"] = jax.random.uniform(
            kb, (cout,), jnp.float32, -bound, bound)
    fc_in = CFG_KERNEL[-1] * CFG_KERNEL[-1] * CFG_CNN[-1][1]
    dims = [fc_in] + CFG_FC
    for i in range(3):
        key, kw, kb = jax.random.split(key, 3)
        bound = 1.0 / dims[i] ** 0.5
        params[f"fc{i + 1}_w"] = jax.random.uniform(          # torch layout (out, in)
            kw, (dims[i + 1], dims[i]), jnp.float32, -bound, bound)
        params[f"fc{i + 1}_b"] = jax.random.uniform(
            kb, (dims[i + 1],), jnp.float32, -bound, bound)
    return params


# ---------------- SCNN.forward ---------------------------------------------
@jax.jit
def scnn_forward(params, x_nchw, key):
    B, Cin, H, W = x_nchw.shape
    T = TIME_STEPS
    # Split the batch into chunks for v7x's 2 TensorCores (no-op elsewhere).
    NC = 2 if (B % 2 == 0 and B >= 2) else 1
    Bc = B // NC

    x = x_nchw.astype(jnp.float32)
    # Bernoulli rate coding for all time steps (torch.rand comparison).
    rand = jax.random.uniform(key, (T,) + x.shape, jnp.float32)
    enc = (x[None] > rand).astype(jnp.bfloat16)                      # (T, B, 2, 16, 16)
    enc = enc.reshape(T, NC, Bc, Cin, H * W)
    enc = jnp.transpose(enc, (1, 0, 3, 2, 4)).reshape(NC, T, Cin, Bc * H * W)

    wp = [_pack_conv(params[f"conv{i + 1}_w"]) for i in range(5)]
    cb = [params[f"conv{i + 1}_b"].astype(jnp.float32).reshape(-1, 1) for i in range(5)]

    m16 = _border_masks(Bc, 16, 16)
    m8 = _border_masks(Bc, 8, 8)
    m4 = _border_masks(Bc, 4, 4)
    pool1 = _pool_matrix(16, 16)
    pool2 = _pool_matrix(8, 8)

    n1, n2, n3 = CFG_FC
    C5 = CFG_CNN[-1][1]                 # 16 channels after conv5
    HW5 = CFG_KERNEL[-1] ** 2           # 4*4 = 16 pixels after conv5
    # fc1 weight re-packed so column index = hw*C5 + c (matches the in-kernel
    # shifted-window flatten); torch flatten order is c*HW5 + hw.
    wf1 = params["fc1_w"].reshape(n1, C5, HW5).transpose(0, 2, 1).reshape(n1, C5 * HW5)
    wf1 = wf1.astype(jnp.bfloat16)
    wf2 = params["fc2_w"].astype(jnp.bfloat16)
    wf3 = params["fc3_w"].astype(jnp.bfloat16)
    bf1 = params["fc1_b"].astype(jnp.float32).reshape(-1, 1)
    bf2 = params["fc2_b"].astype(jnp.float32).reshape(-1, 1)
    bf3 = params["fc3_b"].astype(jnp.float32).reshape(-1, 1)

    call = _make_scnn_call(Bc, NC, T)
    out = call(enc,
               wp[0], cb[0], wp[1], cb[1], wp[2], cb[2], wp[3], cb[3], wp[4], cb[4],
               m16, m8, m4, pool1, pool2,
               wf1, bf1, wf2, bf2, wf3, bf3)                         # (NC, 10, Bc*16)

    # Only lanes b*16 of the fused FC pipeline carry real data.
    valid = out[:, :, ::HW5]                                         # (NC, 10, Bc)
    h3_sum = jnp.transpose(valid, (0, 2, 1)).reshape(B, n3)
    # frame != 'fedDis' -> return only the averaged output spikes
    return h3_sum / T


if __name__ == "__main__":
    key = jax.random.PRNGKey(0)
    k_param, k_data, k_run = jax.random.split(key, 3)

    params = init_params(k_param)
    B = 2
    x = jax.random.uniform(k_data,
                           (B, CFG_CNN[0][0], CFG_KERNEL[0], CFG_KERNEL[0]),
                           jnp.float32)  # NCHW, like the PyTorch module

    out = scnn_forward(params, x, k_run)
    out = jax.block_until_ready(out)
    assert out.shape == (B, CFG_FC[-1]), out.shape
    print("KERNEL_OK")
</pallas_src>

<mosaic_0001>
module attributes {stable_mosaic.version = 11 : i64} {
  func.func @_scnn_kernel(%arg0: i32, %arg1: i32, %arg2: memref<1x1x2x256xbf16, #tpu.memory_space<vmem>>, %arg3: memref<8x18xbf16, #tpu.memory_space<vmem>>, %arg4: memref<8x1xf32, #tpu.memory_space<vmem>>, %arg5: memref<8x72xbf16, #tpu.memory_space<vmem>>, %arg6: memref<8x1xf32, #tpu.memory_space<vmem>>, %arg7: memref<16x72xbf16, #tpu.memory_space<vmem>>, %arg8: memref<16x1xf32, #tpu.memory_space<vmem>>, %arg9: memref<16x144xbf16, #tpu.memory_space<vmem>>, %arg10: memref<16x1xf32, #tpu.memory_space<vmem>>, %arg11: memref<16x144xbf16, #tpu.memory_space<vmem>>, %arg12: memref<16x1xf32, #tpu.memory_space<vmem>>, %arg13: memref<9x256xbf16, #tpu.memory_space<vmem>>, %arg14: memref<9x64xbf16, #tpu.memory_space<vmem>>, %arg15: memref<9x16xbf16, #tpu.memory_space<vmem>>, %arg16: memref<256x64xbf16, #tpu.memory_space<vmem>>, %arg17: memref<64x16xbf16, #tpu.memory_space<vmem>>, %arg18: memref<64x256xbf16, #tpu.memory_space<vmem>>, %arg19: memref<64x1xf32, #tpu.memory_space<vmem>>, %arg20: memref<32x64xbf16, #tpu.memory_space<vmem>>, %arg21: memref<32x1xf32, #tpu.memory_space<vmem>>, %arg22: memref<10x32xbf16, #tpu.memory_space<vmem>>, %arg23: memref<10x1xf32, #tpu.memory_space<vmem>>, %arg24: memref<1x10x16xf32, #tpu.memory_space<vmem>>, %arg25: memref<2x512xbf16, #tpu.memory_space<vmem>>, %arg26: memref<8x512xbf16, #tpu.memory_space<vmem>>, %arg27: memref<8x256xf32, #tpu.memory_space<vmem>>, %arg28: memref<8x256xbf16, #tpu.memory_space<vmem>>, %arg29: memref<8x256xf32, #tpu.memory_space<vmem>>, %arg30: memref<8x320xbf16, #tpu.memory_space<vmem>>, %arg31: memref<16x64xbf16, #tpu.memory_space<vmem>>, %arg32: memref<16x64xf32, #tpu.memory_space<vmem>>, %arg33: memref<16x272xbf16, #tpu.memory_space<vmem>>, %arg34: memref<16x16xf32, #tpu.memory_space<vmem>>, %arg35: memref<16x272xbf16, #tpu.memory_space<vmem>>, %arg36: memref<16x16xf32, #tpu.memory_space<vmem>>, %arg37: memref<16x272xbf16, #tpu.memory_space<vmem>>, %arg38: memref<256x256xbf16, #tpu.memory_space<vmem>>, %arg39: memref<64x16xf32, #tpu.memory_space<vmem>>, %arg40: memref<64x16xbf16, #tpu.memory_space<vmem>>, %arg41: memref<32x16xf32, #tpu.memory_space<vmem>>, %arg42: memref<32x16xbf16, #tpu.memory_space<vmem>>, %arg43: memref<10x16xf32, #tpu.memory_space<vmem>>, %arg44: memref<10x16xf32, #tpu.memory_space<vmem>>) attributes {dimension_semantics = [#tpu.dimension_semantics<parallel>, #tpu.dimension_semantics<arbitrary>], iteration_bounds = array<i64: 2, 4>, scalar_prefetch = 0 : i64, scratch_operands = 20 : i64, tpu.core_type = #tpu.core_type<tc>, window_params = [{transform_indices = @transform_0, window_bounds = array<i64: 1, 1, 2, 256>}, {pipeline_mode = #tpu.pipeline_mode<synchronous>, transform_indices = @transform_1, window_bounds = array<i64: 8, 18>}, {pipeline_mode = #tpu.pipeline_mode<synchronous>, transform_indices = @transform_2, window_bounds = array<i64: 8, 1>}, {pipeline_mode = #tpu.pipeline_mode<synchronous>, transform_indices = @transform_3, window_bounds = array<i64: 8, 72>}, {pipeline_mode = #tpu.pipeline_mode<synchronous>, transform_indices = @transform_4, window_bounds = array<i64: 8, 1>}, {pipeline_mode = #tpu.pipeline_mode<synchronous>, transform_indices = @transform_5, window_bounds = array<i64: 16, 72>}, {pipeline_mode = #tpu.pipeline_mode<synchronous>, transform_indices = @transform_6, window_bounds = array<i64: 16, 1>}, {pipeline_mode = #tpu.pipeline_mode<synchronous>, transform_indices = @transform_7, window_bounds = array<i64: 16, 144>}, {pipeline_mode = #tpu.pipeline_mode<synchronous>, transform_indices = @transform_8, window_bounds = array<i64: 16, 1>}, {pipeline_mode = #tpu.pipeline_mode<synchronous>, transform_indices = @transform_9, window_bounds = array<i64: 16, 144>}, {pipeline_mode = #tpu.pipeline_mode<synchronous>, transform_indices = @transform_10, window_bounds = array<i64: 16, 1>}, {pipeline_mode = #tpu.pipeline_mode<synchronous>, transform_indices = @transform_11, window_bounds = array<i64: 9, 256>}, {pipeline_mode = #tpu.pipeline_mode<synchronous>, transform_indices = @transform_12, window_bounds = array<i64: 9, 64>}, {pipeline_mode = #tpu.pipeline_mode<synchronous>, transform_indices = @transform_13, window_bounds = array<i64: 9, 16>}, {pipeline_mode = #tpu.pipeline_mode<synchronous>, transform_indices = @transform_14, window_bounds = array<i64: 256, 64>}, {pipeline_mode = #tpu.pipeline_mode<synchronous>, transform_indices = @transform_15, window_bounds = array<i64: 64, 16>}, {pipeline_mode = #tpu.pipeline_mode<synchronous>, transform_indices = @transform_16, window_bounds = array<i64: 64, 256>}, {pipeline_mode = #tpu.pipeline_mode<synchronous>, transform_indices = @transform_17, window_bounds = array<i64: 64, 1>}, {pipeline_mode = #tpu.pipeline_mode<synchronous>, transform_indices = @transform_18, window_bounds = array<i64: 32, 64>}, {pipeline_mode = #tpu.pipeline_mode<synchronous>, transform_indices = @transform_19, window_bounds = array<i64: 32, 1>}, {pipeline_mode = #tpu.pipeline_mode<synchronous>, transform_indices = @transform_20, window_bounds = array<i64: 10, 32>}, {pipeline_mode = #tpu.pipeline_mode<synchronous>, transform_indices = @transform_21, window_bounds = array<i64: 10, 1>}, {transform_indices = @transform_22, window_bounds = array<i64: 1, 10, 16>}]} {
    %c0_i32 = arith.constant 0 : i32
    %0 = arith.cmpi eq, %arg1, %c0_i32 : i32
    %1 = arith.extui %0 : i1 to i32
    %c0_i32_0 = arith.constant 0 : i32
    %2 = arith.cmpi ne, %1, %c0_i32_0 : i32
    scf.if %2 {
      %cst_445 = arith.constant 0.000000e+00 : bf16
      %451 = vector.broadcast %cst_445 : bf16 to vector<2x512xbf16>
      %c0_446 = arith.constant 0 : index
      %c0_447 = arith.constant 0 : index
      %452 = vector.load %arg25[%c0_446, %c0_447] : memref<2x512xbf16, #tpu.memory_space<vmem>>, vector<2x512xbf16>
      tpu.vector_store %arg25[%c0_446, %c0_447], %451 {strides = array<i32>} : memref<2x512xbf16, #tpu.memory_space<vmem>>, vector<2x512xbf16>,
      %cst_448 = arith.constant 0.000000e+00 : bf16
      %453 = vector.broadcast %cst_448 : bf16 to vector<8x512xbf16>
      %c0_449 = arith.constant 0 : index
      %c0_450 = arith.constant 0 : index
      %454 = vector.load %arg26[%c0_449, %c0_450] : memref<8x512xbf16, #tpu.memory_space<vmem>>, vector<8x512xbf16>
      tpu.vector_store %arg26[%c0_449, %c0_450], %453 {strides = array<i32>} : memref<8x512xbf16, #tpu.memory_space<vmem>>, vector<8x512xbf16>,
      %cst_451 = arith.constant 0.000000e+00 : bf16
      %455 = vector.broadcast %cst_451 : bf16 to vector<8x256xbf16>
      %c0_452 = arith.constant 0 : index
      %c0_453 = arith.constant 0 : index
      %456 = vector.load %arg28[%c0_452, %c0_453] : memref<8x256xbf16, #tpu.memory_space<vmem>>, vector<8x256xbf16>
      tpu.vector_store %arg28[%c0_452, %c0_453], %455 {strides = array<i32>} : memref<8x256xbf16, #tpu.memory_space<vmem>>, vector<8x256xbf16>,
      %cst_454 = arith.constant 0.000000e+00 : bf16
      %457 = vector.broadcast %cst_454 : bf16 to vector<8x320xbf16>
      %c0_455 = arith.constant 0 : index
      %c0_456 = arith.constant 0 : index
      %458 = vector.load %arg30[%c0_455, %c0_456] : memref<8x320xbf16, #tpu.memory_space<vmem>>, vector<8x320xbf16>
      tpu.vector_store %arg30[%c0_455, %c0_456], %457 {strides = array<i32>} : memref<8x320xbf16, #tpu.memory_space<vmem>>, vector<8x320xbf16>,
      %cst_457 = arith.constant 0.000000e+00 : bf16
      %459 = vector.broadcast %cst_457 : bf16 to vector<16x64xbf16>
      %c0_458 = arith.constant 0 : index
      %c0_459 = arith.constant 0 : index
      %460 = vector.load %arg31[%c0_458, %c0_459] : memref<16x64xbf16, #tpu.memory_space<vmem>>, vector<16x64xbf16>
      tpu.vector_store %arg31[%c0_458, %c0_459], %459 {strides = array<i32>} : memref<16x64xbf16, #tpu.memory_space<vmem>>, vector<16x64xbf16>,
      %cst_460 = arith.constant 0.000000e+00 : bf16
      %461 = vector.broadcast %cst_460 : bf16 to vector<16x272xbf16>
      %c0_461 = arith.constant 0 : index
      %c0_462 = arith.constant 0 : index
      %462 = vector.load %arg33[%c0_461, %c0_462] : memref<16x272xbf16, #tpu.memory_space<vmem>>, vector<16x272xbf16>
      tpu.vector_store %arg33[%c0_461, %c0_462], %461 {strides = array<i32>} : memref<16x272xbf16, #tpu.memory_space<vmem>>, vector<16x272xbf16>,
      %cst_463 = arith.constant 0.000000e+00 : bf16
      %463 = vector.broadcast %cst_463 : bf16 to vector<16x272xbf16>
      %c0_464 = arith.constant 0 : index
      %c0_465 = arith.constant 0 : index
      %464 = vector.load %arg35[%c0_464, %c0_465] : memref<16x272xbf16, #tpu.memory_space<vmem>>, vector<16x272xbf16>
      tpu.vector_store %arg35[%c0_464, %c0_465], %463 {strides = array<i32>} : memref<16x272xbf16, #tpu.memory_space<vmem>>, vector<16x272xbf16>,
      %cst_466 = arith.constant 0.000000e+00 : bf16
      %465 = vector.broadcast %cst_466 : bf16 to vector<16x272xbf16>
      %c0_467 = arith.constant 0 : index
      %c0_468 = arith.constant 0 : index
      %466 = vector.load %arg37[%c0_467, %c0_468] : memref<16x272xbf16, #tpu.memory_space<vmem>>, vector<16x272xbf16>
      tpu.vector_store %arg37[%c0_467, %c0_468], %465 {strides = array<i32>} : memref<16x272xbf16, #tpu.memory_space<vmem>>, vector<16x272xbf16>,
      %cst_469 = arith.constant 0.000000e+00 : f32
      %467 = vector.broadcast %cst_469 : f32 to vector<8x256xf32>
      %c0_470 = arith.constant 0 : index
      %c0_471 = arith.constant 0 : index
      %468 = vector.load %arg27[%c0_470, %c0_471] : memref<8x256xf32, #tpu.memory_space<vmem>>, vector<8x256xf32>
      tpu.vector_store %arg27[%c0_470, %c0_471], %467 {strides = array<i32>} : memref<8x256xf32, #tpu.memory_space<vmem>>, vector<8x256xf32>,
      %cst_472 = arith.constant 0.000000e+00 : f32
      %469 = vector.broadcast %cst_472 : f32 to vector<8x256xf32>
      %c0_473 = arith.constant 0 : index
      %c0_474 = arith.constant 0 : index
      %470 = vector.load %arg29[%c0_473, %c0_474] : memref<8x256xf32, #tpu.memory_space<vmem>>, vector<8x256xf32>
      tpu.vector_store %arg29[%c0_473, %c0_474], %469 {strides = array<i32>} : memref<8x256xf32, #tpu.memory_space<vmem>>, vector<8x256xf32>,
      %cst_475 = arith.constant 0.000000e+00 : f32
      %471 = vector.broadcast %cst_475 : f32 to vector<16x64xf32>
      %c0_476 = arith.constant 0 : index
      %c0_477 = arith.constant 0 : index
      %472 = vector.load %arg32[%c0_476, %c0_477] : memref<16x64xf32, #tpu.memory_space<vmem>>, vector<16x64xf32>
      tpu.vector_store %arg32[%c0_476, %c0_477], %471 {strides = array<i32>} : memref<16x64xf32, #tpu.memory_space<vmem>>, vector<16x64xf32>,
      %cst_478 = arith.constant 0.000000e+00 : f32
      %473 = vector.broadcast %cst_478 : f32 to vector<16x16xf32>
      %c0_479 = arith.constant 0 : index
      %c0_480 = arith.constant 0 : index
      %474 = vector.load %arg34[%c0_479, %c0_480] : memref<16x16xf32, #tpu.memory_space<vmem>>, vector<16x16xf32>
      tpu.vector_store %arg34[%c0_479, %c0_480], %473 {strides = array<i32>} : memref<16x16xf32, #tpu.memory_space<vmem>>, vector<16x16xf32>,
      %cst_481 = arith.constant 0.000000e+00 : f32
      %475 = vector.broadcast %cst_481 : f32 to vector<16x16xf32>
      %c0_482 = arith.constant 0 : index
      %c0_483 = arith.constant 0 : index
      %476 = vector.load %arg36[%c0_482, %c0_483] : memref<16x16xf32, #tpu.memory_space<vmem>>, vector<16x16xf32>
      tpu.vector_store %arg36[%c0_482, %c0_483], %475 {strides = array<i32>} : memref<16x16xf32, #tpu.memory_space<vmem>>, vector<16x16xf32>,
      %cst_484 = arith.constant 0.000000e+00 : f32
      %477 = vector.broadcast %cst_484 : f32 to vector<64x16xf32>
      %c0_485 = arith.constant 0 : index
      %c0_486 = arith.constant 0 : index
      %478 = vector.load %arg39[%c0_485, %c0_486] : memref<64x16xf32, #tpu.memory_space<vmem>>, vector<64x16xf32>
      tpu.vector_store %arg39[%c0_485, %c0_486], %477 {strides = array<i32>} : memref<64x16xf32, #tpu.memory_space<vmem>>, vector<64x16xf32>,
      %cst_487 = arith.constant 0.000000e+00 : bf16
      %479 = vector.broadcast %cst_487 : bf16 to vector<64x16xbf16>
      %c0_488 = arith.constant 0 : index
      %c0_489 = arith.constant 0 : index
      %480 = vector.load %arg40[%c0_488, %c0_489] : memref<64x16xbf16, #tpu.memory_space<vmem>>, vector<64x16xbf16>
      tpu.vector_store %arg40[%c0_488, %c0_489], %479 {strides = array<i32>} : memref<64x16xbf16, #tpu.memory_space<vmem>>, vector<64x16xbf16>,
      %cst_490 = arith.constant 0.000000e+00 : f32
      %481 = vector.broadcast %cst_490 : f32 to vector<32x16xf32>
      %c0_491 = arith.constant 0 : index
      %c0_492 = arith.constant 0 : index
      %482 = vector.load %arg41[%c0_491, %c0_492] : memref<32x16xf32, #tpu.memory_space<vmem>>, vector<32x16xf32>
      tpu.vector_store %arg41[%c0_491, %c0_492], %481 {strides = array<i32>} : memref<32x16xf32, #tpu.memory_space<vmem>>, vector<32x16xf32>,
      %cst_493 = arith.constant 0.000000e+00 : bf16
      %483 = vector.broadcast %cst_493 : bf16 to vector<32x16xbf16>
      %c0_494 = arith.constant 0 : index
      %c0_495 = arith.constant 0 : index
      %484 = vector.load %arg42[%c0_494, %c0_495] : memref<32x16xbf16, #tpu.memory_space<vmem>>, vector<32x16xbf16>
      tpu.vector_store %arg42[%c0_494, %c0_495], %483 {strides = array<i32>} : memref<32x16xbf16, #tpu.memory_space<vmem>>, vector<32x16xbf16>,
      %cst_496 = arith.constant 0.000000e+00 : f32
      %485 = vector.broadcast %cst_496 : f32 to vector<10x16xf32>
      %c0_497 = arith.constant 0 : index
      %c0_498 = arith.constant 0 : index
      %486 = vector.load %arg43[%c0_497, %c0_498] : memref<10x16xf32, #tpu.memory_space<vmem>>, vector<10x16xf32>
      tpu.vector_store %arg43[%c0_497, %c0_498], %485 {strides = array<i32>} : memref<10x16xf32, #tpu.memory_space<vmem>>, vector<10x16xf32>,
      %cst_499 = arith.constant 0.000000e+00 : f32
      %487 = vector.broadcast %cst_499 : f32 to vector<10x16xf32>
      %c0_500 = arith.constant 0 : index
      %c0_501 = arith.constant 0 : index
      %488 = vector.load %arg44[%c0_500, %c0_501] : memref<10x16xf32, #tpu.memory_space<vmem>>, vector<10x16xf32>
      tpu.vector_store %arg44[%c0_500, %c0_501], %487 {strides = array<i32>} : memref<10x16xf32, #tpu.memory_space<vmem>>, vector<10x16xf32>,
      %cst_502 = arith.constant 0.000000e+00 : f32
      %489 = vector.broadcast %cst_502 : f32 to vector<10x16xf32>
      %c0_503 = arith.constant 0 : index
      %c0_504 = arith.constant 0 : index
      %c0_505 = arith.constant 0 : index
      %490 = vector.load %arg24[%c0_503, %c0_504, %c0_505] : memref<1x10x16xf32, #tpu.memory_space<vmem>>, vector<1x10x16xf32>
      %491 = vector.shape_cast %490 : vector<1x10x16xf32> to vector<10x16xf32>
      %492 = vector.shape_cast %489 : vector<10x16xf32> to vector<1x10x16xf32>
      tpu.vector_store %arg24[%c0_503, %c0_504, %c0_505], %492 {strides = array<i32>} : memref<1x10x16xf32, #tpu.memory_space<vmem>>, vector<1x10x16xf32>,
    } else {
    }
    %c0 = arith.constant 0 : index
    %c0_1 = arith.constant 0 : index
    %c0_2 = arith.constant 0 : index
    %c0_3 = arith.constant 0 : index
    %3 = vector.load %arg2[%c0, %c0_1, %c0_2, %c0_3] : memref<1x1x2x256xbf16, #tpu.memory_space<vmem>>, vector<1x1x2x256xbf16>
    %4 = vector.shape_cast %3 : vector<1x1x2x256xbf16> to vector<2x256xbf16>
    %c0_4 = arith.constant 0 : index
    %c128 = arith.constant 128 : index
    %5 = vector.load %arg25[%c0_4, %c128] : memref<2x512xbf16, #tpu.memory_space<vmem>>, vector<2x256xbf16>
    tpu.vector_store %arg25[%c0_4, %c128], %4 {strides = array<i32>} : memref<2x512xbf16, #tpu.memory_space<vmem>>, vector<2x256xbf16>,
    %c0_5 = arith.constant 0 : index
    %c111 = arith.constant 111 : index
    %6 = vector.load %arg25[%c0_5, %c111] : memref<2x512xbf16, #tpu.memory_space<vmem>>, vector<2x256xbf16>
    %c0_6 = arith.constant 0 : index
    %c0_7 = arith.constant 0 : index
    %7 = vector.load %arg13[%c0_6, %c0_7] : memref<9x256xbf16, #tpu.memory_space<vmem>>, vector<1x256xbf16>
    %8 = vector.broadcast %7 : vector<1x256xbf16> to vector<2x256xbf16>
    %9 = arith.mulf %6, %8 : vector<2x256xbf16>
    %c0_8 = arith.constant 0 : index
    %c0_9 = arith.constant 0 : index
    %10 = vector.load %arg38[%c0_8, %c0_9] : memref<256x256xbf16, #tpu.memory_space<vmem>>, vector<2x256xbf16>
    tpu.vector_store %arg38[%c0_8, %c0_9], %9 {strides = array<i32>} : memref<256x256xbf16, #tpu.memory_space<vmem>>, vector<2x256xbf16>,
    %c0_10 = arith.constant 0 : index
    %c112 = arith.constant 112 : index
    %11 = vector.load %arg25[%c0_10, %c112] : memref<2x512xbf16, #tpu.memory_space<vmem>>, vector<2x256xbf16>
    %c1 = arith.constant 1 : index
    %c0_11 = arith.constant 0 : index
    %12 = vector.load %arg13[%c1, %c0_11] : memref<9x256xbf16, #tpu.memory_space<vmem>>, vector<1x256xbf16>
    %13 = vector.broadcast %12 : vector<1x256xbf16> to vector<2x256xbf16>
    %14 = arith.mulf %11, %13 : vector<2x256xbf16>
    %c2 = arith.constant 2 : index
    %c0_12 = arith.constant 0 : index
    %15 = vector.load %arg38[%c2, %c0_12] : memref<256x256xbf16, #tpu.memory_space<vmem>>, vector<2x256xbf16>
    tpu.vector_store %arg38[%c2, %c0_12], %14 {strides = array<i32>} : memref<256x256xbf16, #tpu.memory_space<vmem>>, vector<2x256xbf16>,
    %c0_13 = arith.constant 0 : index
    %c113 = arith.constant 113 : index
    %16 = vector.load %arg25[%c0_13, %c113] : memref<2x512xbf16, #tpu.memory_space<vmem>>, vector<2x256xbf16>
    %c2_14 = arith.constant 2 : index
    %c0_15 = arith.constant 0 : index
    %17 = vector.load %arg13[%c2_14, %c0_15] : memref<9x256xbf16, #tpu.memory_space<vmem>>, vector<1x256xbf16>
    %18 = vector.broadcast %17 : vector<1x256xbf16> to vector<2x256xbf16>
    %19 = arith.mulf %16, %18 : vector<2x256xbf16>
    %c4 = arith.constant 4 : index
    %c0_16 = arith.constant 0 : index
    %20 = vector.load %arg38[%c4, %c0_16] : memref<256x256xbf16, #tpu.memory_space<vmem>>, vector<2x256xbf16>
    tpu.vector_store %arg38[%c4, %c0_16], %19 {strides = array<i32>} : memref<256x256xbf16, #tpu.memory_space<vmem>>, vector<2x256xbf16>,
    %c0_17 = arith.constant 0 : index
    %c127 = arith.constant 127 : index
    %21 = vector.load %arg25[%c0_17, %c127] : memref<2x512xbf16, #tpu.memory_space<vmem>>, vector<2x256xbf16>
    %c3 = arith.constant 3 : index
    %c0_18 = arith.constant 0 : index
    %22 = vector.load %arg13[%c3, %c0_18] : memref<9x256xbf16, #tpu.memory_space<vmem>>, vector<1x256xbf16>
    %23 = vector.broadcast %22 : vector<1x256xbf16> to vector<2x256xbf16>
    %24 = arith.mulf %21, %23 : vector<2x256xbf16>
    %c6 = arith.constant 6 : index
    %c0_19 = arith.constant 0 : index
    %25 = vector.load %arg38[%c6, %c0_19] : memref<256x256xbf16, #tpu.memory_space<vmem>>, vector<2x256xbf16>
    tpu.vector_store %arg38[%c6, %c0_19], %24 {strides = array<i32>} : memref<256x256xbf16, #tpu.memory_space<vmem>>, vector<2x256xbf16>,
    %c0_20 = arith.constant 0 : index
    %c128_21 = arith.constant 128 : index
    %26 = vector.load %arg25[%c0_20, %c128_21] : memref<2x512xbf16, #tpu.memory_space<vmem>>, vector<2x256xbf16>
    %c4_22 = arith.constant 4 : index
    %c0_23 = arith.constant 0 : index
    %27 = vector.load %arg13[%c4_22, %c0_23] : memref<9x256xbf16, #tpu.memory_space<vmem>>, vector<1x256xbf16>
    %28 = vector.broadcast %27 : vector<1x256xbf16> to vector<2x256xbf16>
    %29 = arith.mulf %26, %28 : vector<2x256xbf16>
    %c8 = arith.constant 8 : index
    %c0_24 = arith.constant 0 : index
    %30 = vector.load %arg38[%c8, %c0_24] : memref<256x256xbf16, #tpu.memory_space<vmem>>, vector<2x256xbf16>
    tpu.vector_store %arg38[%c8, %c0_24], %29 {strides = array<i32>} : memref<256x256xbf16, #tpu.memory_space<vmem>>, vector<2x256xbf16>,
    %c0_25 = arith.constant 0 : index
    %c129 = arith.constant 129 : index
    %31 = vector.load %arg25[%c0_25, %c129] : memref<2x512xbf16, #tpu.memory_space<vmem>>, vector<2x256xbf16>
    %c5 = arith.constant 5 : index
    %c0_26 = arith.constant 0 : index
    %32 = vector.load %arg13[%c5, %c0_26] : memref<9x256xbf16, #tpu.memory_space<vmem>>, vector<1x256xbf16>
    %33 = vector.broadcast %32 : vector<1x256xbf16> to vector<2x256xbf16>
    %34 = arith.mulf %31, %33 : vector<2x256xbf16>
    %c10 = arith.constant 10 : index
    %c0_27 = arith.constant 0 : index
    %35 = vector.load %arg38[%c10, %c0_27] : memref<256x256xbf16, #tpu.memory_space<vmem>>, vector<2x256xbf16>
    tpu.vector_store %arg38[%c10, %c0_27], %34 {strides = array<i32>} : memref<256x256xbf16, #tpu.memory_space<vmem>>, vector<2x256xbf16>,
    %c0_28 = arith.constant 0 : index
    %c143 = arith.constant 143 : index
    %36 = vector.load %arg25[%c0_28, %c143] : memref<2x512xbf16, #tpu.memory_space<vmem>>, vector<2x256xbf16>
    %c6_29 = arith.constant 6 : index
    %c0_30 = arith.constant 0 : index
    %37 = vector.load %arg13[%c6_29, %c0_30] : memref<9x256xbf16, #tpu.memory_space<vmem>>, vector<1x256xbf16>
    %38 = vector.broadcast %37 : vector<1x256xbf16> to vector<2x256xbf16>
    %39 = arith.mulf %36, %38 : vector<2x256xbf16>
    %c12 = arith.constant 12 : index
    %c0_31 = arith.constant 0 : index
    %40 = vector.load %arg38[%c12, %c0_31] : memref<256x256xbf16, #tpu.memory_space<vmem>>, vector<2x256xbf16>
    tpu.vector_store %arg38[%c12, %c0_31], %39 {strides = array<i32>} : memref<256x256xbf16, #tpu.memory_space<vmem>>, vector<2x256xbf16>,
    %c0_32 = arith.constant 0 : index
    %c144 = arith.constant 144 : index
    %41 = vector.load %arg25[%c0_32, %c144] : memref<2x512xbf16, #tpu.memory_space<vmem>>, vector<2x256xbf16>
    %c7 = arith.constant 7 : index
    %c0_33 = arith.constant 0 : index
    %42 = vector.load %arg13[%c7, %c0_33] : memref<9x256xbf16, #tpu.memory_space<vmem>>, vector<1x256xbf16>
    %43 = vector.broadcast %42 : vector<1x256xbf16> to vector<2x256xbf16>
    %44 = arith.mulf %41, %43 : vector<2x256xbf16>
    %c14 = arith.constant 14 : index
    %c0_34 = arith.constant 0 : index
    %45 = vector.load %arg38[%c14, %c0_34] : memref<256x256xbf16, #tpu.memory_space<vmem>>, vector<2x256xbf16>
    tpu.vector_store %arg38[%c14, %c0_34], %44 {strides = array<i32>} : memref<256x256xbf16, #tpu.memory_space<vmem>>, vector<2x256xbf16>,
    %c0_35 = arith.constant 0 : index
    %c145 = arith.constant 145 : index
    %46 = vector.load %arg25[%c0_35, %c145] : memref<2x512xbf16, #tpu.memory_space<vmem>>, vector<2x256xbf16>
    %c8_36 = arith.constant 8 : index
    %c0_37 = arith.constant 0 : index
    %47 = vector.load %arg13[%c8_36, %c0_37] : memref<9x256xbf16, #tpu.memory_space<vmem>>, vector<1x256xbf16>
    %48 = vector.broadcast %47 : vector<1x256xbf16> to vector<2x256xbf16>
    %49 = arith.mulf %46, %48 : vector<2x256xbf16>
    %c16 = arith.constant 16 : index
    %c0_38 = arith.constant 0 : index
    %50 = vector.load %arg38[%c16, %c0_38] : memref<256x256xbf16, #tpu.memory_space<vmem>>, vector<2x256xbf16>
    tpu.vector_store %arg38[%c16, %c0_38], %49 {strides = array<i32>} : memref<256x256xbf16, #tpu.memory_space<vmem>>, vector<2x256xbf16>,
    %c0_39 = arith.constant 0 : index
    %c0_40 = arith.constant 0 : index
    %51 = vector.load %arg3[%c0_39, %c0_40] : memref<8x18xbf16, #tpu.memory_space<vmem>>, vector<8x18xbf16>
    %c0_41 = arith.constant 0 : index
    %c0_42 = arith.constant 0 : index
    %52 = vector.load %arg38[%c0_41, %c0_42] : memref<256x256xbf16, #tpu.memory_space<vmem>>, vector<18x256xbf16>
    %cst = arith.constant dense<0.000000e+00> : vector<8x256xf32>
    %53 = tpu.matmul %51, %52, %cst {dimension_numbers = #tpu.dot_dimension_numbers<[1], [0], [0], [1], [0, 0, 1, 1], [], []>} : vector<8x18xbf16>, vector<18x256xbf16>, vector<8x256xf32> -> vector<8x256xf32>
    %c0_43 = arith.constant 0 : index
    %c0_44 = arith.constant 0 : index
    %54 = vector.load %arg4[%c0_43, %c0_44] : memref<8x1xf32, #tpu.memory_space<vmem>>, vector<8x1xf32>
    %55 = vector.broadcast %54 : vector<8x1xf32> to vector<8x256xf32>
    %56 = arith.addf %53, %55 : vector<8x256xf32>
    %c0_45 = arith.constant 0 : index
    %c128_46 = arith.constant 128 : index
    %57 = vector.load %arg26[%c0_45, %c128_46] : memref<8x512xbf16, #tpu.memory_space<vmem>>, vector<8x256xbf16>
    %58 = arith.extf %57 : vector<8x256xbf16> to vector<8x256xf32>
    %c0_47 = arith.constant 0 : index
    %c0_48 = arith.constant 0 : index
    %59 = vector.load %arg27[%c0_47, %c0_48] : memref<8x256xf32, #tpu.memory_space<vmem>>, vector<8x256xf32>
    %cst_49 = arith.constant 1.000000e+00 : f32
    %60 = vector.broadcast %cst_49 : f32 to vector<8x256xf32>
    %61 = arith.subf %60, %58 : vector<8x256xf32>
    %cst_50 = arith.constant 1.000000e-01 : f32
    %62 = vector.broadcast %cst_50 : f32 to vector<8x256xf32>
    %63 = arith.mulf %62, %61 : vector<8x256xf32>
    %64 = arith.mulf %59, %63 : vector<8x256xf32>
    %65 = arith.addf %64, %56 : vector<8x256xf32>
    %c0_51 = arith.constant 0 : index
    %c0_52 = arith.constant 0 : index
    %66 = vector.load %arg27[%c0_51, %c0_52] : memref<8x256xf32, #tpu.memory_space<vmem>>, vector<8x256xf32>
    tpu.vector_store %arg27[%c0_51, %c0_52], %65 {strides = array<i32>} : memref<8x256xf32, #tpu.memory_space<vmem>>, vector<8x256xf32>,
    %cst_53 = arith.constant 2.500000e-01 : f32
    %67 = vector.broadcast %cst_53 : f32 to vector<8x256xf32>
    %68 = arith.cmpf ogt, %65, %67 : vector<8x256xf32>
    %69 = arith.extui %68 : vector<8x256xi1> to vector<8x256xi32>
    %70 = arith.sitofp %69 : vector<8x256xi32> to vector<8x256xf32>
    %71 = arith.truncf %70 : vector<8x256xf32> to vector<8x256xbf16>
    %c0_54 = arith.constant 0 : index
    %c128_55 = arith.constant 128 : index
    %72 = vector.load %arg26[%c0_54, %c128_55] : memref<8x512xbf16, #tpu.memory_space<vmem>>, vector<8x256xbf16>
    tpu.vector_store %arg26[%c0_54, %c128_55], %71 {strides = array<i32>} : memref<8x512xbf16, #tpu.memory_space<vmem>>, vector<8x256xbf16>,
    %c0_56 = arith.constant 0 : index
    %c111_57 = arith.constant 111 : index
    %73 = vector.load %arg26[%c0_56, %c111_57] : memref<8x512xbf16, #tpu.memory_space<vmem>>, vector<8x256xbf16>
    %c0_58 = arith.constant 0 : index
    %c0_59 = arith.constant 0 : index
    %74 = vector.load %arg13[%c0_58, %c0_59] : memref<9x256xbf16, #tpu.memory_space<vmem>>, vector<1x256xbf16>
    %75 = vector.broadcast %74 : vector<1x256xbf16> to vector<8x256xbf16>
    %76 = arith.mulf %73, %75 : vector<8x256xbf16>
    %c0_60 = arith.constant 0 : index
    %c0_61 = arith.constant 0 : index
    %77 = vector.load %arg38[%c0_60, %c0_61] : memref<256x256xbf16, #tpu.memory_space<vmem>>, vector<8x256xbf16>
    tpu.vector_store %arg38[%c0_60, %c0_61], %76 {strides = array<i32>} : memref<256x256xbf16, #tpu.memory_space<vmem>>, vector<8x256xbf16>,
    %c0_62 = arith.constant 0 : index
    %c112_63 = arith.constant 112 : index
    %78 = vector.load %arg26[%c0_62, %c112_63] : memref<8x512xbf16, #tpu.memory_space<vmem>>, vector<8x256xbf16>
    %c1_64 = arith.constant 1 : index
    %c0_65 = arith.constant 0 : index
    %79 = vector.load %arg13[%c1_64, %c0_65] : memref<9x256xbf16, #tpu.memory_space<vmem>>, vector<1x256xbf16>
    %80 = vector.broadcast %79 : vector<1x256xbf16> to vector<8x256xbf16>
    %81 = arith.mulf %78, %80 : vector<8x256xbf16>
    %c8_66 = arith.constant 8 : index
    %c0_67 = arith.constant 0 : index
    %82 = vector.load %arg38[%c8_66, %c0_67] : memref<256x256xbf16, #tpu.memory_space<vmem>>, vector<8x256xbf16>
    tpu.vector_store %arg38[%c8_66, %c0_67], %81 {strides = array<i32>} : memref<256x256xbf16, #tpu.memory_space<vmem>>, vector<8x256xbf16>,
    %c0_68 = arith.constant 0 : index
    %c113_69 = arith.constant 113 : index
    %83 = vector.load %arg26[%c0_68, %c113_69] : memref<8x512xbf16, #tpu.memory_space<vmem>>, vector<8x256xbf16>
    %c2_70 = arith.constant 2 : index
    %c0_71 = arith.constant 0 : index
    %84 = vector.load %arg13[%c2_70, %c0_71] : memref<9x256xbf16, #tpu.memory_space<vmem>>, vector<1x256xbf16>
    %85 = vector.broadcast %84 : vector<1x256xbf16> to vector<8x256xbf16>
    %86 = arith.mulf %83, %85 : vector<8x256xbf16>
    %c16_72 = arith.constant 16 : index
    %c0_73 = arith.constant 0 : index
    %87 = vector.load %arg38[%c16_72, %c0_73] : memref<256x256xbf16, #tpu.memory_space<vmem>>, vector<8x256xbf16>
    tpu.vector_store %arg38[%c16_72, %c0_73], %86 {strides = array<i32>} : memref<256x256xbf16, #tpu.memory_space<vmem>>, vector<8x256xbf16>,
    %c0_74 = arith.constant 0 : index
    %c127_75 = arith.constant 127 : index
    %88 = vector.load %arg26[%c0_74, %c127_75] : memref<8x512xbf16, #tpu.memory_space<vmem>>, vector<8x256xbf16>
    %c3_76 = arith.constant 3 : index
    %c0_77 = arith.constant 0 : index
    %89 = vector.load %arg13[%c3_76, %c0_77] : memref<9x256xbf16, #tpu.memory_space<vmem>>, vector<1x256xbf16>
    %90 = vector.broadcast %89 : vector<1x256xbf16> to vector<8x256xbf16>
    %91 = arith.mulf %88, %90 : vector<8x256xbf16>
    %c24 = arith.constant 24 : index
    %c0_78 = arith.constant 0 : index
    %92 = vector.load %arg38[%c24, %c0_78] : memref<256x256xbf16, #tpu.memory_space<vmem>>, vector<8x256xbf16>
    tpu.vector_store %arg38[%c24, %c0_78], %91 {strides = array<i32>} : memref<256x256xbf16, #tpu.memory_space<vmem>>, vector<8x256xbf16>,
    %c0_79 = arith.constant 0 : index
    %c128_80 = arith.constant 128 : index
    %93 = vector.load %arg26[%c0_79, %c128_80] : memref<8x512xbf16, #tpu.memory_space<vmem>>, vector<8x256xbf16>
    %c4_81 = arith.constant 4 : index
    %c0_82 = arith.constant 0 : index
    %94 = vector.load %arg13[%c4_81, %c0_82] : memref<9x256xbf16, #tpu.memory_space<vmem>>, vector<1x256xbf16>
    %95 = vector.broadcast %94 : vector<1x256xbf16> to vector<8x256xbf16>
    %96 = arith.mulf %93, %95 : vector<8x256xbf16>
    %c32 = arith.constant 32 : index
    %c0_83 = arith.constant 0 : index
    %97 = vector.load %arg38[%c32, %c0_83] : memref<256x256xbf16, #tpu.memory_space<vmem>>, vector<8x256xbf16>
    tpu.vector_store %arg38[%c32, %c0_83], %96 {strides = array<i32>} : memref<256x256xbf16, #tpu.memory_space<vmem>>, vector<8x256xbf16>,
    %c0_84 = arith.constant 0 : index
    %c129_85 = arith.constant 129 : index
    %98 = vector.load %arg26[%c0_84, %c129_85] : memref<8x512xbf16, #tpu.memory_space<vmem>>, vector<8x256xbf16>
    %c5_86 = arith.constant 5 : index
    %c0_87 = arith.constant 0 : index
    %99 = vector.load %arg13[%c5_86, %c0_87] : memref<9x256xbf16, #tpu.memory_space<vmem>>, vector<1x256xbf16>
    %100 = vector.broadcast %99 : vector<1x256xbf16> to vector<8x256xbf16>
    %101 = arith.mulf %98, %100 : vector<8x256xbf16>
    %c40 = arith.constant 40 : index
    %c0_88 = arith.constant 0 : index
    %102 = vector.load %arg38[%c40, %c0_88] : memref<256x256xbf16, #tpu.memory_space<vmem>>, vector<8x256xbf16>
    tpu.vector_store %arg38[%c40, %c0_88], %101 {strides = array<i32>} : memref<256x256xbf16, #tpu.memory_space<vmem>>, vector<8x256xbf16>,
    %c0_89 = arith.constant 0 : index
    %c143_90 = arith.constant 143 : index
    %103 = vector.load %arg26[%c0_89, %c143_90] : memref<8x512xbf16, #tpu.memory_space<vmem>>, vector<8x256xbf16>
    %c6_91 = arith.constant 6 : index
    %c0_92 = arith.constant 0 : index
    %104 = vector.load %arg13[%c6_91, %c0_92] : memref<9x256xbf16, #tpu.memory_space<vmem>>, vector<1x256xbf16>
    %105 = vector.broadcast %104 : vector<1x256xbf16> to vector<8x256xbf16>
    %106 = arith.mulf %103, %105 : vector<8x256xbf16>
    %c48 = arith.constant 48 : index
    %c0_93 = arith.constant 0 : index
    %107 = vector.load %arg38[%c48, %c0_93] : memref<256x256xbf16, #tpu.memory_space<vmem>>, vector<8x256xbf16>
    tpu.vector_store %arg38[%c48, %c0_93], %106 {strides = array<i32>} : memref<256x256xbf16, #tpu.memory_space<vmem>>, vector<8x256xbf16>,
    %c0_94 = arith.constant 0 : index
    %c144_95 = arith.constant 144 : index
    %108 = vector.load %arg26[%c0_94, %c144_95] : memref<8x512xbf16, #tpu.memory_space<vmem>>, vector<8x256xbf16>
    %c7_96 = arith.constant 7 : index
    %c0_97 = arith.constant 0 : index
    %109 = vector.load %arg13[%c7_96, %c0_97] : memref<9x256xbf16, #tpu.memory_space<vmem>>, vector<1x256xbf16>
    %110 = vector.broadcast %109 : vector<1x256xbf16> to vector<8x256xbf16>
    %111 = arith.mulf %108, %110 : vector<8x256xbf16>
    %c56 = arith.constant 56 : index
    %c0_98 = arith.constant 0 : index
    %112 = vector.load %arg38[%c56, %c0_98] : memref<256x256xbf16, #tpu.memory_space<vmem>>, vector<8x256xbf16>
    tpu.vector_store %arg38[%c56, %c0_98], %111 {strides = array<i32>} : memref<256x256xbf16, #tpu.memory_space<vmem>>, vector<8x256xbf16>,
    %c0_99 = arith.constant 0 : index
    %c145_100 = arith.constant 145 : index
    %113 = vector.load %arg26[%c0_99, %c145_100] : memref<8x512xbf16, #tpu.memory_space<vmem>>, vector<8x256xbf16>
    %c8_101 = arith.constant 8 : index
    %c0_102 = arith.constant 0 : index
    %114 = vector.load %arg13[%c8_101, %c0_102] : memref<9x256xbf16, #tpu.memory_space<vmem>>, vector<1x256xbf16>
    %115 = vector.broadcast %114 : vector<1x256xbf16> to vector<8x256xbf16>
    %116 = arith.mulf %113, %115 : vector<8x256xbf16>
    %c64 = arith.constant 64 : index
    %c0_103 = arith.constant 0 : index
    %117 = vector.load %arg38[%c64, %c0_103] : memref<256x256xbf16, #tpu.memory_space<vmem>>, vector<8x256xbf16>
    tpu.vector_store %arg38[%c64, %c0_103], %116 {strides = array<i32>} : memref<256x256xbf16, #tpu.memory_space<vmem>>, vector<8x256xbf16>,
    %c0_104 = arith.constant 0 : index
    %c0_105 = arith.constant 0 : index
    %118 = vector.load %arg5[%c0_104, %c0_105] : memref<8x72xbf16, #tpu.memory_space<vmem>>, vector<8x72xbf16>
    %c0_106 = arith.constant 0 : index
    %c0_107 = arith.constant 0 : index
    %119 = vector.load %arg38[%c0_106, %c0_107] : memref<256x256xbf16, #tpu.memory_space<vmem>>, vector<72x256xbf16>
    %cst_108 = arith.constant dense<0.000000e+00> : vector<8x256xf32>
    %120 = tpu.matmul %118, %119, %cst_108 {dimension_numbers = #tpu.dot_dimension_numbers<[1], [0], [0], [1], [0, 0, 1, 1], [], []>} : vector<8x72xbf16>, vector<72x256xbf16>, vector<8x256xf32> -> vector<8x256xf32>
    %c0_109 = arith.constant 0 : index
    %c0_110 = arith.constant 0 : index
    %121 = vector.load %arg6[%c0_109, %c0_110] : memref<8x1xf32, #tpu.memory_space<vmem>>, vector<8x1xf32>
    %122 = vector.broadcast %121 : vector<8x1xf32> to vector<8x256xf32>
    %123 = arith.addf %120, %122 : vector<8x256xf32>
    %c0_111 = arith.constant 0 : index
    %c0_112 = arith.constant 0 : index
    %124 = vector.load %arg28[%c0_111, %c0_112] : memref<8x256xbf16, #tpu.memory_space<vmem>>, vector<8x256xbf16>
    %125 = arith.extf %124 : vector<8x256xbf16> to vector<8x256xf32>
    %c0_113 = arith.constant 0 : index
    %c0_114 = arith.constant 0 : index
    %126 = vector.load %arg29[%c0_113, %c0_114] : memref<8x256xf32, #tpu.memory_space<vmem>>, vector<8x256xf32>
    %cst_115 = arith.constant 1.000000e+00 : f32
    %127 = vector.broadcast %cst_115 : f32 to vector<8x256xf32>
    %128 = arith.subf %127, %125 : vector<8x256xf32>
    %cst_116 = arith.constant 1.000000e-01 : f32
    %129 = vector.broadcast %cst_116 : f32 to vector<8x256xf32>
    %130 = arith.mulf %129, %128 : vector<8x256xf32>
    %131 = arith.mulf %126, %130 : vector<8x256xf32>
    %132 = arith.addf %131, %123 : vector<8x256xf32>
    %c0_117 = arith.constant 0 : index
    %c0_118 = arith.constant 0 : index
    %133 = vector.load %arg29[%c0_117, %c0_118] : memref<8x256xf32, #tpu.memory_space<vmem>>, vector<8x256xf32>
    tpu.vector_store %arg29[%c0_117, %c0_118], %132 {strides = array<i32>} : memref<8x256xf32, #tpu.memory_space<vmem>>, vector<8x256xf32>,
    %cst_119 = arith.constant 2.500000e-01 : f32
    %134 = vector.broadcast %cst_119 : f32 to vector<8x256xf32>
    %135 = arith.cmpf ogt, %132, %134 : vector<8x256xf32>
    %136 = arith.extui %135 : vector<8x256xi1> to vector<8x256xi32>
    %137 = arith.sitofp %136 : vector<8x256xi32> to vector<8x256xf32>
    %138 = arith.truncf %137 : vector<8x256xf32> to vector<8x256xbf16>
    %c0_120 = arith.constant 0 : index
    %c0_121 = arith.constant 0 : index
    %139 = vector.load %arg28[%c0_120, %c0_121] : memref<8x256xbf16, #tpu.memory_space<vmem>>, vector<8x256xbf16>
    tpu.vector_store %arg28[%c0_120, %c0_121], %138 {strides = array<i32>} : memref<8x256xbf16, #tpu.memory_space<vmem>>, vector<8x256xbf16>,
    %c0_122 = arith.constant 0 : index
    %c0_123 = arith.constant 0 : index
    %140 = vector.load %arg28[%c0_122, %c0_123] : memref<8x256xbf16, #tpu.memory_space<vmem>>, vector<8x256xbf16>
    %c0_124 = arith.constant 0 : index
    %c0_125 = arith.constant 0 : index
    %141 = vector.load %arg16[%c0_124, %c0_125] : memref<256x64xbf16, #tpu.memory_space<vmem>>, vector<256x64xbf16>
    %cst_126 = arith.constant dense<0.000000e+00> : vector<8x64xf32>
    %142 = tpu.matmul %140, %141, %cst_126 {dimension_numbers = #tpu.dot_dimension_numbers<[1], [0], [0], [1], [0, 0, 1, 1], [], []>} : vector<8x256xbf16>, vector<256x64xbf16>, vector<8x64xf32> -> vector<8x64xf32>
    %143 = arith.truncf %142 : vector<8x64xf32> to vector<8x64xbf16>
    %c0_127 = arith.constant 0 : index
    %c128_128 = arith.constant 128 : index
    %144 = vector.load %arg30[%c0_127, %c128_128] : memref<8x320xbf16, #tpu.memory_space<vmem>>, vector<8x64xbf16>
    tpu.vector_store %arg30[%c0_127, %c128_128], %143 {strides = array<i32>} : memref<8x320xbf16, #tpu.memory_space<vmem>>, vector<8x64xbf16>,
    %c0_129 = arith.constant 0 : index
    %c119 = arith.constant 119 : index
    %145 = vector.load %arg30[%c0_129, %c119] : memref<8x320xbf16, #tpu.memory_space<vmem>>, vector<8x64xbf16>
    %c0_130 = arith.constant 0 : index
    %c0_131 = arith.constant 0 : index
    %146 = vector.load %arg14[%c0_130, %c0_131] : memref<9x64xbf16, #tpu.memory_space<vmem>>, vector<1x64xbf16>
    %147 = vector.broadcast %146 : vector<1x64xbf16> to vector<8x64xbf16>
    %148 = arith.mulf %145, %147 : vector<8x64xbf16>
    %c0_132 = arith.constant 0 : index
    %c0_133 = arith.constant 0 : index
    %149 = vector.load %arg38[%c0_132, %c0_133] : memref<256x256xbf16, #tpu.memory_space<vmem>>, vector<8x64xbf16>
    tpu.vector_store %arg38[%c0_132, %c0_133], %148 {strides = array<i32>} : memref<256x256xbf16, #tpu.memory_space<vmem>>, vector<8x64xbf16>,
    %c0_134 = arith.constant 0 : index
    %c120 = arith.constant 120 : index
    %150 = vector.load %arg30[%c0_134, %c120] : memref<8x320xbf16, #tpu.memory_space<vmem>>, vector<8x64xbf16>
    %c1_135 = arith.constant 1 : index
    %c0_136 = arith.constant 0 : index
    %151 = vector.load %arg14[%c1_135, %c0_136] : memref<9x64xbf16, #tpu.memory_space<vmem>>, vector<1x64xbf16>
    %152 = vector.broadcast %151 : vector<1x64xbf16> to vector<8x64xbf16>
    %153 = arith.mulf %150, %152 : vector<8x64xbf16>
    %c8_137 = arith.constant 8 : index
    %c0_138 = arith.constant 0 : index
    %154 = vector.load %arg38[%c8_137, %c0_138] : memref<256x256xbf16, #tpu.memory_space<vmem>>, vector<8x64xbf16>
    tpu.vector_store %arg38[%c8_137, %c0_138], %153 {strides = array<i32>} : memref<256x256xbf16, #tpu.memory_space<vmem>>, vector<8x64xbf16>,
    %c0_139 = arith.constant 0 : index
    %c121 = arith.constant 121 : index
    %155 = vector.load %arg30[%c0_139, %c121] : memref<8x320xbf16, #tpu.memory_space<vmem>>, vector<8x64xbf16>
    %c2_140 = arith.constant 2 : index
    %c0_141 = arith.constant 0 : index
    %156 = vector.load %arg14[%c2_140, %c0_141] : memref<9x64xbf16, #tpu.memory_space<vmem>>, vector<1x64xbf16>
    %157 = vector.broadcast %156 : vector<1x64xbf16> to vector<8x64xbf16>
    %158 = arith.mulf %155, %157 : vector<8x64xbf16>
    %c16_142 = arith.constant 16 : index
    %c0_143 = arith.constant 0 : index
    %159 = vector.load %arg38[%c16_142, %c0_143] : memref<256x256xbf16, #tpu.memory_space<vmem>>, vector<8x64xbf16>
    tpu.vector_store %arg38[%c16_142, %c0_143], %158 {strides = array<i32>} : memref<256x256xbf16, #tpu.memory_space<vmem>>, vector<8x64xbf16>,
    %c0_144 = arith.constant 0 : index
    %c127_145 = arith.constant 127 : index
    %160 = vector.load %arg30[%c0_144, %c127_145] : memref<8x320xbf16, #tpu.memory_space<vmem>>, vector<8x64xbf16>
    %c3_146 = arith.constant 3 : index
    %c0_147 = arith.constant 0 : index
    %161 = vector.load %arg14[%c3_146, %c0_147] : memref<9x64xbf16, #tpu.memory_space<vmem>>, vector<1x64xbf16>
    %162 = vector.broadcast %161 : vector<1x64xbf16> to vector<8x64xbf16>
    %163 = arith.mulf %160, %162 : vector<8x64xbf16>
    %c24_148 = arith.constant 24 : index
    %c0_149 = arith.constant 0 : index
    %164 = vector.load %arg38[%c24_148, %c0_149] : memref<256x256xbf16, #tpu.memory_space<vmem>>, vector<8x64xbf16>
    tpu.vector_store %arg38[%c24_148, %c0_149], %163 {strides = array<i32>} : memref<256x256xbf16, #tpu.memory_space<vmem>>, vector<8x64xbf16>,
    %c0_150 = arith.constant 0 : index
    %c128_151 = arith.constant 128 : index
    %165 = vector.load %arg30[%c0_150, %c128_151] : memref<8x320xbf16, #tpu.memory_space<vmem>>, vector<8x64xbf16>
    %c4_152 = arith.constant 4 : index
    %c0_153 = arith.constant 0 : index
    %166 = vector.load %arg14[%c4_152, %c0_153] : memref<9x64xbf16, #tpu.memory_space<vmem>>, vector<1x64xbf16>
    %167 = vector.broadcast %166 : vector<1x64xbf16> to vector<8x64xbf16>
    %168 = arith.mulf %165, %167 : vector<8x64xbf16>
    %c32_154 = arith.constant 32 : index
    %c0_155 = arith.constant 0 : index
    %169 = vector.load %arg38[%c32_154, %c0_155] : memref<256x256xbf16, #tpu.memory_space<vmem>>, vector<8x64xbf16>
    tpu.vector_store %arg38[%c32_154, %c0_155], %168 {strides = array<i32>} : memref<256x256xbf16, #tpu.memory_space<vmem>>, vector<8x64xbf16>,
    %c0_156 = arith.constant 0 : index
    %c129_157 = arith.constant 129 : index
    %170 = vector.load %arg30[%c0_156, %c129_157] : memref<8x320xbf16, #tpu.memory_space<vmem>>, vector<8x64xbf16>
    %c5_158 = arith.constant 5 : index
    %c0_159 = arith.constant 0 : index
    %171 = vector.load %arg14[%c5_158, %c0_159] : memref<9x64xbf16, #tpu.memory_space<vmem>>, vector<1x64xbf16>
    %172 = vector.broadcast %171 : vector<1x64xbf16> to vector<8x64xbf16>
    %173 = arith.mulf %170, %172 : vector<8x64xbf16>
    %c40_160 = arith.constant 40 : index
    %c0_161 = arith.constant 0 : index
    %174 = vector.load %arg38[%c40_160, %c0_161] : memref<256x256xbf16, #tpu.memory_space<vmem>>, vector<8x64xbf16>
    tpu.vector_store %arg38[%c40_160, %c0_161], %173 {strides = array<i32>} : memref<256x256xbf16, #tpu.memory_space<vmem>>, vector<8x64xbf16>,
    %c0_162 = arith.constant 0 : index
    %c135 = arith.constant 135 : index
    %175 = vector.load %arg30[%c0_162, %c135] : memref<8x320xbf16, #tpu.memory_space<vmem>>, vector<8x64xbf16>
    %c6_163 = arith.constant 6 : index
    %c0_164 = arith.constant 0 : index
    %176 = vector.load %arg14[%c6_163, %c0_164] : memref<9x64xbf16, #tpu.memory_space<vmem>>, vector<1x64xbf16>
    %177 = vector.broadcast %176 : vector<1x64xbf16> to vector<8x64xbf16>
    %178 = arith.mulf %175, %177 : vector<8x64xbf16>
    %c48_165 = arith.constant 48 : index
    %c0_166 = arith.constant 0 : index
    %179 = vector.load %arg38[%c48_165, %c0_166] : memref<256x256xbf16, #tpu.memory_space<vmem>>, vector<8x64xbf16>
    tpu.vector_store %arg38[%c48_165, %c0_166], %178 {strides = array<i32>} : memref<256x256xbf16, #tpu.memory_space<vmem>>, vector<8x64xbf16>,
    %c0_167 = arith.constant 0 : index
    %c136 = arith.constant 136 : index
    %180 = vector.load %arg30[%c0_167, %c136] : memref<8x320xbf16, #tpu.memory_space<vmem>>, vector<8x64xbf16>
    %c7_168 = arith.constant 7 : index
    %c0_169 = arith.constant 0 : index
    %181 = vector.load %arg14[%c7_168, %c0_169] : memref<9x64xbf16, #tpu.memory_space<vmem>>, vector<1x64xbf16>
    %182 = vector.broadcast %181 : vector<1x64xbf16> to vector<8x64xbf16>
    %183 = arith.mulf %180, %182 : vector<8x64xbf16>
    %c56_170 = arith.constant 56 : index
    %c0_171 = arith.constant 0 : index
    %184 = vector.load %arg38[%c56_170, %c0_171] : memref<256x256xbf16, #tpu.memory_space<vmem>>, vector<8x64xbf16>
    tpu.vector_store %arg38[%c56_170, %c0_171], %183 {strides = array<i32>} : memref<256x256xbf16, #tpu.memory_space<vmem>>, vector<8x64xbf16>,
    %c0_172 = arith.constant 0 : index
    %c137 = arith.constant 137 : index
    %185 = vector.load %arg30[%c0_172, %c137] : memref<8x320xbf16, #tpu.memory_space<vmem>>, vector<8x64xbf16>
    %c8_173 = arith.constant 8 : index
    %c0_174 = arith.constant 0 : index
    %186 = vector.load %arg14[%c8_173, %c0_174] : memref<9x64xbf16, #tpu.memory_space<vmem>>, vector<1x64xbf16>
    %187 = vector.broadcast %186 : vector<1x64xbf16> to vector<8x64xbf16>
    %188 = arith.mulf %185, %187 : vector<8x64xbf16>
    %c64_175 = arith.constant 64 : index
    %c0_176 = arith.constant 0 : index
    %189 = vector.load %arg38[%c64_175, %c0_176] : memref<256x256xbf16, #tpu.memory_space<vmem>>, vector<8x64xbf16>
    tpu.vector_store %arg38[%c64_175, %c0_176], %188 {strides = array<i32>} : memref<256x256xbf16, #tpu.memory_space<vmem>>, vector<8x64xbf16>,
    %c0_177 = arith.constant 0 : index
    %c0_178 = arith.constant 0 : index
    %190 = vector.load %arg7[%c0_177, %c0_178] : memref<16x72xbf16, #tpu.memory_space<vmem>>, vector<16x72xbf16>
    %c0_179 = arith.constant 0 : index
    %c0_180 = arith.constant 0 : index
    %191 = vector.load %arg38[%c0_179, %c0_180] : memref<256x256xbf16, #tpu.memory_space<vmem>>, vector<72x64xbf16>
    %cst_181 = arith.constant dense<0.000000e+00> : vector<16x64xf32>
    %192 = tpu.matmul %190, %191, %cst_181 {dimension_numbers = #tpu.dot_dimension_numbers<[1], [0], [0], [1], [0, 0, 1, 1], [], []>} : vector<16x72xbf16>, vector<72x64xbf16>, vector<16x64xf32> -> vector<16x64xf32>
    %c0_182 = arith.constant 0 : index
    %c0_183 = arith.constant 0 : index
    %193 = vector.load %arg8[%c0_182, %c0_183] : memref<16x1xf32, #tpu.memory_space<vmem>>, vector<16x1xf32>
    %194 = vector.broadcast %193 : vector<16x1xf32> to vector<16x64xf32>
    %195 = arith.addf %192, %194 : vector<16x64xf32>
    %c0_184 = arith.constant 0 : index
    %c0_185 = arith.constant 0 : index
    %196 = vector.load %arg31[%c0_184, %c0_185] : memref<16x64xbf16, #tpu.memory_space<vmem>>, vector<16x64xbf16>
    %197 = arith.extf %196 : vector<16x64xbf16> to vector<16x64xf32>
    %c0_186 = arith.constant 0 : index
    %c0_187 = arith.constant 0 : index
    %198 = vector.load %arg32[%c0_186, %c0_187] : memref<16x64xf32, #tpu.memory_space<vmem>>, vector<16x64xf32>
    %cst_188 = arith.constant 1.000000e+00 : f32
    %199 = vector.broadcast %cst_188 : f32 to vector<16x64xf32>
    %200 = arith.subf %199, %197 : vector<16x64xf32>
    %cst_189 = arith.constant 1.000000e-01 : f32
    %201 = vector.broadcast %cst_189 : f32 to vector<16x64xf32>
    %202 = arith.mulf %201, %200 : vector<16x64xf32>
    %203 = arith.mulf %198, %202 : vector<16x64xf32>
    %204 = arith.addf %203, %195 : vector<16x64xf32>
    %c0_190 = arith.constant 0 : index
    %c0_191 = arith.constant 0 : index
    %205 = vector.load %arg32[%c0_190, %c0_191] : memref<16x64xf32, #tpu.memory_space<vmem>>, vector<16x64xf32>
    tpu.vector_store %arg32[%c0_190, %c0_191], %204 {strides = array<i32>} : memref<16x64xf32, #tpu.memory_space<vmem>>, vector<16x64xf32>,
    %cst_192 = arith.constant 2.500000e-01 : f32
    %206 = vector.broadcast %cst_192 : f32 to vector<16x64xf32>
    %207 = arith.cmpf ogt, %204, %206 : vector<16x64xf32>
    %208 = arith.extui %207 : vector<16x64xi1> to vector<16x64xi32>
    %209 = arith.sitofp %208 : vector<16x64xi32> to vector<16x64xf32>
    %210 = arith.truncf %209 : vector<16x64xf32> to vector<16x64xbf16>
    %c0_193 = arith.constant 0 : index
    %c0_194 = arith.constant 0 : index
    %211 = vector.load %arg31[%c0_193, %c0_194] : memref<16x64xbf16, #tpu.memory_space<vmem>>, vector<16x64xbf16>
    tpu.vector_store %arg31[%c0_193, %c0_194], %210 {strides = array<i32>} : memref<16x64xbf16, #tpu.memory_space<vmem>>, vector<16x64xbf16>,
    %c0_195 = arith.constant 0 : index
    %c0_196 = arith.constant 0 : index
    %212 = vector.load %arg31[%c0_195, %c0_196] : memref<16x64xbf16, #tpu.memory_space<vmem>>, vector<16x64xbf16>
    %c0_197 = arith.constant 0 : index
    %c0_198 = arith.constant 0 : index
    %213 = vector.load %arg17[%c0_197, %c0_198] : memref<64x16xbf16, #tpu.memory_space<vmem>>, vector<64x16xbf16>
    %cst_199 = arith.constant dense<0.000000e+00> : vector<16x16xf32>
    %214 = tpu.matmul %212, %213, %cst_199 {dimension_numbers = #tpu.dot_dimension_numbers<[1], [0], [0], [1], [0, 0, 1, 1], [], []>} : vector<16x64xbf16>, vector<64x16xbf16>, vector<16x16xf32> -> vector<16x16xf32>
    %215 = arith.truncf %214 : vector<16x16xf32> to vector<16x16xbf16>
    %c0_200 = arith.constant 0 : index
    %c128_201 = arith.constant 128 : index
    %216 = vector.load %arg33[%c0_200, %c128_201] : memref<16x272xbf16, #tpu.memory_space<vmem>>, vector<16x16xbf16>
    tpu.vector_store %arg33[%c0_200, %c128_201], %215 {strides = array<i32>} : memref<16x272xbf16, #tpu.memory_space<vmem>>, vector<16x16xbf16>,
    %c0_202 = arith.constant 0 : index
    %c123 = arith.constant 123 : index
    %217 = vector.load %arg33[%c0_202, %c123] : memref<16x272xbf16, #tpu.memory_space<vmem>>, vector<16x16xbf16>
    %c0_203 = arith.constant 0 : index
    %c0_204 = arith.constant 0 : index
    %218 = vector.load %arg15[%c0_203, %c0_204] : memref<9x16xbf16, #tpu.memory_space<vmem>>, vector<1x16xbf16>
    %219 = vector.broadcast %218 : vector<1x16xbf16> to vector<16x16xbf16>
    %220 = arith.mulf %217, %219 : vector<16x16xbf16>
    %c0_205 = arith.constant 0 : index
    %c0_206 = arith.constant 0 : index
    %221 = vector.load %arg38[%c0_205, %c0_206] : memref<256x256xbf16, #tpu.memory_space<vmem>>, vector<16x16xbf16>
    tpu.vector_store %arg38[%c0_205, %c0_206], %220 {strides = array<i32>} : memref<256x256xbf16, #tpu.memory_space<vmem>>, vector<16x16xbf16>,
    %c0_207 = arith.constant 0 : index
    %c124 = arith.constant 124 : index
    %222 = vector.load %arg33[%c0_207, %c124] : memref<16x272xbf16, #tpu.memory_space<vmem>>, vector<16x16xbf16>
    %c1_208 = arith.constant 1 : index
    %c0_209 = arith.constant 0 : index
    %223 = vector.load %arg15[%c1_208, %c0_209] : memref<9x16xbf16, #tpu.memory_space<vmem>>, vector<1x16xbf16>
    %224 = vector.broadcast %223 : vector<1x16xbf16> to vector<16x16xbf16>
    %225 = arith.mulf %222, %224 : vector<16x16xbf16>
    %c16_210 = arith.constant 16 : index
    %c0_211 = arith.constant 0 : index
    %226 = vector.load %arg38[%c16_210, %c0_211] : memref<256x256xbf16, #tpu.memory_space<vmem>>, vector<16x16xbf16>
    tpu.vector_store %arg38[%c16_210, %c0_211], %225 {strides = array<i32>} : memref<256x256xbf16, #tpu.memory_space<vmem>>, vector<16x16xbf16>,
    %c0_212 = arith.constant 0 : index
    %c125 = arith.constant 125 : index
    %227 = vector.load %arg33[%c0_212, %c125] : memref<16x272xbf16, #tpu.memory_space<vmem>>, vector<16x16xbf16>
    %c2_213 = arith.constant 2 : index
    %c0_214 = arith.constant 0 : index
    %228 = vector.load %arg15[%c2_213, %c0_214] : memref<9x16xbf16, #tpu.memory_space<vmem>>, vector<1x16xbf16>
    %229 = vector.broadcast %228 : vector<1x16xbf16> to vector<16x16xbf16>
    %230 = arith.mulf %227, %229 : vector<16x16xbf16>
    %c32_215 = arith.constant 32 : index
    %c0_216 = arith.constant 0 : index
    %231 = vector.load %arg38[%c32_215, %c0_216] : memref<256x256xbf16, #tpu.memory_space<vmem>>, vector<16x16xbf16>
    tpu.vector_store %arg38[%c32_215, %c0_216], %230 {strides = array<i32>} : memref<256x256xbf16, #tpu.memory_space<vmem>>, vector<16x16xbf16>,
    %c0_217 = arith.constant 0 : index
    %c127_218 = arith.constant 127 : index
    %232 = vector.load %arg33[%c0_217, %c127_218] : memref<16x272xbf16, #tpu.memory_space<vmem>>, vector<16x16xbf16>
    %c3_219 = arith.constant 3 : index
    %c0_220 = arith.constant 0 : index
    %233 = vector.load %arg15[%c3_219, %c0_220] : memref<9x16xbf16, #tpu.memory_space<vmem>>, vector<1x16xbf16>
    %234 = vector.broadcast %233 : vector<1x16xbf16> to vector<16x16xbf16>
    %235 = arith.mulf %232, %234 : vector<16x16xbf16>
    %c48_221 = arith.constant 48 : index
    %c0_222 = arith.constant 0 : index
    %236 = vector.load %arg38[%c48_221, %c0_222] : memref<256x256xbf16, #tpu.memory_space<vmem>>, vector<16x16xbf16>
    tpu.vector_store %arg38[%c48_221, %c0_222], %235 {strides = array<i32>} : memref<256x256xbf16, #tpu.memory_space<vmem>>, vector<16x16xbf16>,
    %c0_223 = arith.constant 0 : index
    %c128_224 = arith.constant 128 : index
    %237 = vector.load %arg33[%c0_223, %c128_224] : memref<16x272xbf16, #tpu.memory_space<vmem>>, vector<16x16xbf16>
    %c4_225 = arith.constant 4 : index
    %c0_226 = arith.constant 0 : index
    %238 = vector.load %arg15[%c4_225, %c0_226] : memref<9x16xbf16, #tpu.memory_space<vmem>>, vector<1x16xbf16>
    %239 = vector.broadcast %238 : vector<1x16xbf16> to vector<16x16xbf16>
    %240 = arith.mulf %237, %239 : vector<16x16xbf16>
    %c64_227 = arith.constant 64 : index
    %c0_228 = arith.constant 0 : index
    %241 = vector.load %arg38[%c64_227, %c0_228] : memref<256x256xbf16, #tpu.memory_space<vmem>>, vector<16x16xbf16>
    tpu.vector_store %arg38[%c64_227, %c0_228], %240 {strides = array<i32>} : memref<256x256xbf16, #tpu.memory_space<vmem>>, vector<16x16xbf16>,
    %c0_229 = arith.constant 0 : index
    %c129_230 = arith.constant 129 : index
    %242 = vector.load %arg33[%c0_229, %c129_230] : memref<16x272xbf16, #tpu.memory_space<vmem>>, vector<16x16xbf16>
    %c5_231 = arith.constant 5 : index
    %c0_232 = arith.constant 0 : index
    %243 = vector.load %arg15[%c5_231, %c0_232] : memref<9x16xbf16, #tpu.memory_space<vmem>>, vector<1x16xbf16>
    %244 = vector.broadcast %243 : vector<1x16xbf16> to vector<16x16xbf16>
    %245 = arith.mulf %242, %244 : vector<16x16xbf16>
    %c80 = arith.constant 80 : index
    %c0_233 = arith.constant 0 : index
    %246 = vector.load %arg38[%c80, %c0_233] : memref<256x256xbf16, #tpu.memory_space<vmem>>, vector<16x16xbf16>
    tpu.vector_store %arg38[%c80, %c0_233], %245 {strides = array<i32>} : memref<256x256xbf16, #tpu.memory_space<vmem>>, vector<16x16xbf16>,
    %c0_234 = arith.constant 0 : index
    %c131 = arith.constant 131 : index
    %247 = vector.load %arg33[%c0_234, %c131] : memref<16x272xbf16, #tpu.memory_space<vmem>>, vector<16x16xbf16>
    %c6_235 = arith.constant 6 : index
    %c0_236 = arith.constant 0 : index
    %248 = vector.load %arg15[%c6_235, %c0_236] : memref<9x16xbf16, #tpu.memory_space<vmem>>, vector<1x16xbf16>
    %249 = vector.broadcast %248 : vector<1x16xbf16> to vector<16x16xbf16>
    %250 = arith.mulf %247, %249 : vector<16x16xbf16>
    %c96 = arith.constant 96 : index
    %c0_237 = arith.constant 0 : index
    %251 = vector.load %arg38[%c96, %c0_237] : memref<256x256xbf16, #tpu.memory_space<vmem>>, vector<16x16xbf16>
    tpu.vector_store %arg38[%c96, %c0_237], %250 {strides = array<i32>} : memref<256x256xbf16, #tpu.memory_space<vmem>>, vector<16x16xbf16>,
    %c0_238 = arith.constant 0 : index
    %c132 = arith.constant 132 : index
    %252 = vector.load %arg33[%c0_238, %c132] : memref<16x272xbf16, #tpu.memory_space<vmem>>, vector<16x16xbf16>
    %c7_239 = arith.constant 7 : index
    %c0_240 = arith.constant 0 : index
    %253 = vector.load %arg15[%c7_239, %c0_240] : memref<9x16xbf16, #tpu.memory_space<vmem>>, vector<1x16xbf16>
    %254 = vector.broadcast %253 : vector<1x16xbf16> to vector<16x16xbf16>
    %255 = arith.mulf %252, %254 : vector<16x16xbf16>
    %c112_241 = arith.constant 112 : index
    %c0_242 = arith.constant 0 : index
    %256 = vector.load %arg38[%c112_241, %c0_242] : memref<256x256xbf16, #tpu.memory_space<vmem>>, vector<16x16xbf16>
    tpu.vector_store %arg38[%c112_241, %c0_242], %255 {strides = array<i32>} : memref<256x256xbf16, #tpu.memory_space<vmem>>, vector<16x16xbf16>,
    %c0_243 = arith.constant 0 : index
    %c133 = arith.constant 133 : index
    %257 = vector.load %arg33[%c0_243, %c133] : memref<16x272xbf16, #tpu.memory_space<vmem>>, vector<16x16xbf16>
    %c8_244 = arith.constant 8 : index
    %c0_245 = arith.constant 0 : index
    %258 = vector.load %arg15[%c8_244, %c0_245] : memref<9x16xbf16, #tpu.memory_space<vmem>>, vector<1x16xbf16>
    %259 = vector.broadcast %258 : vector<1x16xbf16> to vector<16x16xbf16>
    %260 = arith.mulf %257, %259 : vector<16x16xbf16>
    %c128_246 = arith.constant 128 : index
    %c0_247 = arith.constant 0 : index
    %261 = vector.load %arg38[%c128_246, %c0_247] : memref<256x256xbf16, #tpu.memory_space<vmem>>, vector<16x16xbf16>
    tpu.vector_store %arg38[%c128_246, %c0_247], %260 {strides = array<i32>} : memref<256x256xbf16, #tpu.memory_space<vmem>>, vector<16x16xbf16>,
    %c0_248 = arith.constant 0 : index
    %c0_249 = arith.constant 0 : index
    %262 = vector.load %arg9[%c0_248, %c0_249] : memref<16x144xbf16, #tpu.memory_space<vmem>>, vector<16x144xbf16>
    %c0_250 = arith.constant 0 : index
    %c0_251 = arith.constant 0 : index
    %263 = vector.load %arg38[%c0_250, %c0_251] : memref<256x256xbf16, #tpu.memory_space<vmem>>, vector<144x16xbf16>
    %cst_252 = arith.constant dense<0.000000e+00> : vector<16x16xf32>
    %264 = tpu.matmul %262, %263, %cst_252 {dimension_numbers = #tpu.dot_dimension_numbers<[1], [0], [0], [1], [0, 0, 1, 1], [], []>} : vector<16x144xbf16>, vector<144x16xbf16>, vector<16x16xf32> -> vector<16x16xf32>
    %c0_253 = arith.constant 0 : index
    %c0_254 = arith.constant 0 : index
    %265 = vector.load %arg10[%c0_253, %c0_254] : memref<16x1xf32, #tpu.memory_space<vmem>>, vector<16x1xf32>
    %266 = vector.broadcast %265 : vector<16x1xf32> to vector<16x16xf32>
    %267 = arith.addf %264, %266 : vector<16x16xf32>
    %c0_255 = arith.constant 0 : index
    %c128_256 = arith.constant 128 : index
    %268 = vector.load %arg35[%c0_255, %c128_256] : memref<16x272xbf16, #tpu.memory_space<vmem>>, vector<16x16xbf16>
    %269 = arith.extf %268 : vector<16x16xbf16> to vector<16x16xf32>
    %c0_257 = arith.constant 0 : index
    %c0_258 = arith.constant 0 : index
    %270 = vector.load %arg34[%c0_257, %c0_258] : memref<16x16xf32, #tpu.memory_space<vmem>>, vector<16x16xf32>
    %cst_259 = arith.constant 1.000000e+00 : f32
    %271 = vector.broadcast %cst_259 : f32 to vector<16x16xf32>
    %272 = arith.subf %271, %269 : vector<16x16xf32>
    %cst_260 = arith.constant 1.000000e-01 : f32
    %273 = vector.broadcast %cst_260 : f32 to vector<16x16xf32>
    %274 = arith.mulf %273, %272 : vector<16x16xf32>
    %275 = arith.mulf %270, %274 : vector<16x16xf32>
    %276 = arith.addf %275, %267 : vector<16x16xf32>
    %c0_261 = arith.constant 0 : index
    %c0_262 = arith.constant 0 : index
    %277 = vector.load %arg34[%c0_261, %c0_262] : memref<16x16xf32, #tpu.memory_space<vmem>>, vector<16x16xf32>
    tpu.vector_store %arg34[%c0_261, %c0_262], %276 {strides = array<i32>} : memref<16x16xf32, #tpu.memory_space<vmem>>, vector<16x16xf32>,
    %cst_263 = arith.constant 2.500000e-01 : f32
    %278 = vector.broadcast %cst_263 : f32 to vector<16x16xf32>
    %279 = arith.cmpf ogt, %276, %278 : vector<16x16xf32>
    %280 = arith.extui %279 : vector<16x16xi1> to vector<16x16xi32>
    %281 = arith.sitofp %280 : vector<16x16xi32> to vector<16x16xf32>
    %282 = arith.truncf %281 : vector<16x16xf32> to vector<16x16xbf16>
    %c0_264 = arith.constant 0 : index
    %c128_265 = arith.constant 128 : index
    %283 = vector.load %arg35[%c0_264, %c128_265] : memref<16x272xbf16, #tpu.memory_space<vmem>>, vector<16x16xbf16>
    tpu.vector_store %arg35[%c0_264, %c128_265], %282 {strides = array<i32>} : memref<16x272xbf16, #tpu.memory_space<vmem>>, vector<16x16xbf16>,
    %c0_266 = arith.constant 0 : index
    %c123_267 = arith.constant 123 : index
    %284 = vector.load %arg35[%c0_266, %c123_267] : memref<16x272xbf16, #tpu.memory_space<vmem>>, vector<16x16xbf16>
    %c0_268 = arith.constant 0 : index
    %c0_269 = arith.constant 0 : index
    %285 = vector.load %arg15[%c0_268, %c0_269] : memref<9x16xbf16, #tpu.memory_space<vmem>>, vector<1x16xbf16>
    %286 = vector.broadcast %285 : vector<1x16xbf16> to vector<16x16xbf16>
    %287 = arith.mulf %284, %286 : vector<16x16xbf16>
    %c0_270 = arith.constant 0 : index
    %c0_271 = arith.constant 0 : index
    %288 = vector.load %arg38[%c0_270, %c0_271] : memref<256x256xbf16, #tpu.memory_space<vmem>>, vector<16x16xbf16>
    tpu.vector_store %arg38[%c0_270, %c0_271], %287 {strides = array<i32>} : memref<256x256xbf16, #tpu.memory_space<vmem>>, vector<16x16xbf16>,
    %c0_272 = arith.constant 0 : index
    %c124_273 = arith.constant 124 : index
    %289 = vector.load %arg35[%c0_272, %c124_273] : memref<16x272xbf16, #tpu.memory_space<vmem>>, vector<16x16xbf16>
    %c1_274 = arith.constant 1 : index
    %c0_275 = arith.constant 0 : index
    %290 = vector.load %arg15[%c1_274, %c0_275] : memref<9x16xbf16, #tpu.memory_space<vmem>>, vector<1x16xbf16>
    %291 = vector.broadcast %290 : vector<1x16xbf16> to vector<16x16xbf16>
    %292 = arith.mulf %289, %291 : vector<16x16xbf16>
    %c16_276 = arith.constant 16 : index
    %c0_277 = arith.constant 0 : index
    %293 = vector.load %arg38[%c16_276, %c0_277] : memref<256x256xbf16, #tpu.memory_space<vmem>>, vector<16x16xbf16>
    tpu.vector_store %arg38[%c16_276, %c0_277], %292 {strides = array<i32>} : memref<256x256xbf16, #tpu.memory_space<vmem>>, vector<16x16xbf16>,
    %c0_278 = arith.constant 0 : index
    %c125_279 = arith.constant 125 : index
    %294 = vector.load %arg35[%c0_278, %c125_279] : memref<16x272xbf16, #tpu.memory_space<vmem>>, vector<16x16xbf16>
    %c2_280 = arith.constant 2 : index
    %c0_281 = arith.constant 0 : index
    %295 = vector.load %arg15[%c2_280, %c0_281] : memref<9x16xbf16, #tpu.memory_space<vmem>>, vector<1x16xbf16>
    %296 = vector.broadcast %295 : vector<1x16xbf16> to vector<16x16xbf16>
    %297 = arith.mulf %294, %296 : vector<16x16xbf16>
    %c32_282 = arith.constant 32 : index
    %c0_283 = arith.constant 0 : index
    %298 = vector.load %arg38[%c32_282, %c0_283] : memref<256x256xbf16, #tpu.memory_space<vmem>>, vector<16x16xbf16>
    tpu.vector_store %arg38[%c32_282, %c0_283], %297 {strides = array<i32>} : memref<256x256xbf16, #tpu.memory_space<vmem>>, vector<16x16xbf16>,
    %c0_284 = arith.constant 0 : index
    %c127_285 = arith.constant 127 : index
    %299 = vector.load %arg35[%c0_284, %c127_285] : memref<16x272xbf16, #tpu.memory_space<vmem>>, vector<16x16xbf16>
    %c3_286 = arith.constant 3 : index
    %c0_287 = arith.constant 0 : index
    %300 = vector.load %arg15[%c3_286, %c0_287] : memref<9x16xbf16, #tpu.memory_space<vmem>>, vector<1x16xbf16>
    %301 = vector.broadcast %300 : vector<1x16xbf16> to vector<16x16xbf16>
    %302 = arith.mulf %299, %301 : vector<16x16xbf16>
    %c48_288 = arith.constant 48 : index
    %c0_289 = arith.constant 0 : index
    %303 = vector.load %arg38[%c48_288, %c0_289] : memref<256x256xbf16, #tpu.memory_space<vmem>>, vector<16x16xbf16>
    tpu.vector_store %arg38[%c48_288, %c0_289], %302 {strides = array<i32>} : memref<256x256xbf16, #tpu.memory_space<vmem>>, vector<16x16xbf16>,
    %c0_290 = arith.constant 0 : index
    %c128_291 = arith.constant 128 : index
    %304 = vector.load %arg35[%c0_290, %c128_291] : memref<16x272xbf16, #tpu.memory_space<vmem>>, vector<16x16xbf16>
    %c4_292 = arith.constant 4 : index
    %c0_293 = arith.constant 0 : index
    %305 = vector.load %arg15[%c4_292, %c0_293] : memref<9x16xbf16, #tpu.memory_space<vmem>>, vector<1x16xbf16>
    %306 = vector.broadcast %305 : vector<1x16xbf16> to vector<16x16xbf16>
    %307 = arith.mulf %304, %306 : vector<16x16xbf16>
    %c64_294 = arith.constant 64 : index
    %c0_295 = arith.constant 0 : index
    %308 = vector.load %arg38[%c64_294, %c0_295] : memref<256x256xbf16, #tpu.memory_space<vmem>>, vector<16x16xbf16>
    tpu.vector_store %arg38[%c64_294, %c0_295], %307 {strides = array<i32>} : memref<256x256xbf16, #tpu.memory_space<vmem>>, vector<16x16xbf16>,
    %c0_296 = arith.constant 0 : index
    %c129_297 = arith.constant 129 : index
    %309 = vector.load %arg35[%c0_296, %c129_297] : memref<16x272xbf16, #tpu.memory_space<vmem>>, vector<16x16xbf16>
    %c5_298 = arith.constant 5 : index
    %c0_299 = arith.constant 0 : index
    %310 = vector.load %arg15[%c5_298, %c0_299] : memref<9x16xbf16, #tpu.memory_space<vmem>>, vector<1x16xbf16>
    %311 = vector.broadcast %310 : vector<1x16xbf16> to vector<16x16xbf16>
    %312 = arith.mulf %309, %311 : vector<16x16xbf16>
    %c80_300 = arith.constant 80 : index
    %c0_301 = arith.constant 0 : index
    %313 = vector.load %arg38[%c80_300, %c0_301] : memref<256x256xbf16, #tpu.memory_space<vmem>>, vector<16x16xbf16>
    tpu.vector_store %arg38[%c80_300, %c0_301], %312 {strides = array<i32>} : memref<256x256xbf16, #tpu.memory_space<vmem>>, vector<16x16xbf16>,
    %c0_302 = arith.constant 0 : index
    %c131_303 = arith.constant 131 : index
    %314 = vector.load %arg35[%c0_302, %c131_303] : memref<16x272xbf16, #tpu.memory_space<vmem>>, vector<16x16xbf16>
    %c6_304 = arith.constant 6 : index
    %c0_305 = arith.constant 0 : index
    %315 = vector.load %arg15[%c6_304, %c0_305] : memref<9x16xbf16, #tpu.memory_space<vmem>>, vector<1x16xbf16>
    %316 = vector.broadcast %315 : vector<1x16xbf16> to vector<16x16xbf16>
    %317 = arith.mulf %314, %316 : vector<16x16xbf16>
    %c96_306 = arith.constant 96 : index
    %c0_307 = arith.constant 0 : index
    %318 = vector.load %arg38[%c96_306, %c0_307] : memref<256x256xbf16, #tpu.memory_space<vmem>>, vector<16x16xbf16>
    tpu.vector_store %arg38[%c96_306, %c0_307], %317 {strides = array<i32>} : memref<256x256xbf16, #tpu.memory_space<vmem>>, vector<16x16xbf16>,
    %c0_308 = arith.constant 0 : index
    %c132_309 = arith.constant 132 : index
    %319 = vector.load %arg35[%c0_308, %c132_309] : memref<16x272xbf16, #tpu.memory_space<vmem>>, vector<16x16xbf16>
    %c7_310 = arith.constant 7 : index
    %c0_311 = arith.constant 0 : index
    %320 = vector.load %arg15[%c7_310, %c0_311] : memref<9x16xbf16, #tpu.memory_space<vmem>>, vector<1x16xbf16>
    %321 = vector.broadcast %320 : vector<1x16xbf16> to vector<16x16xbf16>
    %322 = arith.mulf %319, %321 : vector<16x16xbf16>
    %c112_312 = arith.constant 112 : index
    %c0_313 = arith.constant 0 : index
    %323 = vector.load %arg38[%c112_312, %c0_313] : memref<256x256xbf16, #tpu.memory_space<vmem>>, vector<16x16xbf16>
    tpu.vector_store %arg38[%c112_312, %c0_313], %322 {strides = array<i32>} : memref<256x256xbf16, #tpu.memory_space<vmem>>, vector<16x16xbf16>,
    %c0_314 = arith.constant 0 : index
    %c133_315 = arith.constant 133 : index
    %324 = vector.load %arg35[%c0_314, %c133_315] : memref<16x272xbf16, #tpu.memory_space<vmem>>, vector<16x16xbf16>
    %c8_316 = arith.constant 8 : index
    %c0_317 = arith.constant 0 : index
    %325 = vector.load %arg15[%c8_316, %c0_317] : memref<9x16xbf16, #tpu.memory_space<vmem>>, vector<1x16xbf16>
    %326 = vector.broadcast %325 : vector<1x16xbf16> to vector<16x16xbf16>
    %327 = arith.mulf %324, %326 : vector<16x16xbf16>
    %c128_318 = arith.constant 128 : index
    %c0_319 = arith.constant 0 : index
    %328 = vector.load %arg38[%c128_318, %c0_319] : memref<256x256xbf16, #tpu.memory_space<vmem>>, vector<16x16xbf16>
    tpu.vector_store %arg38[%c128_318, %c0_319], %327 {strides = array<i32>} : memref<256x256xbf16, #tpu.memory_space<vmem>>, vector<16x16xbf16>,
    %c0_320 = arith.constant 0 : index
    %c0_321 = arith.constant 0 : index
    %329 = vector.load %arg11[%c0_320, %c0_321] : memref<16x144xbf16, #tpu.memory_space<vmem>>, vector<16x144xbf16>
    %c0_322 = arith.constant 0 : index
    %c0_323 = arith.constant 0 : index
    %330 = vector.load %arg38[%c0_322, %c0_323] : memref<256x256xbf16, #tpu.memory_space<vmem>>, vector<144x16xbf16>
    %cst_324 = arith.constant dense<0.000000e+00> : vector<16x16xf32>
    %331 = tpu.matmul %329, %330, %cst_324 {dimension_numbers = #tpu.dot_dimension_numbers<[1], [0], [0], [1], [0, 0, 1, 1], [], []>} : vector<16x144xbf16>, vector<144x16xbf16>, vector<16x16xf32> -> vector<16x16xf32>
    %c0_325 = arith.constant 0 : index
    %c0_326 = arith.constant 0 : index
    %332 = vector.load %arg12[%c0_325, %c0_326] : memref<16x1xf32, #tpu.memory_space<vmem>>, vector<16x1xf32>
    %333 = vector.broadcast %332 : vector<16x1xf32> to vector<16x16xf32>
    %334 = arith.addf %331, %333 : vector<16x16xf32>
    %c0_327 = arith.constant 0 : index
    %c128_328 = arith.constant 128 : index
    %335 = vector.load %arg37[%c0_327, %c128_328] : memref<16x272xbf16, #tpu.memory_space<vmem>>, vector<16x16xbf16>
    %336 = arith.extf %335 : vector<16x16xbf16> to vector<16x16xf32>
    %c0_329 = arith.constant 0 : index
    %c0_330 = arith.constant 0 : index
    %337 = vector.load %arg36[%c0_329, %c0_330] : memref<16x16xf32, #tpu.memory_space<vmem>>, vector<16x16xf32>
    %cst_331 = arith.constant 1.000000e+00 : f32
    %338 = vector.broadcast %cst_331 : f32 to vector<16x16xf32>
    %339 = arith.subf %338, %336 : vector<16x16xf32>
    %cst_332 = arith.constant 1.000000e-01 : f32
    %340 = vector.broadcast %cst_332 : f32 to vector<16x16xf32>
    %341 = arith.mulf %340, %339 : vector<16x16xf32>
    %342 = arith.mulf %337, %341 : vector<16x16xf32>
    %343 = arith.addf %342, %334 : vector<16x16xf32>
    %c0_333 = arith.constant 0 : index
    %c0_334 = arith.constant 0 : index
    %344 = vector.load %arg36[%c0_333, %c0_334] : memref<16x16xf32, #tpu.memory_space<vmem>>, vector<16x16xf32>
    tpu.vector_store %arg36[%c0_333, %c0_334], %343 {strides = array<i32>} : memref<16x16xf32, #tpu.memory_space<vmem>>, vector<16x16xf32>,
    %cst_335 = arith.constant 2.500000e-01 : f32
    %345 = vector.broadcast %cst_335 : f32 to vector<16x16xf32>
    %346 = arith.cmpf ogt, %343, %345 : vector<16x16xf32>
    %347 = arith.extui %346 : vector<16x16xi1> to vector<16x16xi32>
    %348 = arith.sitofp %347 : vector<16x16xi32> to vector<16x16xf32>
    %349 = arith.truncf %348 : vector<16x16xf32> to vector<16x16xbf16>
    %c0_336 = arith.constant 0 : index
    %c128_337 = arith.constant 128 : index
    %350 = vector.load %arg37[%c0_336, %c128_337] : memref<16x272xbf16, #tpu.memory_space<vmem>>, vector<16x16xbf16>
    tpu.vector_store %arg37[%c0_336, %c128_337], %349 {strides = array<i32>} : memref<16x272xbf16, #tpu.memory_space<vmem>>, vector<16x16xbf16>,
    %c0_338 = arith.constant 0 : index
    %c128_339 = arith.constant 128 : index
    %351 = vector.load %arg37[%c0_338, %c128_339] : memref<16x272xbf16, #tpu.memory_space<vmem>>, vector<16x16xbf16>
    %c0_340 = arith.constant 0 : index
    %c0_341 = arith.constant 0 : index
    %352 = vector.load %arg38[%c0_340, %c0_341] : memref<256x256xbf16, #tpu.memory_space<vmem>>, vector<16x16xbf16>
    tpu.vector_store %arg38[%c0_340, %c0_341], %351 {strides = array<i32>} : memref<256x256xbf16, #tpu.memory_space<vmem>>, vector<16x16xbf16>,
    %c0_342 = arith.constant 0 : index
    %c129_343 = arith.constant 129 : index
    %353 = vector.load %arg37[%c0_342, %c129_343] : memref<16x272xbf16, #tpu.memory_space<vmem>>, vector<16x16xbf16>
    %c16_344 = arith.constant 16 : index
    %c0_345 = arith.constant 0 : index
    %354 = vector.load %arg38[%c16_344, %c0_345] : memref<256x256xbf16, #tpu.memory_space<vmem>>, vector<16x16xbf16>
    tpu.vector_store %arg38[%c16_344, %c0_345], %353 {strides = array<i32>} : memref<256x256xbf16, #tpu.memory_space<vmem>>, vector<16x16xbf16>,
    %c0_346 = arith.constant 0 : index
    %c130 = arith.constant 130 : index
    %355 = vector.load %arg37[%c0_346, %c130] : memref<16x272xbf16, #tpu.memory_space<vmem>>, vector<16x16xbf16>
    %c32_347 = arith.constant 32 : index
    %c0_348 = arith.constant 0 : index
    %356 = vector.load %arg38[%c32_347, %c0_348] : memref<256x256xbf16, #tpu.memory_space<vmem>>, vector<16x16xbf16>
    tpu.vector_store %arg38[%c32_347, %c0_348], %355 {strides = array<i32>} : memref<256x256xbf16, #tpu.memory_space<vmem>>, vector<16x16xbf16>,
    %c0_349 = arith.constant 0 : index
    %c131_350 = arith.constant 131 : index
    %357 = vector.load %arg37[%c0_349, %c131_350] : memref<16x272xbf16, #tpu.memory_space<vmem>>, vector<16x16xbf16>
    %c48_351 = arith.constant 48 : index
    %c0_352 = arith.constant 0 : index
    %358 = vector.load %arg38[%c48_351, %c0_352] : memref<256x256xbf16, #tpu.memory_space<vmem>>, vector<16x16xbf16>
    tpu.vector_store %arg38[%c48_351, %c0_352], %357 {strides = array<i32>} : memref<256x256xbf16, #tpu.memory_space<vmem>>, vector<16x16xbf16>,
    %c0_353 = arith.constant 0 : index
    %c132_354 = arith.constant 132 : index
    %359 = vector.load %arg37[%c0_353, %c132_354] : memref<16x272xbf16, #tpu.memory_space<vmem>>, vector<16x16xbf16>
    %c64_355 = arith.constant 64 : index
    %c0_356 = arith.constant 0 : index
    %360 = vector.load %arg38[%c64_355, %c0_356] : memref<256x256xbf16, #tpu.memory_space<vmem>>, vector<16x16xbf16>
    tpu.vector_store %arg38[%c64_355, %c0_356], %359 {strides = array<i32>} : memref<256x256xbf16, #tpu.memory_space<vmem>>, vector<16x16xbf16>,
    %c0_357 = arith.constant 0 : index
    %c133_358 = arith.constant 133 : index
    %361 = vector.load %arg37[%c0_357, %c133_358] : memref<16x272xbf16, #tpu.memory_space<vmem>>, vector<16x16xbf16>
    %c80_359 = arith.constant 80 : index
    %c0_360 = arith.constant 0 : index
    %362 = vector.load %arg38[%c80_359, %c0_360] : memref<256x256xbf16, #tpu.memory_space<vmem>>, vector<16x16xbf16>
    tpu.vector_store %arg38[%c80_359, %c0_360], %361 {strides = array<i32>} : memref<256x256xbf16, #tpu.memory_space<vmem>>, vector<16x16xbf16>,
    %c0_361 = arith.constant 0 : index
    %c134 = arith.constant 134 : index
    %363 = vector.load %arg37[%c0_361, %c134] : memref<16x272xbf16, #tpu.memory_space<vmem>>, vector<16x16xbf16>
    %c96_362 = arith.constant 96 : index
    %c0_363 = arith.constant 0 : index
    %364 = vector.load %arg38[%c96_362, %c0_363] : memref<256x256xbf16, #tpu.memory_space<vmem>>, vector<16x16xbf16>
    tpu.vector_store %arg38[%c96_362, %c0_363], %363 {strides = array<i32>} : memref<256x256xbf16, #tpu.memory_space<vmem>>, vector<16x16xbf16>,
    %c0_364 = arith.constant 0 : index
    %c135_365 = arith.constant 135 : index
    %365 = vector.load %arg37[%c0_364, %c135_365] : memref<16x272xbf16, #tpu.memory_space<vmem>>, vector<16x16xbf16>
    %c112_366 = arith.constant 112 : index
    %c0_367 = arith.constant 0 : index
    %366 = vector.load %arg38[%c112_366, %c0_367] : memref<256x256xbf16, #tpu.memory_space<vmem>>, vector<16x16xbf16>
    tpu.vector_store %arg38[%c112_366, %c0_367], %365 {strides = array<i32>} : memref<256x256xbf16, #tpu.memory_space<vmem>>, vector<16x16xbf16>,
    %c0_368 = arith.constant 0 : index
    %c136_369 = arith.constant 136 : index
    %367 = vector.load %arg37[%c0_368, %c136_369] : memref<16x272xbf16, #tpu.memory_space<vmem>>, vector<16x16xbf16>
    %c128_370 = arith.constant 128 : index
    %c0_371 = arith.constant 0 : index
    %368 = vector.load %arg38[%c128_370, %c0_371] : memref<256x256xbf16, #tpu.memory_space<vmem>>, vector<16x16xbf16>
    tpu.vector_store %arg38[%c128_370, %c0_371], %367 {strides = array<i32>} : memref<256x256xbf16, #tpu.memory_space<vmem>>, vector<16x16xbf16>,
    %c0_372 = arith.constant 0 : index
    %c137_373 = arith.constant 137 : index
    %369 = vector.load %arg37[%c0_372, %c137_373] : memref<16x272xbf16, #tpu.memory_space<vmem>>, vector<16x16xbf16>
    %c144_374 = arith.constant 144 : index
    %c0_375 = arith.constant 0 : index
    %370 = vector.load %arg38[%c144_374, %c0_375] : memref<256x256xbf16, #tpu.memory_space<vmem>>, vector<16x16xbf16>
    tpu.vector_store %arg38[%c144_374, %c0_375], %369 {strides = array<i32>} : memref<256x256xbf16, #tpu.memory_space<vmem>>, vector<16x16xbf16>,
    %c0_376 = arith.constant 0 : index
    %c138 = arith.constant 138 : index
    %371 = vector.load %arg37[%c0_376, %c138] : memref<16x272xbf16, #tpu.memory_space<vmem>>, vector<16x16xbf16>
    %c160 = arith.constant 160 : index
    %c0_377 = arith.constant 0 : index
    %372 = vector.load %arg38[%c160, %c0_377] : memref<256x256xbf16, #tpu.memory_space<vmem>>, vector<16x16xbf16>
    tpu.vector_store %arg38[%c160, %c0_377], %371 {strides = array<i32>} : memref<256x256xbf16, #tpu.memory_space<vmem>>, vector<16x16xbf16>,
    %c0_378 = arith.constant 0 : index
    %c139 = arith.constant 139 : index
    %373 = vector.load %arg37[%c0_378, %c139] : memref<16x272xbf16, #tpu.memory_space<vmem>>, vector<16x16xbf16>
    %c176 = arith.constant 176 : index
    %c0_379 = arith.constant 0 : index
    %374 = vector.load %arg38[%c176, %c0_379] : memref<256x256xbf16, #tpu.memory_space<vmem>>, vector<16x16xbf16>
    tpu.vector_store %arg38[%c176, %c0_379], %373 {strides = array<i32>} : memref<256x256xbf16, #tpu.memory_space<vmem>>, vector<16x16xbf16>,
    %c0_380 = arith.constant 0 : index
    %c140 = arith.constant 140 : index
    %375 = vector.load %arg37[%c0_380, %c140] : memref<16x272xbf16, #tpu.memory_space<vmem>>, vector<16x16xbf16>
    %c192 = arith.constant 192 : index
    %c0_381 = arith.constant 0 : index
    %376 = vector.load %arg38[%c192, %c0_381] : memref<256x256xbf16, #tpu.memory_space<vmem>>, vector<16x16xbf16>
    tpu.vector_store %arg38[%c192, %c0_381], %375 {strides = array<i32>} : memref<256x256xbf16, #tpu.memory_space<vmem>>, vector<16x16xbf16>,
    %c0_382 = arith.constant 0 : index
    %c141 = arith.constant 141 : index
    %377 = vector.load %arg37[%c0_382, %c141] : memref<16x272xbf16, #tpu.memory_space<vmem>>, vector<16x16xbf16>
    %c208 = arith.constant 208 : index
    %c0_383 = arith.constant 0 : index
    %378 = vector.load %arg38[%c208, %c0_383] : memref<256x256xbf16, #tpu.memory_space<vmem>>, vector<16x16xbf16>
    tpu.vector_store %arg38[%c208, %c0_383], %377 {strides = array<i32>} : memref<256x256xbf16, #tpu.memory_space<vmem>>, vector<16x16xbf16>,
    %c0_384 = arith.constant 0 : index
    %c142 = arith.constant 142 : index
    %379 = vector.load %arg37[%c0_384, %c142] : memref<16x272xbf16, #tpu.memory_space<vmem>>, vector<16x16xbf16>
    %c224 = arith.constant 224 : index
    %c0_385 = arith.constant 0 : index
    %380 = vector.load %arg38[%c224, %c0_385] : memref<256x256xbf16, #tpu.memory_space<vmem>>, vector<16x16xbf16>
    tpu.vector_store %arg38[%c224, %c0_385], %379 {strides = array<i32>} : memref<256x256xbf16, #tpu.memory_space<vmem>>, vector<16x16xbf16>,
    %c0_386 = arith.constant 0 : index
    %c143_387 = arith.constant 143 : index
    %381 = vector.load %arg37[%c0_386, %c143_387] : memref<16x272xbf16, #tpu.memory_space<vmem>>, vector<16x16xbf16>
    %c240 = arith.constant 240 : index
    %c0_388 = arith.constant 0 : index
    %382 = vector.load %arg38[%c240, %c0_388] : memref<256x256xbf16, #tpu.memory_space<vmem>>, vector<16x16xbf16>
    tpu.vector_store %arg38[%c240, %c0_388], %381 {strides = array<i32>} : memref<256x256xbf16, #tpu.memory_space<vmem>>, vector<16x16xbf16>,
    %c0_389 = arith.constant 0 : index
    %c0_390 = arith.constant 0 : index
    %383 = vector.load %arg18[%c0_389, %c0_390] : memref<64x256xbf16, #tpu.memory_space<vmem>>, vector<64x256xbf16>
    %c0_391 = arith.constant 0 : index
    %c0_392 = arith.constant 0 : index
    %384 = vector.load %arg38[%c0_391, %c0_392] : memref<256x256xbf16, #tpu.memory_space<vmem>>, vector<256x16xbf16>
    %cst_393 = arith.constant dense<0.000000e+00> : vector<64x16xf32>
    %385 = tpu.matmul %383, %384, %cst_393 {dimension_numbers = #tpu.dot_dimension_numbers<[1], [0], [0], [1], [0, 0, 1, 1], [], []>} : vector<64x256xbf16>, vector<256x16xbf16>, vector<64x16xf32> -> vector<64x16xf32>
    %c0_394 = arith.constant 0 : index
    %c0_395 = arith.constant 0 : index
    %386 = vector.load %arg19[%c0_394, %c0_395] : memref<64x1xf32, #tpu.memory_space<vmem>>, vector<64x1xf32>
    %387 = vector.broadcast %386 : vector<64x1xf32> to vector<64x16xf32>
    %388 = arith.addf %385, %387 : vector<64x16xf32>
    %c0_396 = arith.constant 0 : index
    %c0_397 = arith.constant 0 : index
    %389 = vector.load %arg40[%c0_396, %c0_397] : memref<64x16xbf16, #tpu.memory_space<vmem>>, vector<64x16xbf16>
    %390 = arith.extf %389 : vector<64x16xbf16> to vector<64x16xf32>
    %c0_398 = arith.constant 0 : index
    %c0_399 = arith.constant 0 : index
    %391 = vector.load %arg39[%c0_398, %c0_399] : memref<64x16xf32, #tpu.memory_space<vmem>>, vector<64x16xf32>
    %cst_400 = arith.constant 1.000000e+00 : f32
    %392 = vector.broadcast %cst_400 : f32 to vector<64x16xf32>
    %393 = arith.subf %392, %390 : vector<64x16xf32>
    %cst_401 = arith.constant 1.000000e-01 : f32
    %394 = vector.broadcast %cst_401 : f32 to vector<64x16xf32>
    %395 = arith.mulf %394, %393 : vector<64x16xf32>
    %396 = arith.mulf %391, %395 : vector<64x16xf32>
    %397 = arith.addf %396, %388 : vector<64x16xf32>
    %c0_402 = arith.constant 0 : index
    %c0_403 = arith.constant 0 : index
    %398 = vector.load %arg39[%c0_402, %c0_403] : memref<64x16xf32, #tpu.memory_space<vmem>>, vector<64x16xf32>
    tpu.vector_store %arg39[%c0_402, %c0_403], %397 {strides = array<i32>} : memref<64x16xf32, #tpu.memory_space<vmem>>, vector<64x16xf32>,
    %cst_404 = arith.constant 2.500000e-01 : f32
    %399 = vector.broadcast %cst_404 : f32 to vector<64x16xf32>
    %400 = arith.cmpf ogt, %397, %399 : vector<64x16xf32>
    %401 = arith.extui %400 : vector<64x16xi1> to vector<64x16xi32>
    %402 = arith.sitofp %401 : vector<64x16xi32> to vector<64x16xf32>
    %403 = arith.truncf %402 : vector<64x16xf32> to vector<64x16xbf16>
    %c0_405 = arith.constant 0 : index
    %c0_406 = arith.constant 0 : index
    %404 = vector.load %arg40[%c0_405, %c0_406] : memref<64x16xbf16, #tpu.memory_space<vmem>>, vector<64x16xbf16>
    tpu.vector_store %arg40[%c0_405, %c0_406], %403 {strides = array<i32>} : memref<64x16xbf16, #tpu.memory_space<vmem>>, vector<64x16xbf16>,
    %c0_407 = arith.constant 0 : index
    %c0_408 = arith.constant 0 : index
    %405 = vector.load %arg20[%c0_407, %c0_408] : memref<32x64xbf16, #tpu.memory_space<vmem>>, vector<32x64xbf16>
    %cst_409 = arith.constant dense<0.000000e+00> : vector<32x16xf32>
    %406 = tpu.matmul %405, %403, %cst_409 {dimension_numbers = #tpu.dot_dimension_numbers<[1], [0], [0], [1], [0, 0, 1, 1], [], []>} : vector<32x64xbf16>, vector<64x16xbf16>, vector<32x16xf32> -> vector<32x16xf32>
    %c0_410 = arith.constant 0 : index
    %c0_411 = arith.constant 0 : index
    %407 = vector.load %arg21[%c0_410, %c0_411] : memref<32x1xf32, #tpu.memory_space<vmem>>, vector<32x1xf32>
    %408 = vector.broadcast %407 : vector<32x1xf32> to vector<32x16xf32>
    %409 = arith.addf %406, %408 : vector<32x16xf32>
    %c0_412 = arith.constant 0 : index
    %c0_413 = arith.constant 0 : index
    %410 = vector.load %arg42[%c0_412, %c0_413] : memref<32x16xbf16, #tpu.memory_space<vmem>>, vector<32x16xbf16>
    %411 = arith.extf %410 : vector<32x16xbf16> to vector<32x16xf32>
    %c0_414 = arith.constant 0 : index
    %c0_415 = arith.constant 0 : index
    %412 = vector.load %arg41[%c0_414, %c0_415] : memref<32x16xf32, #tpu.memory_space<vmem>>, vector<32x16xf32>
    %cst_416 = arith.constant 1.000000e+00 : f32
    %413 = vector.broadcast %cst_416 : f32 to vector<32x16xf32>
    %414 = arith.subf %413, %411 : vector<32x16xf32>
    %cst_417 = arith.constant 1.000000e-01 : f32
    %415 = vector.broadcast %cst_417 : f32 to vector<32x16xf32>
    %416 = arith.mulf %415, %414 : vector<32x16xf32>
    %417 = arith.mulf %412, %416 : vector<32x16xf32>
    %418 = arith.addf %417, %409 : vector<32x16xf32>
    %c0_418 = arith.constant 0 : index
    %c0_419 = arith.constant 0 : index
    %419 = vector.load %arg41[%c0_418, %c0_419] : memref<32x16xf32, #tpu.memory_space<vmem>>, vector<32x16xf32>
    tpu.vector_store %arg41[%c0_418, %c0_419], %418 {strides = array<i32>} : memref<32x16xf32, #tpu.memory_space<vmem>>, vector<32x16xf32>,
    %cst_420 = arith.constant 2.500000e-01 : f32
    %420 = vector.broadcast %cst_420 : f32 to vector<32x16xf32>
    %421 = arith.cmpf ogt, %418, %420 : vector<32x16xf32>
    %422 = arith.extui %421 : vector<32x16xi1> to vector<32x16xi32>
    %423 = arith.sitofp %422 : vector<32x16xi32> to vector<32x16xf32>
    %424 = arith.truncf %423 : vector<32x16xf32> to vector<32x16xbf16>
    %c0_421 = arith.constant 0 : index
    %c0_422 = arith.constant 0 : index
    %425 = vector.load %arg42[%c0_421, %c0_422] : memref<32x16xbf16, #tpu.memory_space<vmem>>, vector<32x16xbf16>
    tpu.vector_store %arg42[%c0_421, %c0_422], %424 {strides = array<i32>} : memref<32x16xbf16, #tpu.memory_space<vmem>>, vector<32x16xbf16>,
    %c0_423 = arith.constant 0 : index
    %c0_424 = arith.constant 0 : index
    %426 = vector.load %arg22[%c0_423, %c0_424] : memref<10x32xbf16, #tpu.memory_space<vmem>>, vector<10x32xbf16>
    %cst_425 = arith.constant dense<0.000000e+00> : vector<10x16xf32>
    %427 = tpu.matmul %426, %424, %cst_425 {dimension_numbers = #tpu.dot_dimension_numbers<[1], [0], [0], [1], [0, 0, 1, 1], [], []>} : vector<10x32xbf16>, vector<32x16xbf16>, vector<10x16xf32> -> vector<10x16xf32>
    %c0_426 = arith.constant 0 : index
    %c0_427 = arith.constant 0 : index
    %428 = vector.load %arg23[%c0_426, %c0_427] : memref<10x1xf32, #tpu.memory_space<vmem>>, vector<10x1xf32>
    %429 = vector.broadcast %428 : vector<10x1xf32> to vector<10x16xf32>
    %430 = arith.addf %427, %429 : vector<10x16xf32>
    %c0_428 = arith.constant 0 : index
    %c0_429 = arith.constant 0 : index
    %431 = vector.load %arg43[%c0_428, %c0_429] : memref<10x16xf32, #tpu.memory_space<vmem>>, vector<10x16xf32>
    %c0_430 = arith.constant 0 : index
    %c0_431 = arith.constant 0 : index
    %432 = vector.load %arg44[%c0_430, %c0_431] : memref<10x16xf32, #tpu.memory_space<vmem>>, vector<10x16xf32>
    %cst_432 = arith.constant 1.000000e+00 : f32
    %433 = vector.broadcast %cst_432 : f32 to vector<10x16xf32>
    %434 = arith.subf %433, %432 : vector<10x16xf32>
    %cst_433 = arith.constant 1.000000e-01 : f32
    %435 = vector.broadcast %cst_433 : f32 to vector<10x16xf32>
    %436 = arith.mulf %435, %434 : vector<10x16xf32>
    %437 = arith.mulf %431, %436 : vector<10x16xf32>
    %438 = arith.addf %437, %430 : vector<10x16xf32>
    %cst_434 = arith.constant 2.500000e-01 : f32
    %439 = vector.broadcast %cst_434 : f32 to vector<10x16xf32>
    %440 = arith.cmpf ogt, %438, %439 : vector<10x16xf32>
    %441 = arith.extui %440 : vector<10x16xi1> to vector<10x16xi32>
    %442 = arith.sitofp %441 : vector<10x16xi32> to vector<10x16xf32>
    %c0_435 = arith.constant 0 : index
    %c0_436 = arith.constant 0 : index
    %443 = vector.load %arg43[%c0_435, %c0_436] : memref<10x16xf32, #tpu.memory_space<vmem>>, vector<10x16xf32>
    tpu.vector_store %arg43[%c0_435, %c0_436], %438 {strides = array<i32>} : memref<10x16xf32, #tpu.memory_space<vmem>>, vector<10x16xf32>,
    %c0_437 = arith.constant 0 : index
    %c0_438 = arith.constant 0 : index
    %444 = vector.load %arg44[%c0_437, %c0_438] : memref<10x16xf32, #tpu.memory_space<vmem>>, vector<10x16xf32>
    tpu.vector_store %arg44[%c0_437, %c0_438], %442 {strides = array<i32>} : memref<10x16xf32, #tpu.memory_space<vmem>>, vector<10x16xf32>,
    %c0_439 = arith.constant 0 : index
    %c0_440 = arith.constant 0 : index
    %c0_441 = arith.constant 0 : index
    %445 = vector.load %arg24[%c0_439, %c0_440, %c0_441] : memref<1x10x16xf32, #tpu.memory_space<vmem>>, vector<1x10x16xf32>
    %446 = vector.shape_cast %445 : vector<1x10x16xf32> to vector<10x16xf32>
    %447 = arith.addf %446, %442 : vector<10x16xf32>
    %c0_442 = arith.constant 0 : index
    %c0_443 = arith.constant 0 : index
    %c0_444 = arith.constant 0 : index
    %448 = vector.load %arg24[%c0_442, %c0_443, %c0_444] : memref<1x10x16xf32, #tpu.memory_space<vmem>>, vector<1x10x16xf32>
    %449 = vector.shape_cast %448 : vector<1x10x16xf32> to vector<10x16xf32>
    %450 = vector.shape_cast %447 : vector<10x16xf32> to vector<1x10x16xf32>
    tpu.vector_store %arg24[%c0_442, %c0_443, %c0_444], %450 {strides = array<i32>} : memref<1x10x16xf32, #tpu.memory_space<vmem>>, vector<1x10x16xf32>,
    return
  }
  func.func @transform_0(%arg0: i32, %arg1: i32) -> (i32, i32, i32, i32) {
    %c0_i32 = arith.constant 0 : i32
    %c0_i32_0 = arith.constant 0 : i32
    %c0_i32_1 = arith.constant 0 : i32
    return %arg0, %arg1, %c0_i32, %c0_i32_0 : i32, i32, i32, i32
  }
  func.func @transform_1(%arg0: i32, %arg1: i32) -> (i32, i32) {
    %c0_i32 = arith.constant 0 : i32
    %c0_i32_0 = arith.constant 0 : i32
    %c0_i32_1 = arith.constant 0 : i32
    return %c0_i32, %c0_i32_0 : i32, i32
  }
  func.func @transform_2(%arg0: i32, %arg1: i32) -> (i32, i32) {
    %c0_i32 = arith.constant 0 : i32
    %c0_i32_0 = arith.constant 0 : i32
    %c0_i32_1 = arith.constant 0 : i32
    return %c0_i32, %c0_i32_0 : i32, i32
  }
  func.func @transform_3(%arg0: i32, %arg1: i32) -> (i32, i32) {
    %c0_i32 = arith.constant 0 : i32
    %c0_i32_0 = arith.constant 0 : i32
    %c0_i32_1 = arith.constant 0 : i32
    return %c0_i32, %c0_i32_0 : i32, i32
  }
  func.func @transform_4(%arg0: i32, %arg1: i32) -> (i32, i32) {
    %c0_i32 = arith.constant 0 : i32
    %c0_i32_0 = arith.constant 0 : i32
    %c0_i32_1 = arith.constant 0 : i32
    return %c0_i32, %c0_i32_0 : i32, i32
  }
  func.func @transform_5(%arg0: i32, %arg1: i32) -> (i32, i32) {
    %c0_i32 = arith.constant 0 : i32
    %c0_i32_0 = arith.constant 0 : i32
    %c0_i32_1 = arith.constant 0 : i32
    return %c0_i32, %c0_i32_0 : i32, i32
  }
  func.func @transform_6(%arg0: i32, %arg1: i32) -> (i32, i32) {
    %c0_i32 = arith.constant 0 : i32
    %c0_i32_0 = arith.constant 0 : i32
    %c0_i32_1 = arith.constant 0 : i32
    return %c0_i32, %c0_i32_0 : i32, i32
  }
  func.func @transform_7(%arg0: i32, %arg1: i32) -> (i32, i32) {
    %c0_i32 = arith.constant 0 : i32
    %c0_i32_0 = arith.constant 0 : i32
    %c0_i32_1 = arith.constant 0 : i32
    return %c0_i32, %c0_i32_0 : i32, i32
  }
  func.func @transform_8(%arg0: i32, %arg1: i32) -> (i32, i32) {
    %c0_i32 = arith.constant 0 : i32
    %c0_i32_0 = arith.constant 0 : i32
    %c0_i32_1 = arith.constant 0 : i32
    return %c0_i32, %c0_i32_0 : i32, i32
  }
  func.func @transform_9(%arg0: i32, %arg1: i32) -> (i32, i32) {
    %c0_i32 = arith.constant 0 : i32
    %c0_i32_0 = arith.constant 0 : i32
    %c0_i32_1 = arith.constant 0 : i32
    return %c0_i32, %c0_i32_0 : i32, i32
  }
  func.func @transform_10(%arg0: i32, %arg1: i32) -> (i32, i32) {
    %c0_i32 = arith.constant 0 : i32
    %c0_i32_0 = arith.constant 0 : i32
    %c0_i32_1 = arith.constant 0 : i32
    return %c0_i32, %c0_i32_0 : i32, i32
  }
  func.func @transform_11(%arg0: i32, %arg1: i32) -> (i32, i32) {
    %c0_i32 = arith.constant 0 : i32
    %c0_i32_0 = arith.constant 0 : i32
    %c0_i32_1 = arith.constant 0 : i32
    return %c0_i32, %c0_i32_0 : i32, i32
  }
  func.func @transform_12(%arg0: i32, %arg1: i32) -> (i32, i32) {
    %c0_i32 = arith.constant 0 : i32
    %c0_i32_0 = arith.constant 0 : i32
    %c0_i32_1 = arith.constant 0 : i32
    return %c0_i32, %c0_i32_0 : i32, i32
  }
  func.func @transform_13(%arg0: i32, %arg1: i32) -> (i32, i32) {
    %c0_i32 = arith.constant 0 : i32
    %c0_i32_0 = arith.constant 0 : i32
    %c0_i32_1 = arith.constant 0 : i32
    return %c0_i32, %c0_i32_0 : i32, i32
  }
  func.func @transform_14(%arg0: i32, %arg1: i32) -> (i32, i32) {
    %c0_i32 = arith.constant 0 : i32
    %c0_i32_0 = arith.constant 0 : i32
    %c0_i32_1 = arith.constant 0 : i32
    return %c0_i32, %c0_i32_0 : i32, i32
  }
  func.func @transform_15(%arg0: i32, %arg1: i32) -> (i32, i32) {
    %c0_i32 = arith.constant 0 : i32
    %c0_i32_0 = arith.constant 0 : i32
    %c0_i32_1 = arith.constant 0 : i32
    return %c0_i32, %c0_i32_0 : i32, i32
  }
  func.func @transform_16(%arg0: i32, %arg1: i32) -> (i32, i32) {
    %c0_i32 = arith.constant 0 : i32
    %c0_i32_0 = arith.constant 0 : i32
    %c0_i32_1 = arith.constant 0 : i32
    return %c0_i32, %c0_i32_0 : i32, i32
  }
  func.func @transform_17(%arg0: i32, %arg1: i32) -> (i32, i32) {
    %c0_i32 = arith.constant 0 : i32
    %c0_i32_0 = arith.constant 0 : i32
    %c0_i32_1 = arith.constant 0 : i32
    return %c0_i32, %c0_i32_0 : i32, i32
  }
  func.func @transform_18(%arg0: i32, %arg1: i32) -> (i32, i32) {
    %c0_i32 = arith.constant 0 : i32
    %c0_i32_0 = arith.constant 0 : i32
    %c0_i32_1 = arith.constant 0 : i32
    return %c0_i32, %c0_i32_0 : i32, i32
  }
  func.func @transform_19(%arg0: i32, %arg1: i32) -> (i32, i32) {
    %c0_i32 = arith.constant 0 : i32
    %c0_i32_0 = arith.constant 0 : i32
    %c0_i32_1 = arith.constant 0 : i32
    return %c0_i32, %c0_i32_0 : i32, i32
  }
  func.func @transform_20(%arg0: i32, %arg1: i32) -> (i32, i32) {
    %c0_i32 = arith.constant 0 : i32
    %c0_i32_0 = arith.constant 0 : i32
    %c0_i32_1 = arith.constant 0 : i32
    return %c0_i32, %c0_i32_0 : i32, i32
  }
  func.func @transform_21(%arg0: i32, %arg1: i32) -> (i32, i32) {
    %c0_i32 = arith.constant 0 : i32
    %c0_i32_0 = arith.constant 0 : i32
    %c0_i32_1 = arith.constant 0 : i32
    return %c0_i32, %c0_i32_0 : i32, i32
  }
  func.func @transform_22(%arg0: i32, %arg1: i32) -> (i32, i32, i32) {
    %c0_i32 = arith.constant 0 : i32
    %c0_i32_0 = arith.constant 0 : i32
    %c0_i32_1 = arith.constant 0 : i32
    return %arg0, %c0_i32, %c0_i32_0 : i32, i32, i32
  }
}

</mosaic_0001>

<llo_original>
// kernel: scnn_forward.1
$region0: #{scnn_forward.1}
  #allocation0 [shape = 'u32[]', space=smem, size = 0x4, offset = 0x4, fixed_abs, tag = 'smem constant byte address 0x4 - core index']
  #allocation1 [shape = 'u32[144,128]{1,0:T(1,128)}', space=vmem, size = 0x12000, scoped, tag = 'internal scratch']
  #allocation2 [shape = 'bf16[2,512]{1,0:T(2,128)(2,1)}', space=vmem, size = 0x800, scoped, tag = 'scratch operand']
  #allocation3 [shape = 'bf16[8,512]{1,0:T(8,128)(2,1)}', space=vmem, size = 0x2000, scoped, tag = 'scratch operand']
  #allocation4 [shape = 'f32[8,256]{1,0:T(8,128)}', space=vmem, size = 0x2000, scoped, tag = 'scratch operand']
  #allocation5 [shape = 'bf16[8,256]{1,0:T(8,128)(2,1)}', space=vmem, size = 0x1000, scoped, tag = 'scratch operand']
  #allocation6 [shape = 'f32[8,256]{1,0:T(8,128)}', space=vmem, size = 0x2000, scoped, tag = 'scratch operand']
  #allocation7 [shape = 'bf16[8,320]{1,0:T(8,128)(2,1)}', space=vmem, size = 0x1800, scoped, tag = 'scratch operand']
  #allocation8 [shape = 'bf16[16,64]{1,0:T(16,128)(2,1)}', space=vmem, size = 0x1000, scoped, tag = 'scratch operand']
  #allocation9 [shape = 'f32[16,64]{1,0:T(8,128)}', space=vmem, size = 0x2000, scoped, tag = 'scratch operand']
  #allocation10 [shape = 'bf16[16,272]{1,0:T(16,128)(2,1)}', space=vmem, size = 0x3000, scoped, tag = 'scratch operand']
  #allocation11 [shape = 'f32[16,16]{1,0:T(8,128)}', space=vmem, size = 0x2000, scoped, tag = 'scratch operand']
  #allocation12 [shape = 'bf16[16,272]{1,0:T(16,128)(2,1)}', space=vmem, size = 0x3000, scoped, tag = 'scratch operand']
  #allocation13 [shape = 'f32[16,16]{1,0:T(8,128)}', space=vmem, size = 0x2000, scoped, tag = 'scratch operand']
  #allocation14 [shape = 'bf16[16,272]{1,0:T(16,128)(2,1)}', space=vmem, size = 0x3000, scoped, tag = 'scratch operand']
  #allocation15 [shape = 'bf16[256,256]{1,0:T(16,128)(2,1)}', space=vmem, size = 0x20000, scoped, tag = 'scratch operand']
  #allocation16 [shape = 'f32[64,16]{1,0:T(8,128)}', space=vmem, size = 0x8000, scoped, tag = 'scratch operand']
  #allocation17 [shape = 'bf16[64,16]{1,0:T(16,128)(2,1)}', space=vmem, size = 0x4000, scoped, tag = 'scratch operand']
  #allocation18 [shape = 'f32[32,16]{1,0:T(8,128)}', space=vmem, size = 0x4000, scoped, tag = 'scratch operand']
  #allocation19 [shape = 'bf16[32,16]{1,0:T(16,128)(2,1)}', space=vmem, size = 0x2000, scoped, tag = 'scratch operand']
  #allocation20 [shape = 'f32[10,16]{1,0:T(8,128)}', space=vmem, size = 0x2000, scoped, tag = 'scratch operand']
  #allocation21 [shape = 'f32[10,16]{1,0:T(8,128)}', space=vmem, size = 0x2000, scoped, tag = 'scratch operand']
  %s0 = inlined_call_operand.vmem [shape: bf16[2,4,2,256], index: 0, kind: input, shape index: {}]
  %s1 = inlined_call_operand.vmem [shape: bf16[8,18], index: 1, kind: input, shape index: {}]
  %s2 = inlined_call_operand.vmem [shape: f32[8,1], index: 2, kind: input, shape index: {}]
  %s3 = inlined_call_operand.vmem [shape: bf16[8,72], index: 3, kind: input, shape index: {}]
  %s4 = inlined_call_operand.vmem [shape: f32[8,1], index: 4, kind: input, shape index: {}]
  %s5 = inlined_call_operand.vmem [shape: bf16[16,72], index: 5, kind: input, shape index: {}]
  %s6 = inlined_call_operand.vmem [shape: f32[16,1], index: 6, kind: input, shape index: {}]
  %s7 = inlined_call_operand.vmem [shape: bf16[16,144], index: 7, kind: input, shape index: {}]
  %s8 = inlined_call_operand.vmem [shape: f32[16,1], index: 8, kind: input, shape index: {}]
  %s9 = inlined_call_operand.vmem [shape: bf16[16,144], index: 9, kind: input, shape index: {}]
  %s10 = inlined_call_operand.vmem [shape: f32[16,1], index: 10, kind: input, shape index: {}]
  %s11 = inlined_call_operand.vmem [shape: bf16[9,256], index: 11, kind: input, shape index: {}]
  %s12 = inlined_call_operand.vmem [shape: bf16[9,64], index: 12, kind: input, shape index: {}]
  %s13 = inlined_call_operand.vmem [shape: bf16[9,16], index: 13, kind: input, shape index: {}]
  %s14 = inlined_call_operand.vmem [shape: bf16[256,64], index: 14, kind: input, shape index: {}]
  %s15 = inlined_call_operand.vmem [shape: bf16[64,16], index: 15, kind: input, shape index: {}]
  %s16 = inlined_call_operand.vmem [shape: bf16[64,256], index: 16, kind: input, shape index: {}]
  %s17 = inlined_call_operand.vmem [shape: f32[64,1], index: 17, kind: input, shape index: {}]
  %s18 = inlined_call_operand.vmem [shape: bf16[32,64], index: 18, kind: input, shape index: {}]
  %s19 = inlined_call_operand.vmem [shape: f32[32,1], index: 19, kind: input, shape index: {}]
  %s20 = inlined_call_operand.vmem [shape: bf16[10,32], index: 20, kind: input, shape index: {}]
  %s21 = inlined_call_operand.vmem [shape: f32[10,1], index: 21, kind: input, shape index: {}]
  %s22 = inlined_call_operand.vmem [shape: f32[2,10,16], index: 22, kind: output, shape index: {}]
  %s23 = sld [smem:[#allocation0]]
  $region125: #{scnn_forward.1} parent=0
    _
  %s25 = ssub.s32 1, %s23
  %s26 = scalar_select 0, %s25, %s23
  loop: start=0, step=1, limit=10
  $region2: #{scnn_forward.1} parent=0 // loop_pre_header
    _
  $region3: #{scnn_forward.1} parent=0 // loop_header
    %s28 = sphi 0, %s32
    %p29 = scmp.ge.s32.totalorder %s28, 10
    %s35 = sphi 0, %s47
    %s36 = sphi 0, %s43
    %s37 = sphi 0, %s35
    %s38 = sphi 0, %s36
    %s39 = sphi 0, %s37
    %s40 = sphi 0, %s38
    %s52 = sphi 0, %s54
    %s55 = sphi 0, %s52
    %s56 = sphi 0, %s55
    %s72 = sphi 0, %s56
    %s76 = sphi 0, %s76
    %s78 = sphi 0, %s76
    %s79 = sphi 0, %s78
    %s93 = sphi 0, %s79
    %s97 = sphi 0, %s97
    %s99 = sphi 0, %s97
    %s100 = sphi 0, %s99
    %s114 = sphi 0, %s100
    %s118 = sphi 0, %s118
    %s120 = sphi 0, %s118
    %s121 = sphi 0, %s120
    %s135 = sphi 0, %s121
    %s139 = sphi 0, %s139
    %s141 = sphi 0, %s139
    %s142 = sphi 0, %s141
    %s156 = sphi 0, %s142
    %s160 = sphi 0, %s160
    %s162 = sphi 0, %s160
    %s163 = sphi 0, %s162
    %s177 = sphi 0, %s163
    %s181 = sphi 0, %s181
    %s183 = sphi 0, %s181
    %s184 = sphi 0, %s183
    %s198 = sphi 0, %s184
    %s202 = sphi 0, %s202
    %s204 = sphi 0, %s202
    %s205 = sphi 0, %s204
    %s219 = sphi 0, %s205
    %s223 = sphi 0, %s223
    %s225 = sphi 0, %s223
    %s226 = sphi 0, %s225
    %s240 = sphi 0, %s226
    %s244 = sphi 0, %s244
    %s246 = sphi 0, %s244
    %s247 = sphi 0, %s246
    %s261 = sphi 0, %s247
    %s265 = sphi 0, %s265
    %s267 = sphi 0, %s265
    %s268 = sphi 0, %s267
    %s282 = sphi 0, %s268
    %s286 = sphi 0, %s286
    %s288 = sphi 0, %s286
    %s289 = sphi 0, %s288
    %s303 = sphi 0, %s289
    %s307 = sphi 0, %s307
    %s309 = sphi 0, %s307
    %s310 = sphi 0, %s309
    %s324 = sphi 0, %s310
    %s328 = sphi 0, %s328
    %s330 = sphi 0, %s328
    %s331 = sphi 0, %s330
    %s345 = sphi 0, %s331
    %s349 = sphi 0, %s349
    %s351 = sphi 0, %s349
    %s352 = sphi 0, %s351
    %s366 = sphi 0, %s352
    %s370 = sphi 0, %s370
    %s372 = sphi 0, %s370
    %s373 = sphi 0, %s372
    %s387 = sphi 0, %s373
    %s391 = sphi 0, %s391
    %s393 = sphi 0, %s391
    %s394 = sphi 0, %s393
    %s408 = sphi 0, %s394
    %s412 = sphi 0, %s412
    %s414 = sphi 0, %s412
    %s415 = sphi 0, %s414
    %s429 = sphi 0, %s415
    %s433 = sphi 0, %s433
    %s435 = sphi 0, %s433
    %s436 = sphi 0, %s435
    %s450 = sphi 0, %s436
    %s454 = sphi 0, %s454
    %s456 = sphi 0, %s454
    %s457 = sphi 0, %s456
    %s471 = sphi 0, %s457
    %s475 = sphi 0, %s475
    %s477 = sphi 0, %s475
    %s478 = sphi 0, %s477
    %s492 = sphi 0, %s478
    %s496 = sphi 0, %s496
    %s498 = sphi 0, %s496
    %s499 = sphi 0, %s498
    %s513 = sphi 0, %s499
    %s519 = sphi 0, %s521
    %s522 = sphi 0, %s519
    %s523 = sphi 0, %s522
    %s539 = sphi 0, %s523
  $region4: #{scnn_forward.1} parent=0 // loop_header_branch
    %31 = sbr.rel (%p29) target = $region8
  $region5: #{scnn_forward.1} parent=0 // loop_body
    %s33 = ssub.s32 %s28, 1
    %s34 = ssub.s32 %s28, 2
    %s41 = sadd.s32 1, %s36
    %p42 = scmp.ge.s32.totalorder %s41, 4
    %s43 = scalar_select %p42, 0, %s41
    %s44 = sadd.s32 1, %s35
    %s45 = scalar_select %p42, %s44, %s35
    %p46 = scmp.ge.s32.totalorder %s45, 2
    %s47 = scalar_select %p46, 0, %s45
    %s48 = ssub.s32 %s35, %s47
    %s49 = ssub.s32 %s36, %s43
    %s50 = sor.u32 %s48, %s49
    %p51 = scmp.eq.s32.totalorder %s50, 0
    %s53 = sadd.s32 %s52, 1
    %s54 = scalar_select %p51, %s52, %s53
    %p57 = pneg %p51
    %p58 = scmp.eq.s32.totalorder %s28, 7
    %p59 = por %p57, %p58
    %p60 = scmp.ne.s32.totalorder %s52, %s55
    %p61 = scmp.eq.s32.totalorder %s28, 0
    %p62 = por %p60, %p61
    %p63 = scmp.ne.s32.totalorder %s52, %s55
    %p64 = scmp.eq.s32.totalorder %s33, 7
    %p65 = por %p63, %p64
    %p66 = scmp.ne.s32.totalorder %s55, %s56
    %p67 = scmp.eq.s32.totalorder %s33, 0
    %p68 = por %p66, %p67
    %p69 = scmp.ne.s32.totalorder %s55, %s56
    %p70 = scmp.eq.s32.totalorder %s34, 7
    %p71 = por %p69, %p70
    %p73 = scmp.ne.s32.totalorder %s56, %s72
    %p74 = scmp.eq.s32.totalorder %s34, 0
    %p75 = por %p73, %p74
    %s77 = sadd.s32 %s76, 1
    %p80 = scmp.eq.s32.totalorder %s28, 7
    %p81 = scmp.ne.s32.totalorder %s76, %s78
    %p82 = scmp.eq.s32.totalorder %s28, 0
    %p83 = por %p81, %p82
    %p84 = scmp.ne.s32.totalorder %s76, %s78
    %p85 = scmp.eq.s32.totalorder %s33, 7
    %p86 = por %p84, %p85
    %p87 = scmp.ne.s32.totalorder %s78, %s79
    %p88 = scmp.eq.s32.totalorder %s33, 0
    %p89 = por %p87, %p88
    %p90 = scmp.ne.s32.totalorder %s78, %s79
    %p91 = scmp.eq.s32.totalorder %s34, 7
    %p92 = por %p90, %p91
    %p94 = scmp.ne.s32.totalorder %s79, %s93
    %p95 = scmp.eq.s32.totalorder %s34, 0
    %p96 = por %p94, %p95
    %s98 = sadd.s32 %s97, 1
    %p101 = scmp.eq.s32.totalorder %s28, 7
    %p102 = scmp.ne.s32.totalorder %s97, %s99
    %p103 = scmp.eq.s32.totalorder %s28, 0
    %p104 = por %p102, %p103
    %p105 = scmp.ne.s32.totalorder %s97, %s99
    %p106 = scmp.eq.s32.totalorder %s33, 7
    %p107 = por %p105, %p106
    %p108 = scmp.ne.s32.totalorder %s99, %s100
    %p109 = scmp.eq.s32.totalorder %s33, 0
    %p110 = por %p108, %p109
    %p111 = scmp.ne.s32.totalorder %s99, %s100
    %p112 = scmp.eq.s32.totalorder %s34, 7
    %p113 = por %p111, %p112
    %p115 = scmp.ne.s32.totalorder %s100, %s114
    %p116 = scmp.eq.s32.totalorder %s34, 0
    %p117 = por %p115, %p116
    %s119 = sadd.s32 %s118, 1
    %p122 = scmp.eq.s32.totalorder %s28, 7
    %p123 = scmp.ne.s32.totalorder %s118, %s120
    %p124 = scmp.eq.s32.totalorder %s28, 0
    %p125 = por %p123, %p124
    %p126 = scmp.ne.s32.totalorder %s118, %s120
    %p127 = scmp.eq.s32.totalorder %s33, 7
    %p128 = por %p126, %p127
    %p129 = scmp.ne.s32.totalorder %s120, %s121
    %p130 = scmp.eq.s32.totalorder %s33, 0
    %p131 = por %p129, %p130
    %p132 = scmp.ne.s32.totalorder %s120, %s121
    %p133 = scmp.eq.s32.totalorder %s34, 7
    %p134 = por %p132, %p133
    %p136 = scmp.ne.s32.totalorder %s121, %s135
    %p137 = scmp.eq.s32.totalorder %s34, 0
    %p138 = por %p136, %p137
    %s140 = sadd.s32 %s139, 1
    %p143 = scmp.eq.s32.totalorder %s28, 7
    %p144 = scmp.ne.s32.totalorder %s139, %s141
    %p145 = scmp.eq.s32.totalorder %s28, 0
    %p146 = por %p144, %p145
    %p147 = scmp.ne.s32.totalorder %s139, %s141
    %p148 = scmp.eq.s32.totalorder %s33, 7
    %p149 = por %p147, %p148
    %p150 = scmp.ne.s32.totalorder %s141, %s142
    %p151 = scmp.eq.s32.totalorder %s33, 0
    %p152 = por %p150, %p151
    %p153 = scmp.ne.s32.totalorder %s141, %s142
    %p154 = scmp.eq.s32.totalorder %s34, 7
    %p155 = por %p153, %p154
    %p157 = scmp.ne.s32.totalorder %s142, %s156
    %p158 = scmp.eq.s32.totalorder %s34, 0
    %p159 = por %p157, %p158
    %s161 = sadd.s32 %s160, 1
    %p164 = scmp.eq.s32.totalorder %s28, 7
    %p165 = scmp.ne.s32.totalorder %s160, %s162
    %p166 = scmp.eq.s32.totalorder %s28, 0
    %p167 = por %p165, %p166
    %p168 = scmp.ne.s32.totalorder %s160, %s162
    %p169 = scmp.eq.s32.totalorder %s33, 7
    %p170 = por %p168, %p169
    %p171 = scmp.ne.s32.totalorder %s162, %s163
    %p172 = scmp.eq.s32.totalorder %s33, 0
    %p173 = por %p171, %p172
    %p174 = scmp.ne.s32.totalorder %s162, %s163
    %p175 = scmp.eq.s32.totalorder %s34, 7
    %p176 = por %p174, %p175
    %p178 = scmp.ne.s32.totalorder %s163, %s177
    %p179 = scmp.eq.s32.totalorder %s34, 0
    %p180 = por %p178, %p179
    %s182 = sadd.s32 %s181, 1
    %p185 = scmp.eq.s32.totalorder %s28, 7
    %p186 = scmp.ne.s32.totalorder %s181, %s183
    %p187 = scmp.eq.s32.totalorder %s28, 0
    %p188 = por %p186, %p187
    %p189 = scmp.ne.s32.totalorder %s181, %s183
    %p190 = scmp.eq.s32.totalorder %s33, 7
    %p191 = por %p189, %p190
    %p192 = scmp.ne.s32.totalorder %s183, %s184
    %p193 = scmp.eq.s32.totalorder %s33, 0
    %p194 = por %p192, %p193
    %p195 = scmp.ne.s32.totalorder %s183, %s184
    %p196 = scmp.eq.s32.totalorder %s34, 7
    %p197 = por %p195, %p196
    %p199 = scmp.ne.s32.totalorder %s184, %s198
    %p200 = scmp.eq.s32.totalorder %s34, 0
    %p201 = por %p199, %p200
    %s203 = sadd.s32 %s202, 1
    %p206 = scmp.eq.s32.totalorder %s28, 7
    %p207 = scmp.ne.s32.totalorder %s202, %s204
    %p208 = scmp.eq.s32.totalorder %s28, 0
    %p209 = por %p207, %p208
    %p210 = scmp.ne.s32.totalorder %s202, %s204
    %p211 = scmp.eq.s32.totalorder %s33, 7
    %p212 = por %p210, %p211
    %p213 = scmp.ne.s32.totalorder %s204, %s205
    %p214 = scmp.eq.s32.totalorder %s33, 0
    %p215 = por %p213, %p214
    %p216 = scmp.ne.s32.totalorder %s204, %s205
    %p217 = scmp.eq.s32.totalorder %s34, 7
    %p218 = por %p216, %p217
    %p220 = scmp.ne.s32.totalorder %s205, %s219
    %p221 = scmp.eq.s32.totalorder %s34, 0
    %p222 = por %p220, %p221
    %s224 = sadd.s32 %s223, 1
    %p227 = scmp.eq.s32.totalorder %s28, 7
    %p228 = scmp.ne.s32.totalorder %s223, %s225
    %p229 = scmp.eq.s32.totalorder %s28, 0
    %p230 = por %p228, %p229
    %p231 = scmp.ne.s32.totalorder %s223, %s225
    %p232 = scmp.eq.s32.totalorder %s33, 7
    %p233 = por %p231, %p232
    %p234 = scmp.ne.s32.totalorder %s225, %s226
    %p235 = scmp.eq.s32.totalorder %s33, 0
    %p236 = por %p234, %p235
    %p237 = scmp.ne.s32.totalorder %s225, %s226
    %p238 = scmp.eq.s32.totalorder %s34, 7
    %p239 = por %p237, %p238
    %p241 = scmp.ne.s32.totalorder %s226, %s240
    %p242 = scmp.eq.s32.totalorder %s34, 0
    %p243 = por %p241, %p242
    %s245 = sadd.s32 %s244, 1
    %p248 = scmp.eq.s32.totalorder %s28, 7
    %p249 = scmp.ne.s32.totalorder %s244, %s246
    %p250 = scmp.eq.s32.totalorder %s28, 0
    %p251 = por %p249, %p250
    %p252 = scmp.ne.s32.totalorder %s244, %s246
    %p253 = scmp.eq.s32.totalorder %s33, 7
    %p254 = por %p252, %p253
    %p255 = scmp.ne.s32.totalorder %s246, %s247
    %p256 = scmp.eq.s32.totalorder %s33, 0
    %p257 = por %p255, %p256
    %p258 = scmp.ne.s32.totalorder %s246, %s247
    %p259 = scmp.eq.s32.totalorder %s34, 7
    %p260 = por %p258, %p259
    %p262 = scmp.ne.s32.totalorder %s247, %s261
    %p263 = scmp.eq.s32.totalorder %s34, 0
    %p264 = por %p262, %p263
    %s266 = sadd.s32 %s265, 1
    %p269 = scmp.eq.s32.totalorder %s28, 7
    %p270 = scmp.ne.s32.totalorder %s265, %s267
    %p271 = scmp.eq.s32.totalorder %s28, 0
    %p272 = por %p270, %p271
    %p273 = scmp.ne.s32.totalorder %s265, %s267
    %p274 = scmp.eq.s32.totalorder %s33, 7
    %p275 = por %p273, %p274
    %p276 = scmp.ne.s32.totalorder %s267, %s268
    %p277 = scmp.eq.s32.totalorder %s33, 0
    %p278 = por %p276, %p277
    %p279 = scmp.ne.s32.totalorder %s267, %s268
    %p280 = scmp.eq.s32.totalorder %s34, 7
    %p281 = por %p279, %p280
    %p283 = scmp.ne.s32.totalorder %s268, %s282
    %p284 = scmp.eq.s32.totalorder %s34, 0
    %p285 = por %p283, %p284
    %s287 = sadd.s32 %s286, 1
    %p290 = scmp.eq.s32.totalorder %s28, 7
    %p291 = scmp.ne.s32.totalorder %s286, %s288
    %p292 = scmp.eq.s32.totalorder %s28, 0
    %p293 = por %p291, %p292
    %p294 = scmp.ne.s32.totalorder %s286, %s288
    %p295 = scmp.eq.s32.totalorder %s33, 7
    %p296 = por %p294, %p295
    %p297 = scmp.ne.s32.totalorder %s288, %s289
    %p298 = scmp.eq.s32.totalorder %s33, 0
    %p299 = por %p297, %p298
    %p300 = scmp.ne.s32.totalorder %s288, %s289
    %p301 = scmp.eq.s32.totalorder %s34, 7
    %p302 = por %p300, %p301
    %p304 = scmp.ne.s32.totalorder %s289, %s303
    %p305 = scmp.eq.s32.totalorder %s34, 0
    %p306 = por %p304, %p305
    %s308 = sadd.s32 %s307, 1
    %p311 = scmp.eq.s32.totalorder %s28, 7
    %p312 = scmp.ne.s32.totalorder %s307, %s309
    %p313 = scmp.eq.s32.totalorder %s28, 0
    %p314 = por %p312, %p313
    %p315 = scmp.ne.s32.totalorder %s307, %s309
    %p316 = scmp.eq.s32.totalorder %s33, 7
    %p317 = por %p315, %p316
    %p318 = scmp.ne.s32.totalorder %s309, %s310
    %p319 = scmp.eq.s32.totalorder %s33, 0
    %p320 = por %p318, %p319
    %p321 = scmp.ne.s32.totalorder %s309, %s310
    %p322 = scmp.eq.s32.totalorder %s34, 7
    %p323 = por %p321, %p322
    %p325 = scmp.ne.s32.totalorder %s310, %s324
    %p326 = scmp.eq.s32.totalorder %s34, 0
    %p327 = por %p325, %p326
    %s329 = sadd.s32 %s328, 1
    %p332 = scmp.eq.s32.totalorder %s28, 7
    %p333 = scmp.ne.s32.totalorder %s328, %s330
    %p334 = scmp.eq.s32.totalorder %s28, 0
    %p335 = por %p333, %p334
    %p336 = scmp.ne.s32.totalorder %s328, %s330
    %p337 = scmp.eq.s32.totalorder %s33, 7
    %p338 = por %p336, %p337
    %p339 = scmp.ne.s32.totalorder %s330, %s331
    %p340 = scmp.eq.s32.totalorder %s33, 0
    %p341 = por %p339, %p340
    %p342 = scmp.ne.s32.totalorder %s330, %s331
    %p343 = scmp.eq.s32.totalorder %s34, 7
    %p344 = por %p342, %p343
    %p346 = scmp.ne.s32.totalorder %s331, %s345
    %p347 = scmp.eq.s32.totalorder %s34, 0
    %p348 = por %p346, %p347
    %s350 = sadd.s32 %s349, 1
    %p353 = scmp.eq.s32.totalorder %s28, 7
    %p354 = scmp.ne.s32.totalorder %s349, %s351
    %p355 = scmp.eq.s32.totalorder %s28, 0
    %p356 = por %p354, %p355
    %p357 = scmp.ne.s32.totalorder %s349, %s351
    %p358 = scmp.eq.s32.totalorder %s33, 7
    %p359 = por %p357, %p358
    %p360 = scmp.ne.s32.totalorder %s351, %s352
    %p361 = scmp.eq.s32.totalorder %s33, 0
    %p362 = por %p360, %p361
    %p363 = scmp.ne.s32.totalorder %s351, %s352
    %p364 = scmp.eq.s32.totalorder %s34, 7
    %p365 = por %p363, %p364
    %p367 = scmp.ne.s32.totalorder %s352, %s366
    %p368 = scmp.eq.s32.totalorder %s34, 0
    %p369 = por %p367, %p368
    %s371 = sadd.s32 %s370, 1
    %p374 = scmp.eq.s32.totalorder %s28, 7
    %p375 = scmp.ne.s32.totalorder %s370, %s372
    %p376 = scmp.eq.s32.totalorder %s28, 0
    %p377 = por %p375, %p376
    %p378 = scmp.ne.s32.totalorder %s370, %s372
    %p379 = scmp.eq.s32.totalorder %s33, 7
    %p380 = por %p378, %p379
    %p381 = scmp.ne.s32.totalorder %s372, %s373
    %p382 = scmp.eq.s32.totalorder %s33, 0
    %p383 = por %p381, %p382
    %p384 = scmp.ne.s32.totalorder %s372, %s373
    %p385 = scmp.eq.s32.totalorder %s34, 7
    %p386 = por %p384, %p385
    %p388 = scmp.ne.s32.totalorder %s373, %s387
    %p389 = scmp.eq.s32.totalorder %s34, 0
    %p390 = por %p388, %p389
    %s392 = sadd.s32 %s391, 1
    %p395 = scmp.eq.s32.totalorder %s28, 7
    %p396 = scmp.ne.s32.totalorder %s391, %s393
    %p397 = scmp.eq.s32.totalorder %s28, 0
    %p398 = por %p396, %p397
    %p399 = scmp.ne.s32.totalorder %s391, %s393
    %p400 = scmp.eq.s32.totalorder %s33, 7
    %p401 = por %p399, %p400
    %p402 = scmp.ne.s32.totalorder %s393, %s394
    %p403 = scmp.eq.s32.totalorder %s33, 0
    %p404 = por %p402, %p403
    %p405 = scmp.ne.s32.totalorder %s393, %s394
    %p406 = scmp.eq.s32.totalorder %s34, 7
    %p407 = por %p405, %p406
    %p409 = scmp.ne.s32.totalorder %s394, %s408
    %p410 = scmp.eq.s32.totalorder %s34, 0
    %p411 = por %p409, %p410
    %s413 = sadd.s32 %s412, 1
    %p416 = scmp.eq.s32.totalorder %s28, 7
    %p417 = scmp.ne.s32.totalorder %s412, %s414
    %p418 = scmp.eq.s32.totalorder %s28, 0
    %p419 = por %p417, %p418
    %p420 = scmp.ne.s32.totalorder %s412, %s414
    %p421 = scmp.eq.s32.totalorder %s33, 7
    %p422 = por %p420, %p421
    %p423 = scmp.ne.s32.totalorder %s414, %s415
    %p424 = scmp.eq.s32.totalorder %s33, 0
    %p425 = por %p423, %p424
    %p426 = scmp.ne.s32.totalorder %s414, %s415
    %p427 = scmp.eq.s32.totalorder %s34, 7
    %p428 = por %p426, %p427
    %p430 = scmp.ne.s32.totalorder %s415, %s429
    %p431 = scmp.eq.s32.totalorder %s34, 0
    %p432 = por %p430, %p431
    %s434 = sadd.s32 %s433, 1
    %p437 = scmp.eq.s32.totalorder %s28, 7
    %p438 = scmp.ne.s32.totalorder %s433, %s435
    %p439 = scmp.eq.s32.totalorder %s28, 0
    %p440 = por %p438, %p439
    %p441 = scmp.ne.s32.totalorder %s433, %s435
    %p442 = scmp.eq.s32.totalorder %s33, 7
    %p443 = por %p441, %p442
    %p444 = scmp.ne.s32.totalorder %s435, %s436
    %p445 = scmp.eq.s32.totalorder %s33, 0
    %p446 = por %p444, %p445
    %p447 = scmp.ne.s32.totalorder %s435, %s436
    %p448 = scmp.eq.s32.totalorder %s34, 7
    %p449 = por %p447, %p448
    %p451 = scmp.ne.s32.totalorder %s436, %s450
    %p452 = scmp.eq.s32.totalorder %s34, 0
    %p453 = por %p451, %p452
    %s455 = sadd.s32 %s454, 1
    %p458 = scmp.eq.s32.totalorder %s28, 7
    %p459 = scmp.ne.s32.totalorder %s454, %s456
    %p460 = scmp.eq.s32.totalorder %s28, 0
    %p461 = por %p459, %p460
    %p462 = scmp.ne.s32.totalorder %s454, %s456
    %p463 = scmp.eq.s32.totalorder %s33, 7
    %p464 = por %p462, %p463
    %p465 = scmp.ne.s32.totalorder %s456, %s457
    %p466 = scmp.eq.s32.totalorder %s33, 0
    %p467 = por %p465, %p466
    %p468 = scmp.ne.s32.totalorder %s456, %s457
    %p469 = scmp.eq.s32.totalorder %s34, 7
    %p470 = por %p468, %p469
    %p472 = scmp.ne.s32.totalorder %s457, %s471
    %p473 = scmp.eq.s32.totalorder %s34, 0
    %p474 = por %p472, %p473
    %s476 = sadd.s32 %s475, 1
    %p479 = scmp.eq.s32.totalorder %s28, 7
    %p480 = scmp.ne.s32.totalorder %s475, %s477
    %p481 = scmp.eq.s32.totalorder %s28, 0
    %p482 = por %p480, %p481
    %p483 = scmp.ne.s32.totalorder %s475, %s477
    %p484 = scmp.eq.s32.totalorder %s33, 7
    %p485 = por %p483, %p484
    %p486 = scmp.ne.s32.totalorder %s477, %s478
    %p487 = scmp.eq.s32.totalorder %s33, 0
    %p488 = por %p486, %p487
    %p489 = scmp.ne.s32.totalorder %s477, %s478
    %p490 = scmp.eq.s32.totalorder %s34, 7
    %p491 = por %p489, %p490
    %p493 = scmp.ne.s32.totalorder %s478, %s492
    %p494 = scmp.eq.s32.totalorder %s34, 0
    %p495 = por %p493, %p494
    %s497 = sadd.s32 %s496, 1
    %p500 = scmp.eq.s32.totalorder %s28, 7
    %p501 = scmp.ne.s32.totalorder %s496, %s498
    %p502 = scmp.eq.s32.totalorder %s28, 0
    %p503 = por %p501, %p502
    %p504 = scmp.ne.s32.totalorder %s496, %s498
    %p505 = scmp.eq.s32.totalorder %s33, 7
    %p506 = por %p504, %p505
    %p507 = scmp.ne.s32.totalorder %s498, %s499
    %p508 = scmp.eq.s32.totalorder %s33, 0
    %p509 = por %p507, %p508
    %p510 = scmp.ne.s32.totalorder %s498, %s499
    %p511 = scmp.eq.s32.totalorder %s34, 7
    %p512 = por %p510, %p511
    %p514 = scmp.ne.s32.totalorder %s499, %s513
    %p515 = scmp.eq.s32.totalorder %s34, 0
    %p516 = por %p514, %p515
    %s517 = ssub.s32 %s35, %s47
    %p518 = scmp.eq.s32.totalorder %s517, 0
    %s520 = sadd.s32 %s519, 1
    %s521 = scalar_select %p518, %s519, %s520
    %p524 = pneg %p518
    %p525 = scmp.eq.s32.totalorder %s28, 7
    %p526 = por %p524, %p525
    %p527 = scmp.ne.s32.totalorder %s519, %s522
    %p528 = scmp.eq.s32.totalorder %s28, 0
    %p529 = por %p527, %p528
    %p530 = scmp.ne.s32.totalorder %s519, %s522
    %p531 = scmp.eq.s32.totalorder %s33, 7
    %p532 = por %p530, %p531
    %p533 = scmp.ne.s32.totalorder %s522, %s523
    %p534 = scmp.eq.s32.totalorder %s33, 0
    %p535 = por %p533, %p534
    %p536 = scmp.ne.s32.totalorder %s522, %s523
    %p537 = scmp.eq.s32.totalorder %s34, 7
    %p538 = por %p536, %p537
    %p540 = scmp.ne.s32.totalorder %s523, %s539
    %p541 = scmp.eq.s32.totalorder %s34, 0
    %p542 = por %p540, %p541
    %p543 = scmp.le.s32.totalorder 1, %s28
    %p544 = scmp.lt.s32.totalorder %s28, 9
    %p545 = pnand %p543, %p544
    %p546 = pneg %p545
    // Predicated region
    $region9: #{scnn_forward.1} parent=5 // pred_check
      _
    $region10: #{scnn_forward.1} parent=5 // pred_check_branch
      %548 = sbr.rel (%p545) target = $region12
    $region11: #{scnn_forward.1} parent=5 // pred_region
      %s549 = ssub.s32 %s28, 1
      // Predicated region
      $region13: #{scnn_forward.1} parent=11 // pred_check
        %p550 = pneg %p89
      $region14: #{scnn_forward.1} parent=11 // pred_check_branch
        %552 = sbr.rel (%p550) target = $region16
      $region15: #{scnn_forward.1} parent=11 // pred_region
        _
      $region16: #{scnn_forward.1} parent=11 // pred_fallthru
        _
      // Predicated region
      $region17: #{scnn_forward.1} parent=11 // pred_check
        %p553 = pneg %p110
      $region18: #{scnn_forward.1} parent=11 // pred_check_branch
        %555 = sbr.rel (%p553) target = $region20
      $region19: #{scnn_forward.1} parent=11 // pred_region
        _
      $region20: #{scnn_forward.1} parent=11 // pred_fallthru
        _
      // Predicated region
      $region21: #{scnn_forward.1} parent=11 // pred_check
        %p556 = pneg %p131
      $region22: #{scnn_forward.1} parent=11 // pred_check_branch
        %558 = sbr.rel (%p556) target = $region24
      $region23: #{scnn_forward.1} parent=11 // pred_region
        _
      $region24: #{scnn_forward.1} parent=11 // pred_fallthru
        _
      // Predicated region
      $region25: #{scnn_forward.1} parent=11 // pred_check
        %p559 = pneg %p152
      $region26: #{scnn_forward.1} parent=11 // pred_check_branch
        %561 = sbr.rel (%p559) target = $region28
      $region27: #{scnn_forward.1} parent=11 // pred_region
        _
      $region28: #{scnn_forward.1} parent=11 // pred_fallthru
        _
      // Predicated region
      $region29: #{scnn_forward.1} parent=11 // pred_check
        %p562 = pneg %p173
      $region30: #{scnn_forward.1} parent=11 // pred_check_branch
        %564 = sbr.rel (%p562) target = $region32
      $region31: #{scnn_forward.1} parent=11 // pred_region
        _
      $region32: #{scnn_forward.1} parent=11 // pred_fallthru
        _
      // Predicated region
      $region33: #{scnn_forward.1} parent=11 // pred_check
        %p565 = pneg %p194
      $region34: #{scnn_forward.1} parent=11 // pred_check_branch
        %567 = sbr.rel (%p565) target = $region36
      $region35: #{scnn_forward.1} parent=11 // pred_region
        _
      $region36: #{scnn_forward.1} parent=11 // pred_fallthru
        _
      // Predicated region
      $region37: #{scnn_forward.1} parent=11 // pred_check
        %p568 = pneg %p215
      $region38: #{scnn_forward.1} parent=11 // pred_check_branch
        %570 = sbr.rel (%p568) target = $region40
      $region39: #{scnn_forward.1} parent=11 // pred_region
        _
      $region40: #{scnn_forward.1} parent=11 // pred_fallthru
        _
      // Predicated region
      $region41: #{scnn_forward.1} parent=11 // pred_check
        %p571 = pneg %p236
      $region42: #{scnn_forward.1} parent=11 // pred_check_branch
        %573 = sbr.rel (%p571) target = $region44
      $region43: #{scnn_forward.1} parent=11 // pred_region
        _
      $region44: #{scnn_forward.1} parent=11 // pred_fallthru
        _
      // Predicated region
      $region45: #{scnn_forward.1} parent=11 // pred_check
        %p574 = pneg %p257
      $region46: #{scnn_forward.1} parent=11 // pred_check_branch
        %576 = sbr.rel (%p574) target = $region48
      $region47: #{scnn_forward.1} parent=11 // pred_region
        _
      $region48: #{scnn_forward.1} parent=11 // pred_fallthru
        _
      // Predicated region
      $region49: #{scnn_forward.1} parent=11 // pred_check
        %p577 = pneg %p278
      $region50: #{scnn_forward.1} parent=11 // pred_check_branch
        %579 = sbr.rel (%p577) target = $region52
      $region51: #{scnn_forward.1} parent=11 // pred_region
        _
      $region52: #{scnn_forward.1} parent=11 // pred_fallthru
        _
      // Predicated region
      $region53: #{scnn_forward.1} parent=11 // pred_check
        %p580 = pneg %p299
      $region54: #{scnn_forward.1} parent=11 // pred_check_branch
        %582 = sbr.rel (%p580) target = $region56
      $region55: #{scnn_forward.1} parent=11 // pred_region
        _
      $region56: #{scnn_forward.1} parent=11 // pred_fallthru
        _
      // Predicated region
      $region57: #{scnn_forward.1} parent=11 // pred_check
        %p583 = pneg %p320
      $region58: #{scnn_forward.1} parent=11 // pred_check_branch
        %585 = sbr.rel (%p583) target = $region60
      $region59: #{scnn_forward.1} parent=11 // pred_region
        _
      $region60: #{scnn_forward.1} parent=11 // pred_fallthru
        _
      // Predicated region
      $region61: #{scnn_forward.1} parent=11 // pred_check
        %p586 = pneg %p341
      $region62: #{scnn_forward.1} parent=11 // pred_check_branch
        %588 = sbr.rel (%p586) target = $region64
      $region63: #{scnn_forward.1} parent=11 // pred_region
        _
      $region64: #{scnn_forward.1} parent=11 // pred_fallthru
        _
      // Predicated region
      $region65: #{scnn_forward.1} parent=11 // pred_check
        %p589 = pneg %p362
      $region66: #{scnn_forward.1} parent=11 // pred_check_branch
        %591 = sbr.rel (%p589) target = $region68
      $region67: #{scnn_forward.1} parent=11 // pred_region
        _
      $region68: #{scnn_forward.1} parent=11 // pred_fallthru
        _
      // Predicated region
      $region69: #{scnn_forward.1} parent=11 // pred_check
        %p592 = pneg %p383
      $region70: #{scnn_forward.1} parent=11 // pred_check_branch
        %594 = sbr.rel (%p592) target = $region72
      $region71: #{scnn_forward.1} parent=11 // pred_region
        _
      $region72: #{scnn_forward.1} parent=11 // pred_fallthru
        _
      // Predicated region
      $region73: #{scnn_forward.1} parent=11 // pred_check
        %p595 = pneg %p404
      $region74: #{scnn_forward.1} parent=11 // pred_check_branch
        %597 = sbr.rel (%p595) target = $region76
      $region75: #{scnn_forward.1} parent=11 // pred_region
        _
      $region76: #{scnn_forward.1} parent=11 // pred_fallthru
        _
      // Predicated region
      $region77: #{scnn_forward.1} parent=11 // pred_check
        %p598 = pneg %p425
      $region78: #{scnn_forward.1} parent=11 // pred_check_branch
        %600 = sbr.rel (%p598) target = $region80
      $region79: #{scnn_forward.1} parent=11 // pred_region
        _
      $region80: #{scnn_forward.1} parent=11 // pred_fallthru
        _
      // Predicated region
      $region81: #{scnn_forward.1} parent=11 // pred_check
        %p601 = pneg %p446
      $region82: #{scnn_forward.1} parent=11 // pred_check_branch
        %603 = sbr.rel (%p601) target = $region84
      $region83: #{scnn_forward.1} parent=11 // pred_region
        _
      $region84: #{scnn_forward.1} parent=11 // pred_fallthru
        _
      // Predicated region
      $region85: #{scnn_forward.1} parent=11 // pred_check
        %p604 = pneg %p467
      $region86: #{scnn_forward.1} parent=11 // pred_check_branch
        %606 = sbr.rel (%p604) target = $region88
      $region87: #{scnn_forward.1} parent=11 // pred_region
        _
      $region88: #{scnn_forward.1} parent=11 // pred_fallthru
        _
      // Predicated region
      $region89: #{scnn_forward.1} parent=11 // pred_check
        %p607 = pneg %p488
      $region90: #{scnn_forward.1} parent=11 // pred_check_branch
        %609 = sbr.rel (%p607) target = $region92
      $region91: #{scnn_forward.1} parent=11 // pred_region
        _
      $region92: #{scnn_forward.1} parent=11 // pred_fallthru
        _
      // Predicated region
      $region93: #{scnn_forward.1} parent=11 // pred_check
        %p610 = pneg %p509
      $region94: #{scnn_forward.1} parent=11 // pred_check_branch
        %612 = sbr.rel (%p610) target = $region96
      $region95: #{scnn_forward.1} parent=11 // pred_region
        _
      $region96: #{scnn_forward.1} parent=11 // pred_fallthru
        _
    $region12: #{scnn_forward.1} parent=5 // pred_fallthru
      _
    %p613 = scmp.lt.s32.totalorder %s28, 8
    // Predicated region
    $region97: #{scnn_forward.1} parent=5 // pred_check
      %p614 = pneg %p613
    $region98: #{scnn_forward.1} parent=5 // pred_check_branch
      %616 = sbr.rel (%p614) target = $region100
    $region99: #{scnn_forward.1} parent=5 // pred_region
      // Predicated region
      $region101: #{scnn_forward.1} parent=99 // pred_check
        %p617 = pneg %p62
      $region102: #{scnn_forward.1} parent=99 // pred_check_branch
        %619 = sbr.rel (%p617) target = $region104
      $region103: #{scnn_forward.1} parent=99 // pred_region
        %p620 = scmp.lt.s32.totalorder %s35, 1
        %s621 = scalar_select %p620, %s35, 1
        %p622 = scmp.lt.s32.totalorder %s36, 3
        %s623 = scalar_select %p622, %s36, 3
        %s624 = smul.addr %s623, 2
        %s625 = smul.addr %s621, 8
        %s626 = sadd.s32 %s624, %s625
        %s627 = scalar_lea.vmem %s0, %s626
      $region104: #{scnn_forward.1} parent=99 // pred_fallthru
        _
    $region100: #{scnn_forward.1} parent=5 // pred_fallthru
      _
    %p628 = scmp.le.s32.totalorder 1, %s28
    %p629 = scmp.lt.s32.totalorder %s28, 9
    %p630 = pnand %p628, %p629
    %p631 = pneg %p630
    // Predicated region
    $region105: #{scnn_forward.1} parent=5 // pred_check
      _
    $region106: #{scnn_forward.1} parent=5 // pred_check_branch
      %633 = sbr.rel (%p630) target = $region108
    $region107: #{scnn_forward.1} parent=5 // pred_region
      %s634 = ssub.s32 %s28, 1
      %p635 = scmp.lt.s32.totalorder %s37, 1
      %s636 = scalar_select %p635, %s37, 1
      %p637 = scmp.lt.s32.totalorder %s38, 3
      %s638 = scalar_select %p637, %s38, 3
      %s639 = smul.addr %s638, 2
      %s640 = smul.addr %s636, 8
      %s641 = sadd.s32 %s639, %s640
      %s642 = scalar_lea.vmem %s0, %s641
      %p643 = pneg %p68
      %p644 = pneg %p65
      %p645 = pneg %p89
      %p646 = pneg %p86
      %p647 = pneg %p110
      %p648 = pneg %p107
      %p649 = pneg %p131
      %p650 = pneg %p128
      %p651 = pneg %p152
      %p652 = pneg %p149
      %p653 = pneg %p173
      %p654 = pneg %p170
      %p655 = pneg %p194
      %p656 = pneg %p191
      %p657 = pneg %p215
      %p658 = pneg %p212
      %p659 = pneg %p236
      %p660 = pneg %p233
      %p661 = pneg %p257
      %p662 = pneg %p254
      %p663 = pneg %p278
      %p664 = pneg %p275
      %p665 = pneg %p299
      %p666 = pneg %p296
      %p667 = pneg %p320
      %p668 = pneg %p317
      %p669 = pneg %p341
      %p670 = pneg %p338
      %p671 = pneg %p362
      %p672 = pneg %p359
      %p673 = pneg %p383
      %p674 = pneg %p380
      %p675 = pneg %p404
      %p676 = pneg %p401
      %p677 = pneg %p425
      %p678 = pneg %p422
      %p679 = pneg %p446
      %p680 = pneg %p443
      %p681 = pneg %p467
      %p682 = pneg %p464
      %p683 = pneg %p488
      %p684 = pneg %p485
      %p685 = pneg %p509
      %p686 = pneg %p506
      %p687 = pneg %p535
      %p688 = pneg %p532
      %p689 = scmp.lt.s32.totalorder %s37, 1
      %s690 = scalar_select %p689, %s37, 1
      %s691 = smul.addr %s690, 2
      %s692 = smul.addr %s691, 8
      %s693 = scalar_lea.vmem %s22, %s692
      %p694 = scmp.lt.s32.totalorder %s37, 1
      %s695 = scalar_select %p694, %s37, 1
      %p696 = scmp.lt.s32.totalorder %s38, 3
      %s697 = scalar_select %p696, %s38, 3
      %s698 = smul.addr %s697, 2
      %s699 = smul.addr %s695, 8
      %s700 = sadd.s32 %s698, %s699
      %s701 = scalar_lea.vmem %s0, %s700
      %p702 = scmp.lt.s32.totalorder %s37, 1
      %s703 = scalar_select %p702, %s37, 1
      %s704 = smul.addr %s703, 2
      %s705 = smul.addr %s704, 8
      %s706 = scalar_lea.vmem %s22, %s705
      %p708 = scmp.eq.s32.totalorder %s38, 0
      // Predicated region
      $region109: #{scnn_forward.1} parent=107 // pred_check
        %p709 = pneg %p708
      $region110: #{scnn_forward.1} parent=107 // pred_check_branch
        %711 = sbr.rel (%p709) target = $region112
      $region111: #{scnn_forward.1} parent=107 // pred_region
        %712 = vst [vmem:[#allocation2] sm:$0xf] 0
        %713 = vst [vmem:[#allocation3] sm:$0xff] 0
        %714 = vst [vmem:[#allocation3 + $0x8] sm:$0xff] 0
        %715 = vst [vmem:[#allocation5] sm:$0xff] 0
        %716 = vst [vmem:[#allocation7] sm:$0xff] 0
        %vm717 = vcmask 519168
        %718 = vst.msk [vmem:[#allocation7 + $0x8] sm:$0xf] %vm717, 0
        %vm719 = vcmask 523264
        %720 = vst.msk [vmem:[#allocation8] sm:$0xff] %vm719, 0
        %721 = vst [vmem:[#allocation10] sm:$0xff] 0
        %722 = vst [vmem:[#allocation10 + $0x8] sm:$0xff] 0
        %vm723 = vcmask 130048
        %724 = vst.msk [vmem:[#allocation10 + $0x10] sm:$0xff] %vm723, 0
        %725 = vst [vmem:[#allocation12] sm:$0xff] 0
        %726 = vst [vmem:[#allocation12 + $0x8] sm:$0xff] 0
        %727 = vst.msk [vmem:[#allocation12 + $0x10] sm:$0xff] %vm723, 0
        %728 = vst [vmem:[#allocation14] sm:$0xff] 0
        %729 = vst [vmem:[#allocation14 + $0x8] sm:$0xff] 0
        %730 = vst.msk [vmem:[#allocation14 + $0x10] sm:$0xff] %vm723, 0
        %731 = vst [vmem:[#allocation4] sm:$0xff] 0.0
        %732 = vst [vmem:[#allocation4 + $0x8] sm:$0xff] 0.0
        %733 = vst [vmem:[#allocation6] sm:$0xff] 0.0
        %734 = vst [vmem:[#allocation6 + $0x8] sm:$0xff] 0.0
        %735 = vst.msk [vmem:[#allocation9] sm:$0xff] %vm719, 0.0
        %736 = vst.msk [vmem:[#allocation9 + $0x8] sm:$0xff] %vm719, 0.0
        %737 = vst.msk [vmem:[#allocation11] sm:$0xff] %vm723, 0.0
        %738 = vst.msk [vmem:[#allocation11 + $0x8] sm:$0xff] %vm723, 0.0
        %739 = vst.msk [vmem:[#allocation13] sm:$0xff] %vm723, 0.0
        %740 = vst.msk [vmem:[#allocation13 + $0x8] sm:$0xff] %vm723, 0.0
        %741 = vst.msk [vmem:[#allocation16] sm:$0xff] %vm723, 0.0
        %742 = vst.msk [vmem:[#allocation16 + $0x8] sm:$0xff] %vm723, 0.0
        %743 = vst.msk [vmem:[#allocation16 + $0x10] sm:$0xff] %vm723, 0.0
        %744 = vst.msk [vmem:[#allocation16 + $0x18] sm:$0xff] %vm723, 0.0
        %745 = vst.msk [vmem:[#allocation16 + $0x20] sm:$0xff] %vm723, 0.0
        %746 = vst.msk [vmem:[#allocation16 + $0x28] sm:$0xff] %vm723, 0.0
        %747 = vst.msk [vmem:[#allocation16 + $0x30] sm:$0xff] %vm723, 0.0
        %748 = vst.msk [vmem:[#allocation16 + $0x38] sm:$0xff] %vm723, 0.0
        %749 = vst.msk [vmem:[#allocation17] sm:$0xff] %vm723, 0
        %750 = vst.msk [vmem:[#allocation17 + $0x8] sm:$0xff] %vm723, 0
        %751 = vst.msk [vmem:[#allocation17 + $0x10] sm:$0xff] %vm723, 0
        %752 = vst.msk [vmem:[#allocation17 + $0x18] sm:$0xff] %vm723, 0
        %753 = vst.msk [vmem:[#allocation18] sm:$0xff] %vm723, 0.0
        %754 = vst.msk [vmem:[#allocation18 + $0x8] sm:$0xff] %vm723, 0.0
        %755 = vst.msk [vmem:[#allocation18 + $0x10] sm:$0xff] %vm723, 0.0
        %756 = vst.msk [vmem:[#allocation18 + $0x18] sm:$0xff] %vm723, 0.0
        %757 = vst.msk [vmem:[#allocation19] sm:$0xff] %vm723, 0
        %758 = vst.msk [vmem:[#allocation19 + $0x8] sm:$0xff] %vm723, 0
        %759 = vst.msk [vmem:[#allocation20] sm:$0xff] %vm723, 0.0
        %vm760 = vcmask 123904
        %761 = vst.msk [vmem:[#allocation20 + $0x8] sm:$0x3] %vm760, 0.0
        %762 = vst.msk [vmem:[#allocation21] sm:$0xff] %vm723, 0.0
        %763 = vst.msk [vmem:[#allocation21 + $0x8] sm:$0x3] %vm760, 0.0
        %764 = vst.msk [vmem:[%s706] sm:$0xff] %vm723, 0.0
        %765 = vst.msk [vmem:[%s706 + $0x8] sm:$0x3] %vm760, 0.0
      $region112: #{scnn_forward.1} parent=107 // pred_fallthru
        _
      %v766 = vld [vmem:[%s701] sm:$0x3]
      %767 = vst [vmem:[#allocation2 + $0x1] sm:$0x3] %v766
      %v768 = vld [vmem:[#allocation2] sm:$0x7]
      %v769 = vld [vmem:[%s11] sm:$0x11]
      %v771 = vunpack.c.l.b16 %v769
      %v772 = vunpack.c.h.b16 %v769
      %v773 = vpack.c.b16 %v771, %v771
      %v774 = vpack.c.b16 %v772, %v772
      %v776 = vpack.i.b16 %v773, %v773
      %v778 = vlaneseq
      %v779 = vshrl.u32 %v778, 7
      %v780 = vsub.s32 0, %v779
      %v781 = vrot.slane %v776, %v780
      %v783 = vpack.i.b16 %v774, %v774
      %v785 = vlaneseq
      %v786 = vshrl.u32 %v785, 7
      %v787 = vsub.s32 0, %v786
      %v788 = vrot.slane %v783, %v787
      %v791 = vcombine.low %v781, %v788
      %v793 = vunpack.c.l.s4 1966171168
      %v794 = vunpack.c.0.s8 %v793
      %v795 = vlaneseq
      %v796 = vshrl.u32 %v795, 7
      %v797 = vsub.s32 %v794, %v796
      %v798 = vrot.slane %v791, %v797
      %v800 = vunpack.c.l.s4 1966171168
      %v801 = vunpack.c.0.s8 %v800
      %v802 = vlaneseq
      %v803 = vshrl.u32 %v802, 7
      %v804 = vsub.s32 %v801, %v803
      %v805 = vrot.slane %v798, %v804
      %806 = vrot.lane.b32.xlu0 %v805, 111
      %v807 = vpop.permute.xlu0 %806
      %v808 = vrot.slane %v807, 7
      %vm809 = vcmask 908288
      %v810 = vsel %vm809, %v808, %v807
      %v812 = vmul.bf16 %v768, %v810
      %v815 = vunpack.c.l.s4 1966171168
      %v816 = vunpack.c.0.s8 %v815
      %v817 = vlaneseq
      %v818 = vshrl.u32 %v817, 7
      %v819 = vsub.s32 %v816, %v818
      %v820 = vrot.slane %v812, %v819
      %v821 = vcombine.high %v820, %v820
      %v823 = vunpack.c.l.s4 1966171168
      %v824 = vunpack.c.0.s8 %v823
      %v825 = vlaneseq
      %v826 = vshrl.u32 %v825, 7
      %v827 = vsub.s32 %v824, %v826
      %v828 = vrot.slane %v820, %v827
      %v830 = vunpack.c.l.s4 1966171168
      %v831 = vunpack.c.0.s8 %v830
      %v832 = vlaneseq
      %v833 = vshrl.u32 %v832, 7
      %v834 = vsub.s32 %v831, %v833
      %v835 = vrot.slane %v821, %v834
      %v836 = vcombine.high %v828, %v828
      %837 = vrot.lane.b32.xlu0 %v828, 17
      %v838 = vpop.permute.xlu0 %837
      %839 = vrot.lane.b32.xlu0 %v835, 17
      %v840 = vpop.permute.xlu0 %839
      %841 = vrot.lane.b32.xlu0 %v836, 17
      %v842 = vpop.permute.xlu0 %841
      %vm843 = vcmask 138240
      %v844 = vsel %vm843, %v838, %v840
      %v845 = vsel %vm843, %v840, %v842
      %848 = vst [vmem:[#allocation15] sm:$0x1] %v844
      %849 = vst [vmem:[#allocation15 + $0x8] sm:$0x1] %v845
      %v850 = vld [vmem:[#allocation2] sm:$0x7]
      %v851 = vld [vmem:[%s11] sm:$0x11]
      %v853 = vunpack.c.l.b16 %v851
      %v854 = vunpack.c.h.b16 %v851
      %v855 = vpack.c.b16 %v853, %v853
      %v856 = vpack.c.b16 %v854, %v854
      %v858 = vshrl.u32 %v855, 16
      %v859 = vpack.i.b16 %v858, %v858
      %v861 = vlaneseq
      %v862 = vshrl.u32 %v861, 7
      %v863 = vsub.s32 0, %v862
      %v864 = vrot.slane %v859, %v863
      %v866 = vshrl.u32 %v856, 16
      %v867 = vpack.i.b16 %v866, %v866
      %v869 = vlaneseq
      %v870 = vshrl.u32 %v869, 7
      %v871 = vsub.s32 0, %v870
      %v872 = vrot.slane %v867, %v871
      %v875 = vcombine.low %v864, %v872
      %v877 = vunpack.c.l.s4 1966171168
      %v878 = vunpack.c.0.s8 %v877
      %v879 = vlaneseq
      %v880 = vshrl.u32 %v879, 7
      %v881 = vsub.s32 %v878, %v880
      %v882 = vrot.slane %v875, %v881
      %v884 = vunpack.c.l.s4 1966171168
      %v885 = vunpack.c.0.s8 %v884
      %v886 = vlaneseq
      %v887 = vshrl.u32 %v886, 7
      %v888 = vsub.s32 %v885, %v887
      %v889 = vrot.slane %v882, %v888
      %890 = vrot.lane.b32.xlu0 %v889, 112
      %v891 = vpop.permute.xlu0 %890
      %v892 = vrot.slane %v891, 7
      %vm893 = vcmask 916480
      %v894 = vsel %vm893, %v892, %v891
      %v896 = vmul.bf16 %v850, %v894
      %v898 = vcombine.low %v896, %v896
      %v900 = vunpack.c.l.s4 1966171168
      %v901 = vunpack.c.0.s8 %v900
      %v902 = vlaneseq
      %v903 = vshrl.u32 %v902, 7
      %v904 = vsub.s32 %v901, %v903
      %v905 = vrot.slane %v898, %v904
      %v906 = vcombine.high %v905, %v905
      %v908 = vunpack.c.l.s4 1966171168
      %v909 = vunpack.c.0.s8 %v908
      %v910 = vlaneseq
      %v911 = vshrl.u32 %v910, 7
      %v912 = vsub.s32 %v909, %v911
      %v913 = vrot.slane %v905, %v912
      %v915 = vunpack.c.l.s4 1966171168
      %v916 = vunpack.c.0.s8 %v915
      %v917 = vlaneseq
      %v918 = vshrl.u32 %v917, 7
      %v919 = vsub.s32 %v916, %v918
      %v920 = vrot.slane %v906, %v919
      %v921 = vcombine.high %v913, %v913
      %922 = vrot.lane.b32.xlu0 %v913, 16
      %v923 = vpop.permute.xlu0 %922
      %924 = vrot.lane.b32.xlu0 %v920, 16
      %v925 = vpop.permute.xlu0 %924
      %926 = vrot.lane.b32.xlu0 %v921, 16
      %v927 = vpop.permute.xlu0 %926
      %vm928 = vcmask 130048
      %v929 = vsel %vm928, %v923, %v925
      %v930 = vsel %vm928, %v925, %v927
      %933 = vst [vmem:[#allocation15] sm:$0x2] %v929
      %934 = vst [vmem:[#allocation15 + $0x8] sm:$0x2] %v930
      %v935 = vld [vmem:[#allocation2] sm:$0x7]
      %v936 = vld [vmem:[%s11] sm:$0x22]
      %v938 = vunpack.c.l.b16 %v936
      %v939 = vunpack.c.h.b16 %v936
      %v940 = vpack.c.b16 %v938, %v938
      %v941 = vpack.c.b16 %v939, %v939
      %v943 = vpack.i.b16 %v940, %v940
      %v945 = vlaneseq
      %v946 = vshrl.u32 %v945, 7
      %v947 = vsub.s32 1, %v946
      %v948 = vrot.slane %v943, %v947
      %v950 = vpack.i.b16 %v941, %v941
      %v952 = vlaneseq
      %v953 = vshrl.u32 %v952, 7
      %v954 = vsub.s32 1, %v953
      %v955 = vrot.slane %v950, %v954
      %v958 = vcombine.low %v948, %v955
      %v960 = vunpack.c.l.s4 1966171168
      %v961 = vunpack.c.0.s8 %v960
      %v962 = vlaneseq
      %v963 = vshrl.u32 %v962, 7
      %v964 = vsub.s32 %v961, %v963
      %v965 = vrot.slane %v958, %v964
      %v967 = vunpack.c.l.s4 1966171168
      %v968 = vunpack.c.0.s8 %v967
      %v969 = vlaneseq
      %v970 = vshrl.u32 %v969, 7
      %v971 = vsub.s32 %v968, %v970
      %v972 = vrot.slane %v965, %v971
      %973 = vrot.lane.b32.xlu0 %v972, 113
      %v974 = vpop.permute.xlu0 %973
      %v975 = vrot.slane %v974, 7
      %vm976 = vcmask 924672
      %v977 = vsel %vm976, %v975, %v974
      %v979 = vmul.bf16 %v935, %v977
      %v982 = vunpack.c.l.s4 1966171168
      %v983 = vunpack.c.0.s8 %v982
      %v984 = vlaneseq
      %v985 = vshrl.u32 %v984, 7
      %v986 = vsub.s32 %v983, %v985
      %v987 = vrot.slane %v979, %v986
      %v988 = vcombine.low %v987, %v987
      %v990 = vunpack.c.l.s4 1966171168
      %v991 = vunpack.c.0.s8 %v990
      %v992 = vlaneseq
      %v993 = vshrl.u32 %v992, 7
      %v994 = vsub.s32 %v991, %v993
      %v995 = vrot.slane %v988, %v994
      %v997 = vunpack.c.l.s4 1966171168
      %v998 = vunpack.c.0.s8 %v997
      %v999 = vlaneseq
      %v1000 = vshrl.u32 %v999, 7
      %v1001 = vsub.s32 %v998, %v1000
      %v1002 = vrot.slane %v987, %v1001
      %v1003 = vcombine.high %v995, %v995
      %1004 = vrot.lane.b32.xlu0 %v995, 15
      %v1005 = vpop.permute.xlu0 %1004
      %1006 = vrot.lane.b32.xlu0 %v1002, 15
      %v1007 = vpop.permute.xlu0 %1006
      %1008 = vrot.lane.b32.xlu0 %v1003, 15
      %v1009 = vpop.permute.xlu0 %1008
      %vm1010 = vcmask 121856
      %v1011 = vsel %vm1010, %v1005, %v1007
      %v1012 = vsel %vm1010, %v1007, %v1009
      %1015 = vst [vmem:[#allocation15] sm:$0x4] %v1011
      %1016 = vst [vmem:[#allocation15 + $0x8] sm:$0x4] %v1012
      %v1017 = vld [vmem:[#allocation2] sm:$0x7]
      %v1018 = vld [vmem:[%s11] sm:$0x22]
      %v1020 = vunpack.c.l.b16 %v1018
      %v1021 = vunpack.c.h.b16 %v1018
      %v1022 = vpack.c.b16 %v1020, %v1020
      %v1023 = vpack.c.b16 %v1021, %v1021
      %v1025 = vshrl.u32 %v1022, 16
      %v1026 = vpack.i.b16 %v1025, %v1025
      %v1028 = vlaneseq
      %v1029 = vshrl.u32 %v1028, 7
      %v1030 = vsub.s32 1, %v1029
      %v1031 = vrot.slane %v1026, %v1030
      %v1033 = vshrl.u32 %v1023, 16
      %v1034 = vpack.i.b16 %v1033, %v1033
      %v1036 = vlaneseq
      %v1037 = vshrl.u32 %v1036, 7
      %v1038 = vsub.s32 1, %v1037
      %v1039 = vrot.slane %v1034, %v1038
      %v1042 = vcombine.low %v1031, %v1039
      %v1044 = vunpack.c.l.s4 1966171168
      %v1045 = vunpack.c.0.s8 %v1044
      %v1046 = vlaneseq
      %v1047 = vshrl.u32 %v1046, 7
      %v1048 = vsub.s32 %v1045, %v1047
      %v1049 = vrot.slane %v1042, %v1048
      %v1051 = vunpack.c.l.s4 1966171168
      %v1052 = vunpack.c.0.s8 %v1051
      %v1053 = vlaneseq
      %v1054 = vshrl.u32 %v1053, 7
      %v1055 = vsub.s32 %v1052, %v1054
      %v1056 = vrot.slane %v1049, %v1055
      %1057 = vrot.lane.b32.xlu0 %v1056, 127
      %v1058 = vpop.permute.xlu0 %1057
      %v1059 = vrot.slane %v1058, 7
      %vm1060 = vcmask 1039360
      %v1061 = vsel %vm1060, %v1059, %v1058
      %v1063 = vmul.bf16 %v1017, %v1061
      %v1065 = vcombine.low %v1063, %v1063
      %v1067 = vunpack.c.l.s4 1966171168
      %v1068 = vunpack.c.0.s8 %v1067
      %v1069 = vlaneseq
      %v1070 = vshrl.u32 %v1069, 7
      %v1071 = vsub.s32 %v1068, %v1070
      %v1072 = vrot.slane %v1065, %v1071
      %v1073 = vcombine.low %v1072, %v1072
      %v1075 = vunpack.c.l.s4 1966171168
      %v1076 = vunpack.c.0.s8 %v1075
      %v1077 = vlaneseq
      %v1078 = vshrl.u32 %v1077, 7
      %v1079 = vsub.s32 %v1076, %v1078
      %v1080 = vrot.slane %v1073, %v1079
      %v1082 = vunpack.c.l.s4 1966171168
      %v1083 = vunpack.c.0.s8 %v1082
      %v1084 = vlaneseq
      %v1085 = vshrl.u32 %v1084, 7
      %v1086 = vsub.s32 %v1083, %v1085
      %v1087 = vrot.slane %v1072, %v1086
      %v1088 = vcombine.high %v1080, %v1080
      %1089 = vrot.lane.b32.xlu0 %v1080, 1
      %v1090 = vpop.permute.xlu0 %1089
      %1091 = vrot.lane.b32.xlu0 %v1087, 1
      %v1092 = vpop.permute.xlu0 %1091
      %1093 = vrot.lane.b32.xlu0 %v1088, 1
      %v1094 = vpop.permute.xlu0 %1093
      %vm1095 = vcmask 7168
      %v1096 = vsel %vm1095, %v1090, %v1092
      %v1097 = vsel %vm1095, %v1092, %v1094
      %1100 = vst [vmem:[#allocation15] sm:$0x8] %v1096
      %1101 = vst [vmem:[#allocation15 + $0x8] sm:$0x8] %v1097
      %v1102 = vld [vmem:[#allocation2 + $0x1] sm:$0x3]
      %v1103 = vld [vmem:[%s11] sm:$0x44]
      %v1105 = vunpack.c.l.b16 %v1103
      %v1106 = vunpack.c.h.b16 %v1103
      %v1107 = vpack.c.b16 %v1105, %v1105
      %v1108 = vpack.c.b16 %v1106, %v1106
      %v1110 = vpack.i.b16 %v1107, %v1107
      %v1112 = vlaneseq
      %v1113 = vshrl.u32 %v1112, 7
      %v1114 = vsub.s32 2, %v1113
      %v1115 = vrot.slane %v1110, %v1114
      %v1117 = vpack.i.b16 %v1108, %v1108
      %v1119 = vlaneseq
      %v1120 = vshrl.u32 %v1119, 7
      %v1121 = vsub.s32 2, %v1120
      %v1122 = vrot.slane %v1117, %v1121
      %v1125 = vcombine.low %v1115, %v1122
      %v1127 = vunpack.c.l.s4 1966171168
      %v1128 = vunpack.c.0.s8 %v1127
      %v1129 = vlaneseq
      %v1130 = vshrl.u32 %v1129, 7
      %v1131 = vsub.s32 %v1128, %v1130
      %v1132 = vrot.slane %v1125, %v1131
      %v1134 = vunpack.c.l.s4 1966171168
      %v1135 = vunpack.c.0.s8 %v1134
      %v1136 = vlaneseq
      %v1137 = vshrl.u32 %v1136, 7
      %v1138 = vsub.s32 %v1135, %v1137
      %v1139 = vrot.slane %v1132, %v1138
      %v1141 = vmul.bf16 %v1102, %v1139
      %v1144 = vunpack.c.l.s4 1966171168
      %v1145 = vunpack.c.0.s8 %v1144
      %v1146 = vlaneseq
      %v1147 = vshrl.u32 %v1146, 7
      %v1148 = vsub.s32 %v1145, %v1147
      %v1149 = vrot.slane %v1141, %v1148
      %v1150 = vcombine.high %v1149, %v1149
      %v1152 = vunpack.c.l.s4 1966171168
      %v1153 = vunpack.c.0.s8 %v1152
      %v1154 = vlaneseq
      %v1155 = vshrl.u32 %v1154, 7
      %v1156 = vsub.s32 %v1153, %v1155
      %v1157 = vrot.slane %v1149, %v1156
      %v1159 = vunpack.c.l.s4 1966171168
      %v1160 = vunpack.c.0.s8 %v1159
      %v1161 = vlaneseq
      %v1162 = vshrl.u32 %v1161, 7
      %v1163 = vsub.s32 %v1160, %v1162
      %v1164 = vrot.slane %v1150, %v1163
      %v1165 = vcombine.low %v1157, %v1157
      %v1166 = vcombine.low %v1164, %v1164
      %1169 = vst [vmem:[#allocation15] sm:$0x10] %v1165
      %1170 = vst [vmem:[#allocation15 + $0x8] sm:$0x10] %v1166
      %v1171 = vld [vmem:[#allocation2 + $0x1] sm:$0x7]
      %v1172 = vld [vmem:[%s11] sm:$0x44]
      %v1174 = vunpack.c.l.b16 %v1172
      %v1175 = vunpack.c.h.b16 %v1172
      %v1176 = vpack.c.b16 %v1174, %v1174
      %v1177 = vpack.c.b16 %v1175, %v1175
      %v1179 = vshrl.u32 %v1176, 16
      %v1180 = vpack.i.b16 %v1179, %v1179
      %v1182 = vlaneseq
      %v1183 = vshrl.u32 %v1182, 7
      %v1184 = vsub.s32 2, %v1183
      %v1185 = vrot.slane %v1180, %v1184
      %v1187 = vshrl.u32 %v1177, 16
      %v1188 = vpack.i.b16 %v1187, %v1187
      %v1190 = vlaneseq
      %v1191 = vshrl.u32 %v1190, 7
      %v1192 = vsub.s32 2, %v1191
      %v1193 = vrot.slane %v1188, %v1192
      %v1196 = vcombine.low %v1185, %v1193
      %v1198 = vunpack.c.l.s4 1966171168
      %v1199 = vunpack.c.0.s8 %v1198
      %v1200 = vlaneseq
      %v1201 = vshrl.u32 %v1200, 7
      %v1202 = vsub.s32 %v1199, %v1201
      %v1203 = vrot.slane %v1196, %v1202
      %v1205 = vunpack.c.l.s4 1966171168
      %v1206 = vunpack.c.0.s8 %v1205
      %v1207 = vlaneseq
      %v1208 = vshrl.u32 %v1207, 7
      %v1209 = vsub.s32 %v1206, %v1208
      %v1210 = vrot.slane %v1203, %v1209
      %1211 = vrot.lane.b32.xlu0 %v1210, 1
      %v1212 = vpop.permute.xlu0 %1211
      %v1213 = vrot.slane %v1212, 7
      %v1214 = vsel %vm1095, %v1213, %v1212
      %v1216 = vmul.bf16 %v1171, %v1214
      %v1218 = vcombine.low %v1216, %v1216
      %v1220 = vunpack.c.l.s4 1966171168
      %v1221 = vunpack.c.0.s8 %v1220
      %v1222 = vlaneseq
      %v1223 = vshrl.u32 %v1222, 7
      %v1224 = vsub.s32 %v1221, %v1223
      %v1225 = vrot.slane %v1218, %v1224
      %v1226 = vcombine.high %v1225, %v1225
      %v1228 = vunpack.c.l.s4 1966171168
      %v1229 = vunpack.c.0.s8 %v1228
      %v1230 = vlaneseq
      %v1231 = vshrl.u32 %v1230, 7
      %v1232 = vsub.s32 %v1229, %v1231
      %v1233 = vrot.slane %v1225, %v1232
      %v1235 = vunpack.c.l.s4 1966171168
      %v1236 = vunpack.c.0.s8 %v1235
      %v1237 = vlaneseq
      %v1238 = vshrl.u32 %v1237, 7
      %v1239 = vsub.s32 %v1236, %v1238
      %v1240 = vrot.slane %v1226, %v1239
      %v1241 = vcombine.low %v1233, %v1233
      %v1242 = vcombine.low %v1240, %v1240
      %1243 = vrot.lane.b32.xlu0 %v1241, 127
      %v1244 = vpop.permute.xlu0 %1243
      %1245 = vrot.lane.b32.xlu0 %v1242, 127
      %v1246 = vpop.permute.xlu0 %1245
      %1247 = vrot.lane.b32.xlu0 %v1233, 127
      %v1248 = vpop.permute.xlu0 %1247
      %v1249 = vsel %vm1060, %v1244, %v1246
      %v1250 = vsel %vm1060, %v1246, %v1248
      %1253 = vst [vmem:[#allocation15] sm:$0x20] %v1249
      %1254 = vst [vmem:[#allocation15 + $0x8] sm:$0x20] %v1250
      %v1255 = vld [vmem:[#allocation2 + $0x1] sm:$0x7]
      %v1256 = vld [vmem:[%s11] sm:$0x88]
      %v1258 = vunpack.c.l.b16 %v1256
      %v1259 = vunpack.c.h.b16 %v1256
      %v1260 = vpack.c.b16 %v1258, %v1258
      %v1261 = vpack.c.b16 %v1259, %v1259
      %v1263 = vpack.i.b16 %v1260, %v1260
      %v1265 = vlaneseq
      %v1266 = vshrl.u32 %v1265, 7
      %v1267 = vsub.s32 3, %v1266
      %v1268 = vrot.slane %v1263, %v1267
      %v1270 = vpack.i.b16 %v1261, %v1261
      %v1272 = vlaneseq
      %v1273 = vshrl.u32 %v1272, 7
      %v1274 = vsub.s32 3, %v1273
      %v1275 = vrot.slane %v1270, %v1274
      %v1278 = vcombine.low %v1268, %v1275
      %v1280 = vunpack.c.l.s4 1966171168
      %v1281 = vunpack.c.0.s8 %v1280
      %v1282 = vlaneseq
      %v1283 = vshrl.u32 %v1282, 7
      %v1284 = vsub.s32 %v1281, %v1283
      %v1285 = vrot.slane %v1278, %v1284
      %v1287 = vunpack.c.l.s4 1966171168
      %v1288 = vunpack.c.0.s8 %v1287
      %v1289 = vlaneseq
      %v1290 = vshrl.u32 %v1289, 7
      %v1291 = vsub.s32 %v1288, %v1290
      %v1292 = vrot.slane %v1285, %v1291
      %1293 = vrot.lane.b32.xlu0 %v1292, 15
      %v1294 = vpop.permute.xlu0 %1293
      %v1295 = vrot.slane %v1294, 7
      %v1296 = vsel %vm1010, %v1295, %v1294
      %v1298 = vmul.bf16 %v1255, %v1296
      %v1301 = vunpack.c.l.s4 1966171168
      %v1302 = vunpack.c.0.s8 %v1301
      %v1303 = vlaneseq
      %v1304 = vshrl.u32 %v1303, 7
      %v1305 = vsub.s32 %v1302, %v1304
      %v1306 = vrot.slane %v1298, %v1305
      %v1307 = vcombine.low %v1306, %v1306
      %v1309 = vunpack.c.l.s4 1966171168
      %v1310 = vunpack.c.0.s8 %v1309
      %v1311 = vlaneseq
      %v1312 = vshrl.u32 %v1311, 7
      %v1313 = vsub.s32 %v1310, %v1312
      %v1314 = vrot.slane %v1307, %v1313
      %v1316 = vunpack.c.l.s4 1966171168
      %v1317 = vunpack.c.0.s8 %v1316
      %v1318 = vlaneseq
      %v1319 = vshrl.u32 %v1318, 7
      %v1320 = vsub.s32 %v1317, %v1319
      %v1321 = vrot.slane %v1306, %v1320
      %v1322 = vcombine.low %v1314, %v1314
      %v1323 = vcombine.low %v1321, %v1321
      %1324 = vrot.lane.b32.xlu0 %v1322, 113
      %v1325 = vpop.permute.xlu0 %1324
      %1326 = vrot.lane.b32.xlu0 %v1323, 113
      %v1327 = vpop.permute.xlu0 %1326
      %1328 = vrot.lane.b32.xlu0 %v1314, 113
      %v1329 = vpop.permute.xlu0 %1328
      %v1330 = vsel %vm976, %v1325, %v1327
      %v1331 = vsel %vm976, %v1327, %v1329
      %1334 = vst [vmem:[#allocation15] sm:$0x40] %v1330
      %1335 = vst [vmem:[#allocation15 + $0x8] sm:$0x40] %v1331
      %v1336 = vld [vmem:[#allocation2 + $0x1] sm:$0x7]
      %v1337 = vld [vmem:[%s11] sm:$0x88]
      %v1339 = vunpack.c.l.b16 %v1337
      %v1340 = vunpack.c.h.b16 %v1337
      %v1341 = vpack.c.b16 %v1339, %v1339
      %v1342 = vpack.c.b16 %v1340, %v1340
      %v1344 = vshrl.u32 %v1341, 16
      %v1345 = vpack.i.b16 %v1344, %v1344
      %v1347 = vlaneseq
      %v1348 = vshrl.u32 %v1347, 7
      %v1349 = vsub.s32 3, %v1348
      %v1350 = vrot.slane %v1345, %v1349
      %v1352 = vshrl.u32 %v1342, 16
      %v1353 = vpack.i.b16 %v1352, %v1352
      %v1355 = vlaneseq
      %v1356 = vshrl.u32 %v1355, 7
      %v1357 = vsub.s32 3, %v1356
      %v1358 = vrot.slane %v1353, %v1357
      %v1361 = vcombine.low %v1350, %v1358
      %v1363 = vunpack.c.l.s4 1966171168
      %v1364 = vunpack.c.0.s8 %v1363
      %v1365 = vlaneseq
      %v1366 = vshrl.u32 %v1365, 7
      %v1367 = vsub.s32 %v1364, %v1366
      %v1368 = vrot.slane %v1361, %v1367
      %v1370 = vunpack.c.l.s4 1966171168
      %v1371 = vunpack.c.0.s8 %v1370
      %v1372 = vlaneseq
      %v1373 = vshrl.u32 %v1372, 7
      %v1374 = vsub.s32 %v1371, %v1373
      %v1375 = vrot.slane %v1368, %v1374
      %1376 = vrot.lane.b32.xlu0 %v1375, 16
      %v1377 = vpop.permute.xlu0 %1376
      %v1378 = vrot.slane %v1377, 7
      %v1379 = vsel %vm928, %v1378, %v1377
      %v1381 = vmul.bf16 %v1336, %v1379
      %v1383 = vcombine.low %v1381, %v1381
      %v1385 = vunpack.c.l.s4 1966171168
      %v1386 = vunpack.c.0.s8 %v1385
      %v1387 = vlaneseq
      %v1388 = vshrl.u32 %v1387, 7
      %v1389 = vsub.s32 %v1386, %v1388
      %v1390 = vrot.slane %v1383, %v1389
      %v1391 = vcombine.low %v1390, %v1390
      %v1393 = vunpack.c.l.s4 1966171168
      %v1394 = vunpack.c.0.s8 %v1393
      %v1395 = vlaneseq
      %v1396 = vshrl.u32 %v1395, 7
      %v1397 = vsub.s32 %v1394, %v1396
      %v1398 = vrot.slane %v1391, %v1397
      %v1400 = vunpack.c.l.s4 1966171168
      %v1401 = vunpack.c.0.s8 %v1400
      %v1402 = vlaneseq
      %v1403 = vshrl.u32 %v1402, 7
      %v1404 = vsub.s32 %v1401, %v1403
      %v1405 = vrot.slane %v1390, %v1404
      %v1406 = vcombine.low %v1398, %v1398
      %v1407 = vcombine.low %v1405, %v1405
      %1408 = vrot.lane.b32.xlu0 %v1406, 112
      %v1409 = vpop.permute.xlu0 %1408
      %1410 = vrot.lane.b32.xlu0 %v1407, 112
      %v1411 = vpop.permute.xlu0 %1410
      %1412 = vrot.lane.b32.xlu0 %v1398, 112
      %v1413 = vpop.permute.xlu0 %1412
      %v1414 = vsel %vm893, %v1409, %v1411
      %v1415 = vsel %vm893, %v1411, %v1413
      %1418 = vst [vmem:[#allocation15] sm:$0x80] %v1414
      %1419 = vst [vmem:[#allocation15 + $0x8] sm:$0x80] %v1415
      %v1420 = vld [vmem:[#allocation2 + $0x1] sm:$0x7]
      %v1421 = vld [vmem:[%s11 + $0x8] sm:$0x11]
      %v1423 = vunpack.c.l.b16 %v1421
      %v1424 = vunpack.c.h.b16 %v1421
      %v1425 = vpack.c.b16 %v1423, %v1423
      %v1426 = vpack.c.b16 %v1424, %v1424
      %v1428 = vpack.i.b16 %v1425, %v1425
      %v1430 = vlaneseq
      %v1431 = vshrl.u32 %v1430, 7
      %v1432 = vsub.s32 0, %v1431
      %v1433 = vrot.slane %v1428, %v1432
      %v1435 = vpack.i.b16 %v1426, %v1426
      %v1437 = vlaneseq
      %v1438 = vshrl.u32 %v1437, 7
      %v1439 = vsub.s32 0, %v1438
      %v1440 = vrot.slane %v1435, %v1439
      %v1443 = vcombine.low %v1433, %v1440
      %v1445 = vunpack.c.l.s4 1966171168
      %v1446 = vunpack.c.0.s8 %v1445
      %v1447 = vlaneseq
      %v1448 = vshrl.u32 %v1447, 7
      %v1449 = vsub.s32 %v1446, %v1448
      %v1450 = vrot.slane %v1443, %v1449
      %v1452 = vunpack.c.l.s4 1966171168
      %v1453 = vunpack.c.0.s8 %v1452
      %v1454 = vlaneseq
      %v1455 = vshrl.u32 %v1454, 7
      %v1456 = vsub.s32 %v1453, %v1455
      %v1457 = vrot.slane %v1450, %v1456
      %1458 = vrot.lane.b32.xlu0 %v1457, 17
      %v1459 = vpop.permute.xlu0 %1458
      %v1460 = vrot.slane %v1459, 7
      %v1461 = vsel %vm843, %v1460, %v1459
      %v1463 = vmul.bf16 %v1420, %v1461
      %v1466 = vunpack.c.l.s4 1966171168
      %v1467 = vunpack.c.0.s8 %v1466
      %v1468 = vlaneseq
      %v1469 = vshrl.u32 %v1468, 7
      %v1470 = vsub.s32 %v1467, %v1469
      %v1471 = vrot.slane %v1463, %v1470
      %v1472 = vcombine.high %v1471, %v1471
      %v1474 = vunpack.c.l.s4 1966171168
      %v1475 = vunpack.c.0.s8 %v1474
      %v1476 = vlaneseq
      %v1477 = vshrl.u32 %v1476, 7
      %v1478 = vsub.s32 %v1475, %v1477
      %v1479 = vrot.slane %v1471, %v1478
      %v1481 = vunpack.c.l.s4 1966171168
      %v1482 = vunpack.c.0.s8 %v1481
      %v1483 = vlaneseq
      %v1484 = vshrl.u32 %v1483, 7
      %v1485 = vsub.s32 %v1482, %v1484
      %v1486 = vrot.slane %v1472, %v1485
      %v1487 = vcombine.high %v1479, %v1479
      %1488 = vrot.lane.b32.xlu0 %v1479, 111
      %v1489 = vpop.permute.xlu0 %1488
      %1490 = vrot.lane.b32.xlu0 %v1486, 111
      %v1491 = vpop.permute.xlu0 %1490
      %1492 = vrot.lane.b32.xlu0 %v1487, 111
      %v1493 = vpop.permute.xlu0 %1492
      %v1494 = vsel %vm809, %v1489, %v1491
      %v1495 = vsel %vm809, %v1491, %v1493
      %1498 = vst [vmem:[#allocation15 + $0x10] sm:$0x1] %v1494
      %1499 = vst [vmem:[#allocation15 + $0x18] sm:$0x1] %v1495
      %v1500 = vld [vmem:[%s1] sm:$0xf]
      %v1501 = vld [vmem:[#allocation15] sm:$0xff]
      %v1502 = vld [vmem:[#allocation15 + $0x8] sm:$0xff]
      %v1503 = vld [vmem:[#allocation15 + $0x10] sm:$0x1]
      %v1504 = vld [vmem:[#allocation15 + $0x18] sm:$0x1]
      %v1505 = vld [vmem:[%s2] sm:$0xff]
      %1507 = vset.pattern.permute.xlu0 0
      %1508 = vperm.xlu0 %1507, %v1505
      %v1509 = vpop.permute.xlu0 %1508
      %vm1511 = vcmask 146432
      %v1513 = vsel %vm1511, %v1500, 0
      %vm1515 = vcmask 1040384
      %v1517 = vsel %vm1515, %v1503, 0
      %v1520 = vsel %vm1515, %v1504, 0
      %1522 = vmatprep.subr.bf16.mxu0 %v1502
      %1523 = vmatpush1.bf16.msra.mxu0 %v1501
      %1524 = vmatprep.subr.bf16.mxu0 %v1520
      %1525 = vmatpush1.bf16.msra.mxu0 %v1517
      %1526 = vmatprep.subr.bf16.mxu0 0
      %1527 = vmatpush1.bf16.msra.mxu0 0
      %1528 = vmatprep.subr.bf16.mxu0 0
      %1529 = vmatpush1.bf16.msra.mxu0 0
      %1530 = vmatprep.subr.bf16.mxu0 0
      %1531 = vmatpush1.bf16.msra.mxu0 0
      %1532 = vmatprep.subr.bf16.mxu0 0
      %1533 = vmatpush1.bf16.msra.mxu0 0
      %1534 = vmatprep.subr.bf16.mxu0 0
      %1535 = vmatpush1.bf16.msra.mxu0 0
      %1536 = vmatprep.subr.bf16.mxu0 0
      %1537 = vmatpush1.bf16.msra.mxu0 0
      %1538 = vmatprep.subr.bf16.mxu0 0
      %1539 = vmatpush1.bf16.msra.mxu0 0
      %1540 = vmatprep.subr.bf16.mxu0 0
      %1541 = vmatpush1.bf16.msra.mxu0 0
      %1542 = vmatprep.subr.bf16.mxu0 0
      %1543 = vmatpush1.bf16.msra.mxu0 0
      %1544 = vmatprep.subr.bf16.mxu0 0
      %1545 = vmatpush1.bf16.msra.mxu0 0
      %1546 = vmatprep.subr.bf16.mxu0 0
      %1547 = vmatpush1.bf16.msra.mxu0 0
      %1548 = vmatprep.subr.bf16.mxu0 0
      %1549 = vmatpush1.bf16.msra.mxu0 0
      %1550 = vmatprep.subr.bf16.mxu0 0
      %1551 = vmatpush1.bf16.msra.mxu0 0
      %1552 = vmatprep.subr.bf16.mxu0 0
      %1553 = vmatpush1.bf16.msra.mxu0 0
      %1554 = vmatprep.mubr.bf16.mxu0 0
      %1555 = vmatmul.mubr.bf16.gmra.mrb[0].mxu0 %v1513
      %v1556 = vpop.f32.mrb[0].mxu0
      %v1557 = vadd.f32 %v1509, %v1556
      %v1558 = vpop.f32.mrb[0].mxu0
      %v1559 = vadd.f32 %v1509, %v1558
      %v1560 = vpop.f32.mrb[0].mxu0
      %v1561 = vpop.f32.mrb[0].mxu0
      %1562 = vdwg.mxu0
      %v1563 = vld [vmem:[#allocation3 + $0x4] sm:$0xff]
      %v1564 = vunpack.c.l.bf16 %v1563
      %v1565 = vunpack.c.h.bf16 %v1563
      %v1566 = vld [vmem:[#allocation4] sm:$0xff]
      %v1567 = vld [vmem:[#allocation4 + $0x8] sm:$0xff]
      %v1568 = vsub.f32 1.0, %v1564
      %v1569 = vsub.f32 1.0, %v1565
      %v1570 = vmul.f32 %v1568, 0.1
      %v1571 = vmul.f32 %v1569, 0.1
      %v1572 = vmul.f32 %v1566, %v1570
      %v1573 = vmul.f32 %v1567, %v1571
      %v1574 = vadd.f32 %v1572, %v1557
      %v1575 = vadd.f32 %v1573, %v1559
      %1576 = vst [vmem:[#allocation4] sm:$0xff] %v1574
      %1577 = vst [vmem:[#allocation4 + $0x8] sm:$0xff] %v1575
      %vm1578 = vcmp.gt.f32.partialorder %v1574, 0.25
      %vm1579 = vcmp.gt.f32.partialorder %v1575, 0.25
      %v1580 = vsel %vm1578, 1, 0
      %v1581 = vsel %vm1579, 1, 0
      %v1582 = vcvt.s32.f32 %v1580
      %v1583 = vcvt.s32.f32 %v1581
      %v1584 = vpack.c.bf16 %v1582, %v1582
      %v1585 = vpack.c.bf16 %v1583, %v1583
      %v1588 = vunpack.c.l.b16 %v1584
      %v1589 = vunpack.c.l.b16 %v1585
      %v1590 = vpack.c.b16 %v1589, %v1588
      %1592 = vst [vmem:[#allocation3 + $0x4] sm:$0xff] %v1590
      %v1593 = vld [vmem:[#allocation3] sm:$0xff]
      %v1594 = vld [vmem:[#allocation3 + $0x8] sm:$0xf]
      %v1595 = vld [vmem:[%s11] sm:$0x11]
      %v1597 = vunpack.c.l.b16 %v1595
      %v1598 = vunpack.c.h.b16 %v1595
      %v1599 = vpack.c.b16 %v1597, %v1597
      %v1600 = vpack.c.b16 %v1598, %v1598
      %v1602 = vpack.i.b16 %v1599, %v1599
      %v1604 = vlaneseq
      %v1605 = vshrl.u32 %v1604, 7
      %v1606 = vsub.s32 0, %v1605
      %v1607 = vrot.slane %v1602, %v1606
      %v1609 = vpack.i.b16 %v1600, %v1600
      %v1611 = vlaneseq
      %v1612 = vshrl.u32 %v1611, 7
      %v1613 = vsub.s32 0, %v1612
      %v1614 = vrot.slane %v1609, %v1613
      %v1617 = vunpack.c.l.b16 %v1607
      %v1618 = vunpack.c.l.b16 %v1614
      %v1619 = vpack.c.b16 %v1618, %v1617
      %1620 = vrot.lane.b32.xlu0 %v1619, 111
      %v1621 = vpop.permute.xlu0 %1620
      %v1622 = vrot.slane %v1621, 4
      %v1623 = vsel %vm809, %v1622, %v1621
      %v1626 = vmul.bf16 %v1593, %v1623
      %v1627 = vmul.bf16 %v1594, %v1622
      %v1630 = vunpack.c.l.b16 %v1626
      %v1631 = vunpack.c.h.b16 %v1626
      %v1632 = vunpack.c.l.b16 %v1627
      %v1633 = vpack.c.b16 %v1630, %v1630
      %v1634 = vpack.c.b16 %v1631, %v1631
      %v1635 = vpack.c.b16 %v1632, %v1632
      %1636 = vrot.lane.b32.xlu0 %v1633, 17
      %v1637 = vpop.permute.xlu0 %1636
      %1638 = vrot.lane.b32.xlu0 %v1634, 17
      %v1639 = vpop.permute.xlu0 %1638
      %1640 = vrot.lane.b32.xlu0 %v1635, 17
      %v1641 = vpop.permute.xlu0 %1640
      %v1642 = vsel %vm843, %v1637, %v1639
      %v1643 = vsel %vm843, %v1639, %v1641
      %1646 = vst [vmem:[#allocation15] sm:$0xf] %v1642
      %1647 = vst [vmem:[#allocation15 + $0x8] sm:$0xf] %v1643
      %v1648 = vld [vmem:[#allocation3] sm:$0xff]
      %v1649 = vld [vmem:[#allocation3 + $0x8] sm:$0xf]
      %v1650 = vld [vmem:[%s11] sm:$0x11]
      %v1652 = vunpack.c.l.b16 %v1650
      %v1653 = vunpack.c.h.b16 %v1650
      %v1654 = vpack.c.b16 %v1652, %v1652
      %v1655 = vpack.c.b16 %v1653, %v1653
      %v1657 = vshrl.u32 %v1654, 16
      %v1658 = vpack.i.b16 %v1657, %v1657
      %v1660 = vlaneseq
      %v1661 = vshrl.u32 %v1660, 7
      %v1662 = vsub.s32 0, %v1661
      %v1663 = vrot.slane %v1658, %v1662
      %v1665 = vshrl.u32 %v1655, 16
      %v1666 = vpack.i.b16 %v1665, %v1665
      %v1668 = vlaneseq
      %v1669 = vshrl.u32 %v1668, 7
      %v1670 = vsub.s32 0, %v1669
      %v1671 = vrot.slane %v1666, %v1670
      %v1674 = vunpack.c.l.b16 %v1663
      %v1675 = vunpack.c.l.b16 %v1671
      %v1676 = vpack.c.b16 %v1675, %v1674
      %1677 = vrot.lane.b32.xlu0 %v1676, 112
      %v1678 = vpop.permute.xlu0 %1677
      %v1679 = vrot.slane %v1678, 4
      %v1680 = vsel %vm893, %v1679, %v1678
      %v1683 = vmul.bf16 %v1648, %v1680
      %v1684 = vmul.bf16 %v1649, %v1679
      %v1687 = vunpack.c.l.b16 %v1683
      %v1688 = vunpack.c.h.b16 %v1683
      %v1689 = vunpack.c.l.b16 %v1684
      %v1690 = vpack.c.b16 %v1687, %v1687
      %v1691 = vpack.c.b16 %v1688, %v1688
      %v1692 = vpack.c.b16 %v1689, %v1689
      %1693 = vrot.lane.b32.xlu0 %v1690, 16
      %v1694 = vpop.permute.xlu0 %1693
      %1695 = vrot.lane.b32.xlu0 %v1691, 16
      %v1696 = vpop.permute.xlu0 %1695
      %1697 = vrot.lane.b32.xlu0 %v1692, 16
      %v1698 = vpop.permute.xlu0 %1697
      %v1699 = vsel %vm928, %v1694, %v1696
      %v1700 = vsel %vm928, %v1696, %v1698
      %1703 = vst [vmem:[#allocation15] sm:$0xf0] %v1699
      %1704 = vst [vmem:[#allocation15 + $0x8] sm:$0xf0] %v1700
      %v1705 = vld [vmem:[#allocation3] sm:$0xff]
      %v1706 = vld [vmem:[#allocation3 + $0x8] sm:$0xf]
      %v1707 = vld [vmem:[%s11] sm:$0x22]
      %v1709 = vunpack.c.l.b16 %v1707
      %v1710 = vunpack.c.h.b16 %v1707
      %v1711 = vpack.c.b16 %v1709, %v1709
      %v1712 = vpack.c.b16 %v1710, %v1710
      %v1714 = vpack.i.b16 %v1711, %v1711
      %v1716 = vlaneseq
      %v1717 = vshrl.u32 %v1716, 7
      %v1718 = vsub.s32 1, %v1717
      %v1719 = vrot.slane %v1714, %v1718
      %v1721 = vpack.i.b16 %v1712, %v1712
      %v1723 = vlaneseq
      %v1724 = vshrl.u32 %v1723, 7
      %v1725 = vsub.s32 1, %v1724
      %v1726 = vrot.slane %v1721, %v1725
      %v1729 = vunpack.c.l.b16 %v1719
      %v1730 = vunpack.c.l.b16 %v1726
      %v1731 = vpack.c.b16 %v1730, %v1729
      %1732 = vrot.lane.b32.xlu0 %v1731, 113
      %v1733 = vpop.permute.xlu0 %1732
      %v1734 = vrot.slane %v1733, 4
      %v1735 = vsel %vm976, %v1734, %v1733
      %v1738 = vmul.bf16 %v1705, %v1735
      %v1739 = vmul.bf16 %v1706, %v1734
      %v1742 = vunpack.c.l.b16 %v1738
      %v1743 = vunpack.c.h.b16 %v1738
      %v1744 = vunpack.c.l.b16 %v1739
      %v1745 = vpack.c.b16 %v1742, %v1742
      %v1746 = vpack.c.b16 %v1743, %v1743
      %v1747 = vpack.c.b16 %v1744, %v1744
      %1748 = vrot.lane.b32.xlu0 %v1745, 15
      %v1749 = vpop.permute.xlu0 %1748
      %1750 = vrot.lane.b32.xlu0 %v1746, 15
      %v1751 = vpop.permute.xlu0 %1750
      %1752 = vrot.lane.b32.xlu0 %v1747, 15
      %v1753 = vpop.permute.xlu0 %1752
      %v1754 = vsel %vm1010, %v1749, %v1751
      %v1755 = vsel %vm1010, %v1751, %v1753
      %1758 = vst [vmem:[#allocation15 + $0x10] sm:$0xf] %v1754
      %1759 = vst [vmem:[#allocation15 + $0x18] sm:$0xf] %v1755
      %v1760 = vld [vmem:[#allocation3] sm:$0xff]
      %v1761 = vld [vmem:[#allocation3 + $0x8] sm:$0xf]
      %v1762 = vld [vmem:[%s11] sm:$0x22]
      %v1764 = vunpack.c.l.b16 %v1762
      %v1765 = vunpack.c.h.b16 %v1762
      %v1766 = vpack.c.b16 %v1764, %v1764
      %v1767 = vpack.c.b16 %v1765, %v1765
      %v1769 = vshrl.u32 %v1766, 16
      %v1770 = vpack.i.b16 %v1769, %v1769
      %v1772 = vlaneseq
      %v1773 = vshrl.u32 %v1772, 7
      %v1774 = vsub.s32 1, %v1773
      %v1775 = vrot.slane %v1770, %v1774
      %v1777 = vshrl.u32 %v1767, 16
      %v1778 = vpack.i.b16 %v1777, %v1777
      %v1780 = vlaneseq
      %v1781 = vshrl.u32 %v1780, 7
      %v1782 = vsub.s32 1, %v1781
      %v1783 = vrot.slane %v1778, %v1782
      %v1786 = vunpack.c.l.b16 %v1775
      %v1787 = vunpack.c.l.b16 %v1783
      %v1788 = vpack.c.b16 %v1787, %v1786
      %1789 = vrot.lane.b32.xlu0 %v1788, 127
      %v1790 = vpop.permute.xlu0 %1789
      %v1791 = vrot.slane %v1790, 4
      %v1792 = vsel %vm1060, %v1791, %v1790
      %v1795 = vmul.bf16 %v1760, %v1792
      %v1796 = vmul.bf16 %v1761, %v1791
      %v1799 = vunpack.c.l.b16 %v1795
      %v1800 = vunpack.c.h.b16 %v1795
      %v1801 = vunpack.c.l.b16 %v1796
      %v1802 = vpack.c.b16 %v1799, %v1799
      %v1803 = vpack.c.b16 %v1800, %v1800
      %v1804 = vpack.c.b16 %v1801, %v1801
      %1805 = vrot.lane.b32.xlu0 %v1802, 1
      %v1806 = vpop.permute.xlu0 %1805
      %1807 = vrot.lane.b32.xlu0 %v1803, 1
      %v1808 = vpop.permute.xlu0 %1807
      %1809 = vrot.lane.b32.xlu0 %v1804, 1
      %v1810 = vpop.permute.xlu0 %1809
      %v1811 = vsel %vm1095, %v1806, %v1808
      %v1812 = vsel %vm1095, %v1808, %v1810
      %1815 = vst [vmem:[#allocation15 + $0x10] sm:$0xf0] %v1811
      %1816 = vst [vmem:[#allocation15 + $0x18] sm:$0xf0] %v1812
      %v1817 = vld [vmem:[#allocation3 + $0x4] sm:$0xff]
      %v1818 = vld [vmem:[%s11] sm:$0x44]
      %v1820 = vunpack.c.l.b16 %v1818
      %v1821 = vunpack.c.h.b16 %v1818
      %v1822 = vpack.c.b16 %v1820, %v1820
      %v1823 = vpack.c.b16 %v1821, %v1821
      %v1825 = vpack.i.b16 %v1822, %v1822
      %v1827 = vlaneseq
      %v1828 = vshrl.u32 %v1827, 7
      %v1829 = vsub.s32 2, %v1828
      %v1830 = vrot.slane %v1825, %v1829
      %v1832 = vpack.i.b16 %v1823, %v1823
      %v1834 = vlaneseq
      %v1835 = vshrl.u32 %v1834, 7
      %v1836 = vsub.s32 2, %v1835
      %v1837 = vrot.slane %v1832, %v1836
      %v1840 = vunpack.c.l.b16 %v1830
      %v1841 = vunpack.c.l.b16 %v1837
      %v1842 = vpack.c.b16 %v1841, %v1840
      %v1844 = vmul.bf16 %v1817, %v1842
      %v1846 = vunpack.c.l.b16 %v1844
      %v1847 = vunpack.c.h.b16 %v1844
      %v1848 = vpack.c.b16 %v1846, %v1846
      %v1849 = vpack.c.b16 %v1847, %v1847
      %1852 = vst [vmem:[#allocation15 + $0x20] sm:$0xf] %v1848
      %1853 = vst [vmem:[#allocation15 + $0x28] sm:$0xf] %v1849
      %v1854 = vld [vmem:[#allocation3 + $0x4] sm:$0xff]
      %v1855 = vld [vmem:[#allocation3 + $0xc] sm:$0xf]
      %v1856 = vld [vmem:[%s11] sm:$0x44]
      %v1858 = vunpack.c.l.b16 %v1856
      %v1859 = vunpack.c.h.b16 %v1856
      %v1860 = vpack.c.b16 %v1858, %v1858
      %v1861 = vpack.c.b16 %v1859, %v1859
      %v1863 = vshrl.u32 %v1860, 16
      %v1864 = vpack.i.b16 %v1863, %v1863
      %v1866 = vlaneseq
      %v1867 = vshrl.u32 %v1866, 7
      %v1868 = vsub.s32 2, %v1867
      %v1869 = vrot.slane %v1864, %v1868
      %v1871 = vshrl.u32 %v1861, 16
      %v1872 = vpack.i.b16 %v1871, %v1871
      %v1874 = vlaneseq
      %v1875 = vshrl.u32 %v1874, 7
      %v1876 = vsub.s32 2, %v1875
      %v1877 = vrot.slane %v1872, %v1876
      %v1880 = vunpack.c.l.b16 %v1869
      %v1881 = vunpack.c.l.b16 %v1877
      %v1882 = vpack.c.b16 %v1881, %v1880
      %1883 = vrot.lane.b32.xlu0 %v1882, 1
      %v1884 = vpop.permute.xlu0 %1883
      %v1885 = vrot.slane %v1884, 4
      %v1886 = vsel %vm1095, %v1885, %v1884
      %v1889 = vmul.bf16 %v1854, %v1886
      %v1890 = vmul.bf16 %v1855, %v1885
      %v1893 = vunpack.c.l.b16 %v1889
      %v1894 = vunpack.c.h.b16 %v1889
      %v1895 = vunpack.c.l.b16 %v1890
      %v1896 = vpack.c.b16 %v1893, %v1893
      %v1897 = vpack.c.b16 %v1894, %v1894
      %v1898 = vpack.c.b16 %v1895, %v1895
      %1899 = vrot.lane.b32.xlu0 %v1896, 127
      %v1900 = vpop.permute.xlu0 %1899
      %1901 = vrot.lane.b32.xlu0 %v1897, 127
      %v1902 = vpop.permute.xlu0 %1901
      %1903 = vrot.lane.b32.xlu0 %v1898, 127
      %v1904 = vpop.permute.xlu0 %1903
      %v1905 = vsel %vm1060, %v1900, %v1902
      %v1906 = vsel %vm1060, %v1902, %v1904
      %1909 = vst [vmem:[#allocation15 + $0x20] sm:$0xf0] %v1905
      %1910 = vst [vmem:[#allocation15 + $0x28] sm:$0xf0] %v1906
      %v1911 = vld [vmem:[#allocation3 + $0x4] sm:$0xff]
      %v1912 = vld [vmem:[#allocation3 + $0xc] sm:$0xf]
      %v1913 = vld [vmem:[%s11] sm:$0x88]
      %v1915 = vunpack.c.l.b16 %v1913
      %v1916 = vunpack.c.h.b16 %v1913
      %v1917 = vpack.c.b16 %v1915, %v1915
      %v1918 = vpack.c.b16 %v1916, %v1916
      %v1920 = vpack.i.b16 %v1917, %v1917
      %v1922 = vlaneseq
      %v1923 = vshrl.u32 %v1922, 7
      %v1924 = vsub.s32 3, %v1923
      %v1925 = vrot.slane %v1920, %v1924
      %v1927 = vpack.i.b16 %v1918, %v1918
      %v1929 = vlaneseq
      %v1930 = vshrl.u32 %v1929, 7
      %v1931 = vsub.s32 3, %v1930
      %v1932 = vrot.slane %v1927, %v1931
      %v1935 = vunpack.c.l.b16 %v1925
      %v1936 = vunpack.c.l.b16 %v1932
      %v1937 = vpack.c.b16 %v1936, %v1935
      %1938 = vrot.lane.b32.xlu0 %v1937, 15
      %v1939 = vpop.permute.xlu0 %1938
      %v1940 = vrot.slane %v1939, 4
      %v1941 = vsel %vm1010, %v1940, %v1939
      %v1944 = vmul.bf16 %v1911, %v1941
      %v1945 = vmul.bf16 %v1912, %v1940
      %v1948 = vunpack.c.l.b16 %v1944
      %v1949 = vunpack.c.h.b16 %v1944
      %v1950 = vunpack.c.l.b16 %v1945
      %v1951 = vpack.c.b16 %v1948, %v1948
      %v1952 = vpack.c.b16 %v1949, %v1949
      %v1953 = vpack.c.b16 %v1950, %v1950
      %1954 = vrot.lane.b32.xlu0 %v1951, 113
      %v1955 = vpop.permute.xlu0 %1954
      %1956 = vrot.lane.b32.xlu0 %v1952, 113
      %v1957 = vpop.permute.xlu0 %1956
      %1958 = vrot.lane.b32.xlu0 %v1953, 113
      %v1959 = vpop.permute.xlu0 %1958
      %v1960 = vsel %vm976, %v1955, %v1957
      %v1961 = vsel %vm976, %v1957, %v1959
      %1964 = vst [vmem:[#allocation15 + $0x30] sm:$0xf] %v1960
      %1965 = vst [vmem:[#allocation15 + $0x38] sm:$0xf] %v1961
      %v1966 = vld [vmem:[#allocation3 + $0x4] sm:$0xff]
      %v1967 = vld [vmem:[#allocation3 + $0xc] sm:$0xf]
      %v1968 = vld [vmem:[%s11] sm:$0x88]
      %v1970 = vunpack.c.l.b16 %v1968
      %v1971 = vunpack.c.h.b16 %v1968
      %v1972 = vpack.c.b16 %v1970, %v1970
      %v1973 = vpack.c.b16 %v1971, %v1971
      %v1975 = vshrl.u32 %v1972, 16
      %v1976 = vpack.i.b16 %v1975, %v1975
      %v1978 = vlaneseq
      %v1979 = vshrl.u32 %v1978, 7
      %v1980 = vsub.s32 3, %v1979
      %v1981 = vrot.slane %v1976, %v1980
      %v1983 = vshrl.u32 %v1973, 16
      %v1984 = vpack.i.b16 %v1983, %v1983
      %v1986 = vlaneseq
      %v1987 = vshrl.u32 %v1986, 7
      %v1988 = vsub.s32 3, %v1987
      %v1989 = vrot.slane %v1984, %v1988
      %v1992 = vunpack.c.l.b16 %v1981
      %v1993 = vunpack.c.l.b16 %v1989
      %v1994 = vpack.c.b16 %v1993, %v1992
      %1995 = vrot.lane.b32.xlu0 %v1994, 16
      %v1996 = vpop.permute.xlu0 %1995
      %v1997 = vrot.slane %v1996, 4
      %v1998 = vsel %vm928, %v1997, %v1996
      %v2001 = vmul.bf16 %v1966, %v1998
      %v2002 = vmul.bf16 %v1967, %v1997
      %v2005 = vunpack.c.l.b16 %v2001
      %v2006 = vunpack.c.h.b16 %v2001
      %v2007 = vunpack.c.l.b16 %v2002
      %v2008 = vpack.c.b16 %v2005, %v2005
      %v2009 = vpack.c.b16 %v2006, %v2006
      %v2010 = vpack.c.b16 %v2007, %v2007
      %2011 = vrot.lane.b32.xlu0 %v2008, 112
      %v2012 = vpop.permute.xlu0 %2011
      %2013 = vrot.lane.b32.xlu0 %v2009, 112
      %v2014 = vpop.permute.xlu0 %2013
      %2015 = vrot.lane.b32.xlu0 %v2010, 112
      %v2016 = vpop.permute.xlu0 %2015
      %v2017 = vsel %vm893, %v2012, %v2014
      %v2018 = vsel %vm893, %v2014, %v2016
      %2021 = vst [vmem:[#allocation15 + $0x30] sm:$0xf0] %v2017
      %2022 = vst [vmem:[#allocation15 + $0x38] sm:$0xf0] %v2018
      %v2023 = vld [vmem:[#allocation3 + $0x4] sm:$0xff]
      %v2024 = vld [vmem:[#allocation3 + $0xc] sm:$0xf]
      %v2025 = vld [vmem:[%s11 + $0x8] sm:$0x11]
      %v2027 = vunpack.c.l.b16 %v2025
      %v2028 = vunpack.c.h.b16 %v2025
      %v2029 = vpack.c.b16 %v2027, %v2027
      %v2030 = vpack.c.b16 %v2028, %v2028
      %v2032 = vpack.i.b16 %v2029, %v2029
      %v2034 = vlaneseq
      %v2035 = vshrl.u32 %v2034, 7
      %v2036 = vsub.s32 0, %v2035
      %v2037 = vrot.slane %v2032, %v2036
      %v2039 = vpack.i.b16 %v2030, %v2030
      %v2041 = vlaneseq
      %v2042 = vshrl.u32 %v2041, 7
      %v2043 = vsub.s32 0, %v2042
      %v2044 = vrot.slane %v2039, %v2043
      %v2047 = vunpack.c.l.b16 %v2037
      %v2048 = vunpack.c.l.b16 %v2044
      %v2049 = vpack.c.b16 %v2048, %v2047
      %2050 = vrot.lane.b32.xlu0 %v2049, 17
      %v2051 = vpop.permute.xlu0 %2050
      %v2052 = vrot.slane %v2051, 4
      %v2053 = vsel %vm843, %v2052, %v2051
      %v2056 = vmul.bf16 %v2023, %v2053
      %v2057 = vmul.bf16 %v2024, %v2052
      %v2060 = vunpack.c.l.b16 %v2056
      %v2061 = vunpack.c.h.b16 %v2056
      %v2062 = vunpack.c.l.b16 %v2057
      %v2063 = vpack.c.b16 %v2060, %v2060
      %v2064 = vpack.c.b16 %v2061, %v2061
      %v2065 = vpack.c.b16 %v2062, %v2062
      %2066 = vrot.lane.b32.xlu0 %v2063, 111
      %v2067 = vpop.permute.xlu0 %2066
      %2068 = vrot.lane.b32.xlu0 %v2064, 111
      %v2069 = vpop.permute.xlu0 %2068
      %2070 = vrot.lane.b32.xlu0 %v2065, 111
      %v2071 = vpop.permute.xlu0 %2070
      %v2072 = vsel %vm809, %v2067, %v2069
      %v2073 = vsel %vm809, %v2069, %v2071
      %2076 = vst [vmem:[#allocation15 + $0x40] sm:$0xf] %v2072
      %2077 = vst [vmem:[#allocation15 + $0x48] sm:$0xf] %v2073
      %v2078 = vld [vmem:[%s3] sm:$0xf]
      %v2079 = vld [vmem:[#allocation15] sm:$0xff]
      %v2080 = vld [vmem:[#allocation15 + $0x8] sm:$0xff]
      %v2081 = vld [vmem:[#allocation15 + $0x10] sm:$0xff]
      %v2082 = vld [vmem:[#allocation15 + $0x18] sm:$0xff]
      %v2083 = vld [vmem:[#allocation15 + $0x20] sm:$0xff]
      %v2084 = vld [vmem:[#allocation15 + $0x28] sm:$0xff]
      %v2085 = vld [vmem:[#allocation15 + $0x30] sm:$0xff]
      %v2086 = vld [vmem:[#allocation15 + $0x38] sm:$0xff]
      %v2087 = vld [vmem:[#allocation15 + $0x40] sm:$0xf]
      %v2088 = vld [vmem:[#allocation15 + $0x48] sm:$0xf]
      %v2089 = vld [vmem:[%s4] sm:$0xff]
      %2091 = vset.pattern.permute.xlu0 0
      %2092 = vperm.xlu0 %2091, %v2089
      %v2093 = vpop.permute.xlu0 %2092
      %vm2095 = vcmask 588800
      %v2097 = vsel %vm2095, %v2078, 0
      %vm2099 = vcmask 1043456
      %v2101 = vsel %vm2099, %v2087, 0
      %v2104 = vsel %vm2099, %v2088, 0
      %2106 = vmatprep.subr.bf16.mxu0 %v2080
      %2107 = vmatpush1.bf16.msra.mxu0 %v2079
      %2108 = vmatprep.subr.bf16.mxu0 %v2082
      %2109 = vmatpush1.bf16.msra.mxu0 %v2081
      %2110 = vmatprep.subr.bf16.mxu0 %v2084
      %2111 = vmatpush1.bf16.msra.mxu0 %v2083
      %2112 = vmatprep.subr.bf16.mxu0 %v2086
      %2113 = vmatpush1.bf16.msra.mxu0 %v2085
      %2114 = vmatprep.subr.bf16.mxu0 %v2104
      %2115 = vmatpush1.bf16.msra.mxu0 %v2101
      %2116 = vmatprep.subr.bf16.mxu0 0
      %2117 = vmatpush1.bf16.msra.mxu0 0
      %2118 = vmatprep.subr.bf16.mxu0 0
      %2119 = vmatpush1.bf16.msra.mxu0 0
      %2120 = vmatprep.subr.bf16.mxu0 0
      %2121 = vmatpush1.bf16.msra.mxu0 0
      %2122 = vmatprep.subr.bf16.mxu0 0
      %2123 = vmatpush1.bf16.msra.mxu0 0
      %2124 = vmatprep.subr.bf16.mxu0 0
      %2125 = vmatpush1.bf16.msra.mxu0 0
      %2126 = vmatprep.subr.bf16.mxu0 0
      %2127 = vmatpush1.bf16.msra.mxu0 0
      %2128 = vmatprep.subr.bf16.mxu0 0
      %2129 = vmatpush1.bf16.msra.mxu0 0
      %2130 = vmatprep.subr.bf16.mxu0 0
      %2131 = vmatpush1.bf16.msra.mxu0 0
      %2132 = vmatprep.subr.bf16.mxu0 0
      %2133 = vmatpush1.bf16.msra.mxu0 0
      %2134 = vmatprep.subr.bf16.mxu0 0
      %2135 = vmatpush1.bf16.msra.mxu0 0
      %2136 = vmatprep.subr.bf16.mxu0 0
      %2137 = vmatpush1.bf16.msra.mxu0 0
      %2138 = vmatprep.mubr.bf16.mxu0 0
      %2139 = vmatmul.mubr.bf16.gmra.mrb[0].mxu0 %v2097
      %v2140 = vpop.f32.mrb[0].mxu0
      %v2141 = vadd.f32 %v2093, %v2140
      %v2142 = vpop.f32.mrb[0].mxu0
      %v2143 = vadd.f32 %v2093, %v2142
      %v2144 = vpop.f32.mrb[0].mxu0
      %v2145 = vpop.f32.mrb[0].mxu0
      %2146 = vdwg.mxu0
      %v2147 = vld [vmem:[#allocation5] sm:$0xff]
      %v2148 = vunpack.c.l.bf16 %v2147
      %v2149 = vunpack.c.h.bf16 %v2147
      %v2150 = vld [vmem:[#allocation6] sm:$0xff]
      %v2151 = vld [vmem:[#allocation6 + $0x8] sm:$0xff]
      %v2152 = vsub.f32 1.0, %v2148
      %v2153 = vsub.f32 1.0, %v2149
      %v2154 = vmul.f32 %v2152, 0.1
      %v2155 = vmul.f32 %v2153, 0.1
      %v2156 = vmul.f32 %v2150, %v2154
      %v2157 = vmul.f32 %v2151, %v2155
      %v2158 = vadd.f32 %v2156, %v2141
      %v2159 = vadd.f32 %v2157, %v2143
      %2160 = vst [vmem:[#allocation6] sm:$0xff] %v2158
      %2161 = vst [vmem:[#allocation6 + $0x8] sm:$0xff] %v2159
      %vm2162 = vcmp.gt.f32.partialorder %v2158, 0.25
      %vm2163 = vcmp.gt.f32.partialorder %v2159, 0.25
      %v2164 = vsel %vm2162, 1, 0
      %v2165 = vsel %vm2163, 1, 0
      %v2166 = vcvt.s32.f32 %v2164
      %v2167 = vcvt.s32.f32 %v2165
      %v2168 = vpack.c.bf16 %v2166, %v2166
      %v2169 = vpack.c.bf16 %v2167, %v2167
      %v2172 = vunpack.c.l.b16 %v2168
      %v2173 = vunpack.c.l.b16 %v2169
      %v2174 = vpack.c.b16 %v2173, %v2172
      %2176 = vst [vmem:[#allocation5] sm:$0xff] %v2174
      %v2177 = vld [vmem:[#allocation5] sm:$0xff]
      %v2178 = vld [vmem:[%s14] sm:$0xf]
      %v2179 = vld [vmem:[%s14 + $0x4] sm:$0xf]
      %v2180 = vld [vmem:[%s14 + $0x8] sm:$0xf]
      %v2181 = vld [vmem:[%s14 + $0xc] sm:$0xf]
      %v2182 = vld [vmem:[%s14 + $0x10] sm:$0xf]
      %v2183 = vld [vmem:[%s14 + $0x14] sm:$0xf]
      %v2184 = vld [vmem:[%s14 + $0x18] sm:$0xf]
      %v2185 = vld [vmem:[%s14 + $0x1c] sm:$0xf]
      %v2186 = vld [vmem:[%s14 + $0x20] sm:$0xf]
      %v2187 = vld [vmem:[%s14 + $0x24] sm:$0xf]
      %v2188 = vld [vmem:[%s14 + $0x28] sm:$0xf]
      %v2189 = vld [vmem:[%s14 + $0x2c] sm:$0xf]
      %v2190 = vld [vmem:[%s14 + $0x30] sm:$0xf]
      %v2191 = vld [vmem:[%s14 + $0x34] sm:$0xf]
      %v2192 = vld [vmem:[%s14 + $0x38] sm:$0xf]
      %v2193 = vld [vmem:[%s14 + $0x3c] sm:$0xf]
      %v2194 = vld [vmem:[%s14 + $0x40] sm:$0xf]
      %v2195 = vld [vmem:[%s14 + $0x44] sm:$0xf]
      %v2196 = vld [vmem:[%s14 + $0x48] sm:$0xf]
      %v2197 = vld [vmem:[%s14 + $0x4c] sm:$0xf]
      %v2198 = vld [vmem:[%s14 + $0x50] sm:$0xf]
      %v2199 = vld [vmem:[%s14 + $0x54] sm:$0xf]
      %v2200 = vld [vmem:[%s14 + $0x58] sm:$0xf]
      %v2201 = vld [vmem:[%s14 + $0x5c] sm:$0xf]
      %v2202 = vld [vmem:[%s14 + $0x60] sm:$0xf]
      %v2203 = vld [vmem:[%s14 + $0x64] sm:$0xf]
      %v2204 = vld [vmem:[%s14 + $0x68] sm:$0xf]
      %v2205 = vld [vmem:[%s14 + $0x6c] sm:$0xf]
      %v2206 = vld [vmem:[%s14 + $0x70] sm:$0xf]
      %v2207 = vld [vmem:[%s14 + $0x74] sm:$0xf]
      %v2208 = vld [vmem:[%s14 + $0x78] sm:$0xf]
      %v2209 = vld [vmem:[%s14 + $0x7c] sm:$0xf]
      %v2211 = vunpack.c.l.b16 %v2177
      %v2212 = vunpack.c.h.b16 %v2177
      %v2213 = vpack.c.b16 %v2211, %v2211
      %v2214 = vpack.c.b16 %v2212, %v2212
      %v2249 = vunpack.c.l.b16 %v2178
      %v2250 = vunpack.c.l.b16 %v2179
      %v2251 = vunpack.c.l.b16 %v2180
      %v2252 = vunpack.c.l.b16 %v2181
      %v2253 = vunpack.c.l.b16 %v2182
      %v2254 = vunpack.c.l.b16 %v2183
      %v2255 = vunpack.c.l.b16 %v2184
      %v2256 = vunpack.c.l.b16 %v2185
      %v2257 = vunpack.c.l.b16 %v2186
      %v2258 = vunpack.c.l.b16 %v2187
      %v2259 = vunpack.c.l.b16 %v2188
      %v2260 = vunpack.c.l.b16 %v2189
      %v2261 = vunpack.c.l.b16 %v2190
      %v2262 = vunpack.c.l.b16 %v2191
      %v2263 = vunpack.c.l.b16 %v2192
      %v2264 = vunpack.c.l.b16 %v2193
      %v2265 = vunpack.c.l.b16 %v2194
      %v2266 = vunpack.c.l.b16 %v2195
      %v2267 = vunpack.c.l.b16 %v2196
      %v2268 = vunpack.c.l.b16 %v2197
      %v2269 = vunpack.c.l.b16 %v2198
      %v2270 = vunpack.c.l.b16 %v2199
      %v2271 = vunpack.c.l.b16 %v2200
      %v2272 = vunpack.c.l.b16 %v2201
      %v2273 = vunpack.c.l.b16 %v2202
      %v2274 = vunpack.c.l.b16 %v2203
      %v2275 = vunpack.c.l.b16 %v2204
      %v2276 = vunpack.c.l.b16 %v2205
      %v2277 = vunpack.c.l.b16 %v2206
      %v2278 = vunpack.c.l.b16 %v2207
      %v2279 = vunpack.c.l.b16 %v2208
      %v2280 = vunpack.c.l.b16 %v2209
      %v2281 = vpack.c.b16 %v2250, %v2249
      %v2282 = vpack.c.b16 %v2252, %v2251
      %v2283 = vpack.c.b16 %v2254, %v2253
      %v2284 = vpack.c.b16 %v2256, %v2255
      %v2285 = vpack.c.b16 %v2258, %v2257
      %v2286 = vpack.c.b16 %v2260, %v2259
      %v2287 = vpack.c.b16 %v2262, %v2261
      %v2288 = vpack.c.b16 %v2264, %v2263
      %v2289 = vpack.c.b16 %v2266, %v2265
      %v2290 = vpack.c.b16 %v2268, %v2267
      %v2291 = vpack.c.b16 %v2270, %v2269
      %v2292 = vpack.c.b16 %v2272, %v2271
      %v2293 = vpack.c.b16 %v2274, %v2273
      %v2294 = vpack.c.b16 %v2276, %v2275
      %v2295 = vpack.c.b16 %v2278, %v2277
      %v2296 = vpack.c.b16 %v2280, %v2279
      %2313 = vmatprep.subr.bf16.mxu0 0
      %2314 = vmatpush1.bf16.msra.mxu0 %v2281
      %2315 = vmatprep.subr.bf16.mxu0 0
      %2316 = vmatpush1.bf16.msra.mxu0 %v2282
      %2317 = vmatprep.subr.bf16.mxu0 0
      %2318 = vmatpush1.bf16.msra.mxu0 %v2283
      %2319 = vmatprep.subr.bf16.mxu0 0
      %2320 = vmatpush1.bf16.msra.mxu0 %v2284
      %2321 = vmatprep.subr.bf16.mxu0 0
      %2322 = vmatpush1.bf16.msra.mxu0 %v2285
      %2323 = vmatprep.subr.bf16.mxu0 0
      %2324 = vmatpush1.bf16.msra.mxu0 %v2286
      %2325 = vmatprep.subr.bf16.mxu0 0
      %2326 = vmatpush1.bf16.msra.mxu0 %v2287
      %2327 = vmatprep.subr.bf16.mxu0 0
      %2328 = vmatpush1.bf16.msra.mxu0 %v2288
      %2329 = vmatprep.subr.bf16.mxu0 0
      %2330 = vmatpush1.bf16.msra.mxu0 %v2289
      %2331 = vmatprep.subr.bf16.mxu0 0
      %2332 = vmatpush1.bf16.msra.mxu0 %v2290
      %2333 = vmatprep.subr.bf16.mxu0 0
      %2334 = vmatpush1.bf16.msra.mxu0 %v2291
      %2335 = vmatprep.subr.bf16.mxu0 0
      %2336 = vmatpush1.bf16.msra.mxu0 %v2292
      %2337 = vmatprep.subr.bf16.mxu0 0
      %2338 = vmatpush1.bf16.msra.mxu0 %v2293
      %2339 = vmatprep.subr.bf16.mxu0 0
      %2340 = vmatpush1.bf16.msra.mxu0 %v2294
      %2341 = vmatprep.subr.bf16.mxu0 0
      %2342 = vmatpush1.bf16.msra.mxu0 %v2295
      %2343 = vmatprep.subr.bf16.mxu0 0
      %2344 = vmatpush1.bf16.msra.mxu0 %v2296
      %2345 = vmatprep.mubr.bf16.mxu0 %v2214
      %2346 = vmatmul.mubr.bf16.gmra.mrb[0].mxu0 %v2213
      %v2347 = vpop.f32.mrb[0].mxu0
      %v2348 = vadd.f32 0.0, %v2347
      %v2349 = vpop.f32.mrb[0].mxu0
      %v2350 = vpop.f32.mrb[0].mxu0
      %v2351 = vpop.f32.mrb[0].mxu0
      %2352 = vdwg.mxu0
      %v2353 = vpack.c.bf16 %v2348, %v2348
      %vm2354 = vcmask 519168
      %2355 = vst.msk [vmem:[#allocation7 + $0x4] sm:$0xf] %vm2354, %v2353
      %v2356 = vld [vmem:[#allocation7] sm:$0xff]
      %v2357 = vld [vmem:[%s12] sm:$0x1]
      %v2359 = vpack.i.b16 %v2357, %v2357
      %v2361 = vlaneseq
      %v2362 = vshrl.u32 %v2361, 7
      %v2363 = vsub.s32 0, %v2362
      %v2364 = vrot.slane %v2359, %v2363
      %v2366 = vunpack.c.l.b16 %v2364
      %v2367 = vpack.c.b16 %v2366, %v2366
      %2368 = vrot.lane.b32.xlu0 %v2367, 119
      %v2369 = vpop.permute.xlu0 %2368
      %v2370 = vrot.slane %v2369, 4
      %vm2371 = vcmask 973824
      %v2372 = vsel %vm2371, %v2370, %v2369
      %v2374 = vmul.bf16 %v2356, %v2372
      %v2376 = vunpack.c.l.b16 %v2374
      %v2377 = vunpack.c.h.b16 %v2374
      %v2378 = vpack.c.b16 %v2376, %v2376
      %v2379 = vpack.c.b16 %v2377, %v2377
      %2380 = vrot.lane.b32.xlu0 %v2378, 9
      %v2381 = vpop.permute.xlu0 %2380
      %2382 = vrot.lane.b32.xlu0 %v2379, 9
      %v2383 = vpop.permute.xlu0 %2382
      %vm2384 = vcmask 72704
      %v2385 = vsel %vm2384, %v2381, %v2383
      %2387 = vst.msk [vmem:[#allocation15] sm:$0xf] %vm2354, %v2385
      %v2388 = vld [vmem:[#allocation7] sm:$0xff]
      %v2389 = vld [vmem:[%s12] sm:$0x1]
      %v2391 = vshrl.u32 %v2389, 16
      %v2392 = vpack.i.b16 %v2391, %v2391
      %v2394 = vlaneseq
      %v2395 = vshrl.u32 %v2394, 7
      %v2396 = vsub.s32 0, %v2395
      %v2397 = vrot.slane %v2392, %v2396
      %v2399 = vunpack.c.l.b16 %v2397
      %v2400 = vpack.c.b16 %v2399, %v2399
      %2401 = vrot.lane.b32.xlu0 %v2400, 120
      %v2402 = vpop.permute.xlu0 %2401
      %v2403 = vrot.slane %v2402, 4
      %vm2404 = vcmask 982016
      %v2405 = vsel %vm2404, %v2403, %v2402
      %v2407 = vmul.bf16 %v2388, %v2405
      %v2409 = vunpack.c.l.b16 %v2407
      %v2410 = vunpack.c.h.b16 %v2407
      %v2411 = vpack.c.b16 %v2409, %v2409
      %v2412 = vpack.c.b16 %v2410, %v2410
      %2413 = vrot.lane.b32.xlu0 %v2411, 8
      %v2414 = vpop.permute.xlu0 %2413
      %2415 = vrot.lane.b32.xlu0 %v2412, 8
      %v2416 = vpop.permute.xlu0 %2415
      %vm2417 = vcmask 64512
      %v2418 = vsel %vm2417, %v2414, %v2416
      %vm2420 = vcmask 523268
      %2421 = vst.msk [vmem:[#allocation15] sm:$0xf0] %vm2420, %v2418
      %v2422 = vld [vmem:[#allocation7] sm:$0xff]
      %v2423 = vld [vmem:[%s12] sm:$0x2]
      %v2425 = vpack.i.b16 %v2423, %v2423
      %v2427 = vlaneseq
      %v2428 = vshrl.u32 %v2427, 7
      %v2429 = vsub.s32 1, %v2428
      %v2430 = vrot.slane %v2425, %v2429
      %v2432 = vunpack.c.l.b16 %v2430
      %v2433 = vpack.c.b16 %v2432, %v2432
      %2434 = vrot.lane.b32.xlu0 %v2433, 121
      %v2435 = vpop.permute.xlu0 %2434
      %v2436 = vrot.slane %v2435, 4
      %vm2437 = vcmask 990208
      %v2438 = vsel %vm2437, %v2436, %v2435
      %v2440 = vmul.bf16 %v2422, %v2438
      %v2442 = vunpack.c.l.b16 %v2440
      %v2443 = vunpack.c.h.b16 %v2440
      %v2444 = vpack.c.b16 %v2442, %v2442
      %v2445 = vpack.c.b16 %v2443, %v2443
      %2446 = vrot.lane.b32.xlu0 %v2444, 7
      %v2447 = vpop.permute.xlu0 %2446
      %2448 = vrot.lane.b32.xlu0 %v2445, 7
      %v2449 = vpop.permute.xlu0 %2448
      %vm2450 = vcmask 56320
      %v2451 = vsel %vm2450, %v2447, %v2449
      %2453 = vst.msk [vmem:[#allocation15 + $0x10] sm:$0xf] %vm2354, %v2451
      %v2454 = vld [vmem:[#allocation7] sm:$0xff]
      %v2455 = vld [vmem:[%s12] sm:$0x2]
      %v2457 = vshrl.u32 %v2455, 16
      %v2458 = vpack.i.b16 %v2457, %v2457
      %v2460 = vlaneseq
      %v2461 = vshrl.u32 %v2460, 7
      %v2462 = vsub.s32 1, %v2461
      %v2463 = vrot.slane %v2458, %v2462
      %v2465 = vunpack.c.l.b16 %v2463
      %v2466 = vpack.c.b16 %v2465, %v2465
      %2467 = vrot.lane.b32.xlu0 %v2466, 127
      %v2468 = vpop.permute.xlu0 %2467
      %v2469 = vrot.slane %v2468, 4
      %v2470 = vsel %vm1060, %v2469, %v2468
      %v2472 = vmul.bf16 %v2454, %v2470
      %v2474 = vunpack.c.l.b16 %v2472
      %v2475 = vunpack.c.h.b16 %v2472
      %v2476 = vpack.c.b16 %v2474, %v2474
      %v2477 = vpack.c.b16 %v2475, %v2475
      %2478 = vrot.lane.b32.xlu0 %v2476, 1
      %v2479 = vpop.permute.xlu0 %2478
      %2480 = vrot.lane.b32.xlu0 %v2477, 1
      %v2481 = vpop.permute.xlu0 %2480
      %v2482 = vsel %vm1095, %v2479, %v2481
      %2484 = vst.msk [vmem:[#allocation15 + $0x10] sm:$0xf0] %vm2420, %v2482
      %v2485 = vld [vmem:[#allocation7 + $0x4] sm:$0xf]
      %v2486 = vld [vmem:[%s12] sm:$0x4]
      %v2488 = vpack.i.b16 %v2486, %v2486
      %v2490 = vlaneseq
      %v2491 = vshrl.u32 %v2490, 7
      %v2492 = vsub.s32 2, %v2491
      %v2493 = vrot.slane %v2488, %v2492
      %v2494 = vmul.bf16 %v2485, %v2493
      %2495 = vst.msk [vmem:[#allocation15 + $0x20] sm:$0xf] %vm2354, %v2494
      %v2496 = vld [vmem:[#allocation7 + $0x4] sm:$0xf]
      %v2497 = vld [vmem:[%s12] sm:$0x4]
      %v2499 = vshrl.u32 %v2497, 16
      %v2500 = vpack.i.b16 %v2499, %v2499
      %v2502 = vlaneseq
      %v2503 = vshrl.u32 %v2502, 7
      %v2504 = vsub.s32 2, %v2503
      %v2505 = vrot.slane %v2500, %v2504
      %v2507 = vunpack.c.l.b16 %v2505
      %v2508 = vpack.c.b16 %v2507, %v2507
      %2509 = vrot.lane.b32.xlu0 %v2508, 1
      %v2510 = vpop.permute.xlu0 %2509
      %v2512 = vmul.bf16 %v2496, %v2510
      %v2514 = vunpack.c.l.b16 %v2512
      %v2515 = vpack.c.b16 %v2514, %v2514
      %2516 = vrot.lane.b32.xlu0 %v2515, 127
      %v2517 = vpop.permute.xlu0 %2516
      %2519 = vst.msk [vmem:[#allocation15 + $0x20] sm:$0xf0] %vm2420, %v2517
      %v2520 = vld [vmem:[#allocation7 + $0x4] sm:$0xf]
      %v2521 = vld [vmem:[%s12] sm:$0x8]
      %v2523 = vpack.i.b16 %v2521, %v2521
      %v2525 = vlaneseq
      %v2526 = vshrl.u32 %v2525, 7
      %v2527 = vsub.s32 3, %v2526
      %v2528 = vrot.slane %v2523, %v2527
      %v2530 = vunpack.c.l.b16 %v2528
      %v2531 = vpack.c.b16 %v2530, %v2530
      %2532 = vrot.lane.b32.xlu0 %v2531, 7
      %v2533 = vpop.permute.xlu0 %2532
      %v2535 = vmul.bf16 %v2520, %v2533
      %v2537 = vunpack.c.l.b16 %v2535
      %v2538 = vpack.c.b16 %v2537, %v2537
      %2539 = vrot.lane.b32.xlu0 %v2538, 121
      %v2540 = vpop.permute.xlu0 %2539
      %2542 = vst.msk [vmem:[#allocation15 + $0x30] sm:$0xf] %vm2354, %v2540
      %v2543 = vld [vmem:[#allocation7 + $0x4] sm:$0xf]
      %v2544 = vld [vmem:[%s12] sm:$0x8]
      %v2546 = vshrl.u32 %v2544, 16
      %v2547 = vpack.i.b16 %v2546, %v2546
      %v2549 = vlaneseq
      %v2550 = vshrl.u32 %v2549, 7
      %v2551 = vsub.s32 3, %v2550
      %v2552 = vrot.slane %v2547, %v2551
      %v2554 = vunpack.c.l.b16 %v2552
      %v2555 = vpack.c.b16 %v2554, %v2554
      %2556 = vrot.lane.b32.xlu0 %v2555, 8
      %v2557 = vpop.permute.xlu0 %2556
      %v2559 = vmul.bf16 %v2543, %v2557
      %v2561 = vunpack.c.l.b16 %v2559
      %v2562 = vpack.c.b16 %v2561, %v2561
      %2563 = vrot.lane.b32.xlu0 %v2562, 120
      %v2564 = vpop.permute.xlu0 %2563
      %2566 = vst.msk [vmem:[#allocation15 + $0x30] sm:$0xf0] %vm2420, %v2564
      %v2567 = vld [vmem:[#allocation7 + $0x4] sm:$0xf]
      %v2568 = vld [vmem:[%s12 + $0x4] sm:$0x1]
      %v2570 = vpack.i.b16 %v2568, %v2568
      %v2572 = vlaneseq
      %v2573 = vshrl.u32 %v2572, 7
      %v2574 = vsub.s32 0, %v2573
      %v2575 = vrot.slane %v2570, %v2574
      %v2577 = vunpack.c.l.b16 %v2575
      %v2578 = vpack.c.b16 %v2577, %v2577
      %2579 = vrot.lane.b32.xlu0 %v2578, 9
      %v2580 = vpop.permute.xlu0 %2579
      %v2582 = vmul.bf16 %v2567, %v2580
      %v2584 = vunpack.c.l.b16 %v2582
      %v2585 = vpack.c.b16 %v2584, %v2584
      %2586 = vrot.lane.b32.xlu0 %v2585, 119
      %v2587 = vpop.permute.xlu0 %2586
      %2589 = vst.msk [vmem:[#allocation15 + $0x40] sm:$0xf] %vm2354, %v2587
      %v2590 = vld [vmem:[%s5] sm:$0xf]
      %v2591 = vld [vmem:[%s5 + $0x4] sm:$0xf]
      %v2592 = vld [vmem:[#allocation15] sm:$0xff]
      %v2593 = vld [vmem:[#allocation15 + $0x10] sm:$0xff]
      %v2594 = vld [vmem:[#allocation15 + $0x20] sm:$0xff]
      %v2595 = vld [vmem:[#allocation15 + $0x30] sm:$0xff]
      %v2596 = vld [vmem:[#allocation15 + $0x40] sm:$0xf]
      %v2597 = vld [vmem:[%s6] sm:$0xff]
      %v2598 = vld [vmem:[%s6 + $0x8] sm:$0xff]
      %2600 = vset.pattern.permute.xlu0 0
      %2601 = vperm.xlu0 %2600, %v2597
      %v2602 = vpop.permute.xlu0 %2601
      %2605 = vset.pattern.permute.xlu0 0
      %2606 = vperm.xlu0 %2605, %v2598
      %v2607 = vpop.permute.xlu0 %2606
      %v2611 = vunpack.c.l.b16 %v2590
      %v2612 = vunpack.c.l.b16 %v2591
      %v2613 = vpack.c.b16 %v2612, %v2611
      %v2615 = vsel %vm2095, %v2613, 0
      %v2618 = vsel %vm2099, %v2596, 0
      %2620 = vmatprep.subr.bf16.mxu0 0
      %2621 = vmatpush1.bf16.msra.mxu0 %v2592
      %2622 = vmatprep.subr.bf16.mxu0 0
      %2623 = vmatpush1.bf16.msra.mxu0 %v2593
      %2624 = vmatprep.subr.bf16.mxu0 0
      %2625 = vmatpush1.bf16.msra.mxu0 %v2594
      %2626 = vmatprep.subr.bf16.mxu0 0
      %2627 = vmatpush1.bf16.msra.mxu0 %v2595
      %2628 = vmatprep.subr.bf16.mxu0 0
      %2629 = vmatpush1.bf16.msra.mxu0 %v2618
      %2630 = vmatprep.subr.bf16.mxu0 0
      %2631 = vmatpush1.bf16.msra.mxu0 0
      %2632 = vmatprep.subr.bf16.mxu0 0
      %2633 = vmatpush1.bf16.msra.mxu0 0
      %2634 = vmatprep.subr.bf16.mxu0 0
      %2635 = vmatpush1.bf16.msra.mxu0 0
      %2636 = vmatprep.subr.bf16.mxu0 0
      %2637 = vmatpush1.bf16.msra.mxu0 0
      %2638 = vmatprep.subr.bf16.mxu0 0
      %2639 = vmatpush1.bf16.msra.mxu0 0
      %2640 = vmatprep.subr.bf16.mxu0 0
      %2641 = vmatpush1.bf16.msra.mxu0 0
      %2642 = vmatprep.subr.bf16.mxu0 0
      %2643 = vmatpush1.bf16.msra.mxu0 0
      %2644 = vmatprep.subr.bf16.mxu0 0
      %2645 = vmatpush1.bf16.msra.mxu0 0
      %2646 = vmatprep.subr.bf16.mxu0 0
      %2647 = vmatpush1.bf16.msra.mxu0 0
      %2648 = vmatprep.subr.bf16.mxu0 0
      %2649 = vmatpush1.bf16.msra.mxu0 0
      %2650 = vmatprep.subr.bf16.mxu0 0
      %2651 = vmatpush1.bf16.msra.mxu0 0
      %2652 = vmatprep.mubr.bf16.mxu0 0
      %2653 = vmatmul.mubr.bf16.gmra.mrb[0].mxu0 %v2615
      %v2654 = vpop.f32.mrb[0].mxu0
      %v2655 = vadd.f32 %v2602, %v2654
      %v2656 = vpop.f32.mrb[0].mxu0
      %v2657 = vpop.f32.mrb[0].mxu0
      %v2658 = vadd.f32 %v2607, %v2657
      %v2659 = vpop.f32.mrb[0].mxu0
      %2660 = vdwg.mxu0
      %v2661 = vld [vmem:[#allocation8] sm:$0xff]
      %v2662 = vunpack.c.l.bf16 %v2661
      %v2663 = vunpack.c.h.bf16 %v2661
      %v2664 = vld [vmem:[#allocation9] sm:$0xff]
      %v2665 = vld [vmem:[#allocation9 + $0x8] sm:$0xff]
      %v2666 = vsub.f32 1.0, %v2662
      %v2667 = vsub.f32 1.0, %v2663
      %v2668 = vmul.f32 %v2666, 0.1
      %v2669 = vmul.f32 %v2667, 0.1
      %v2670 = vmul.f32 %v2664, %v2668
      %v2671 = vmul.f32 %v2665, %v2669
      %v2672 = vadd.f32 %v2670, %v2655
      %v2673 = vadd.f32 %v2671, %v2658
      %vm2674 = vcmask 523264
      %2675 = vst.msk [vmem:[#allocation9] sm:$0xff] %vm2674, %v2672
      %2676 = vst.msk [vmem:[#allocation9 + $0x8] sm:$0xff] %vm2674, %v2673
      %vm2677 = vcmp.gt.f32.partialorder %v2672, 0.25
      %vm2678 = vcmp.gt.f32.partialorder %v2673, 0.25
      %v2679 = vsel %vm2677, 1, 0
      %v2680 = vsel %vm2678, 1, 0
      %v2681 = vcvt.s32.f32 %v2679
      %v2682 = vcvt.s32.f32 %v2680
      %v2683 = vpack.c.bf16 %v2682, %v2681
      %2684 = vst.msk [vmem:[#allocation8] sm:$0xff] %vm2674, %v2683
      %v2685 = vld [vmem:[#allocation8] sm:$0xff]
      %v2686 = vld [vmem:[%s15] sm:$0xf]
      %v2687 = vld [vmem:[%s15 + $0x4] sm:$0xf]
      %v2688 = vld [vmem:[%s15 + $0x8] sm:$0xf]
      %v2689 = vld [vmem:[%s15 + $0xc] sm:$0xf]
      %v2690 = vld [vmem:[%s15 + $0x10] sm:$0xf]
      %v2691 = vld [vmem:[%s15 + $0x14] sm:$0xf]
      %v2692 = vld [vmem:[%s15 + $0x18] sm:$0xf]
      %v2693 = vld [vmem:[%s15 + $0x1c] sm:$0xf]
      %v2702 = vunpack.c.l.b16 %v2686
      %v2703 = vunpack.c.l.b16 %v2687
      %v2704 = vunpack.c.l.b16 %v2688
      %v2705 = vunpack.c.l.b16 %v2689
      %v2706 = vunpack.c.l.b16 %v2690
      %v2707 = vunpack.c.l.b16 %v2691
      %v2708 = vunpack.c.l.b16 %v2692
      %v2709 = vunpack.c.l.b16 %v2693
      %v2710 = vpack.c.b16 %v2703, %v2702
      %v2711 = vpack.c.b16 %v2705, %v2704
      %v2712 = vpack.c.b16 %v2707, %v2706
      %v2713 = vpack.c.b16 %v2709, %v2708
      %v2719 = vsel %vm2674, %v2685, 0
      %2721 = vmatprep.subr.bf16.mxu0 0
      %2722 = vmatpush1.bf16.msra.mxu0 %v2710
      %2723 = vmatprep.subr.bf16.mxu0 0
      %2724 = vmatpush1.bf16.msra.mxu0 %v2711
      %2725 = vmatprep.subr.bf16.mxu0 0
      %2726 = vmatpush1.bf16.msra.mxu0 %v2712
      %2727 = vmatprep.subr.bf16.mxu0 0
      %2728 = vmatpush1.bf16.msra.mxu0 %v2713
      %2729 = vmatprep.subr.bf16.mxu0 0
      %2730 = vmatpush1.bf16.msra.mxu0 0
      %2731 = vmatprep.subr.bf16.mxu0 0
      %2732 = vmatpush1.bf16.msra.mxu0 0
      %2733 = vmatprep.subr.bf16.mxu0 0
      %2734 = vmatpush1.bf16.msra.mxu0 0
      %2735 = vmatprep.subr.bf16.mxu0 0
      %2736 = vmatpush1.bf16.msra.mxu0 0
      %2737 = vmatprep.subr.bf16.mxu0 0
      %2738 = vmatpush1.bf16.msra.mxu0 0
      %2739 = vmatprep.subr.bf16.mxu0 0
      %2740 = vmatpush1.bf16.msra.mxu0 0
      %2741 = vmatprep.subr.bf16.mxu0 0
      %2742 = vmatpush1.bf16.msra.mxu0 0
      %2743 = vmatprep.subr.bf16.mxu0 0
      %2744 = vmatpush1.bf16.msra.mxu0 0
      %2745 = vmatprep.subr.bf16.mxu0 0
      %2746 = vmatpush1.bf16.msra.mxu0 0
      %2747 = vmatprep.subr.bf16.mxu0 0
      %2748 = vmatpush1.bf16.msra.mxu0 0
      %2749 = vmatprep.subr.bf16.mxu0 0
      %2750 = vmatpush1.bf16.msra.mxu0 0
      %2751 = vmatprep.subr.bf16.mxu0 0
      %2752 = vmatpush1.bf16.msra.mxu0 0
      %2753 = vmatprep.mubr.bf16.mxu0 0
      %2754 = vmatmul.mubr.bf16.gmra.mrb[0].mxu0 %v2719
      %v2755 = vpop.f32.mrb[0].mxu0
      %v2756 = vadd.f32 0.0, %v2755
      %v2757 = vpop.f32.mrb[0].mxu0
      %v2758 = vpop.f32.mrb[0].mxu0
      %v2759 = vadd.f32 0.0, %v2758
      %v2760 = vpop.f32.mrb[0].mxu0
      %2761 = vdwg.mxu0
      %v2762 = vpack.c.bf16 %v2759, %v2756
      %vm2763 = vcmask 130048
      %2764 = vst.msk [vmem:[#allocation10 + $0x8] sm:$0xff] %vm2763, %v2762
      %v2765 = vld [vmem:[#allocation10] sm:$0xff]
      %v2766 = vld [vmem:[#allocation10 + $0x8] sm:$0xff]
      %v2767 = vld [vmem:[%s13] sm:$0x1]
      %v2769 = vpack.i.b16 %v2767, %v2767
      %v2771 = vlaneseq
      %v2772 = vshrl.u32 %v2771, 7
      %v2773 = vsub.s32 0, %v2772
      %v2774 = vrot.slane %v2769, %v2773
      %2776 = vrot.lane.b32.xlu0 %v2774, 123
      %v2777 = vpop.permute.xlu0 %2776
      %v2779 = vmul.bf16 %v2765, %v2777
      %v2780 = vmul.bf16 %v2766, %v2777
      %2783 = vrot.lane.b32.xlu0 %v2779, 5
      %v2784 = vpop.permute.xlu0 %2783
      %2785 = vrot.lane.b32.xlu0 %v2780, 5
      %v2786 = vpop.permute.xlu0 %2785
      %vm2787 = vcmask 39936
      %v2788 = vsel %vm2787, %v2784, %v2786
      %2790 = vst.msk [vmem:[#allocation15] sm:$0xff] %vm2763, %v2788
      %v2791 = vld [vmem:[#allocation10] sm:$0xff]
      %v2792 = vld [vmem:[#allocation10 + $0x8] sm:$0xff]
      %v2793 = vld [vmem:[%s13] sm:$0x1]
      %v2795 = vshrl.u32 %v2793, 16
      %v2796 = vpack.i.b16 %v2795, %v2795
      %v2798 = vlaneseq
      %v2799 = vshrl.u32 %v2798, 7
      %v2800 = vsub.s32 0, %v2799
      %v2801 = vrot.slane %v2796, %v2800
      %2803 = vrot.lane.b32.xlu0 %v2801, 124
      %v2804 = vpop.permute.xlu0 %2803
      %v2806 = vmul.bf16 %v2791, %v2804
      %v2807 = vmul.bf16 %v2792, %v2804
      %2810 = vrot.lane.b32.xlu0 %v2806, 4
      %v2811 = vpop.permute.xlu0 %2810
      %2812 = vrot.lane.b32.xlu0 %v2807, 4
      %v2813 = vpop.permute.xlu0 %2812
      %vm2814 = vcmask 31744
      %v2815 = vsel %vm2814, %v2811, %v2813
      %2817 = vst.msk [vmem:[#allocation15 + $0x10] sm:$0xff] %vm2763, %v2815
      %v2818 = vld [vmem:[#allocation10] sm:$0xff]
      %v2819 = vld [vmem:[#allocation10 + $0x8] sm:$0xff]
      %v2820 = vld [vmem:[%s13] sm:$0x2]
      %v2822 = vpack.i.b16 %v2820, %v2820
      %v2824 = vlaneseq
      %v2825 = vshrl.u32 %v2824, 7
      %v2826 = vsub.s32 1, %v2825
      %v2827 = vrot.slane %v2822, %v2826
      %2829 = vrot.lane.b32.xlu0 %v2827, 125
      %v2830 = vpop.permute.xlu0 %2829
      %v2832 = vmul.bf16 %v2818, %v2830
      %v2833 = vmul.bf16 %v2819, %v2830
      %2836 = vrot.lane.b32.xlu0 %v2832, 3
      %v2837 = vpop.permute.xlu0 %2836
      %2838 = vrot.lane.b32.xlu0 %v2833, 3
      %v2839 = vpop.permute.xlu0 %2838
      %vm2840 = vcmask 23552
      %v2841 = vsel %vm2840, %v2837, %v2839
      %2843 = vst.msk [vmem:[#allocation15 + $0x20] sm:$0xff] %vm2763, %v2841
      %v2844 = vld [vmem:[#allocation10] sm:$0xff]
      %v2845 = vld [vmem:[#allocation10 + $0x8] sm:$0xff]
      %v2846 = vld [vmem:[%s13] sm:$0x2]
      %v2848 = vshrl.u32 %v2846, 16
      %v2849 = vpack.i.b16 %v2848, %v2848
      %v2851 = vlaneseq
      %v2852 = vshrl.u32 %v2851, 7
      %v2853 = vsub.s32 1, %v2852
      %v2854 = vrot.slane %v2849, %v2853
      %2856 = vrot.lane.b32.xlu0 %v2854, 127
      %v2857 = vpop.permute.xlu0 %2856
      %v2859 = vmul.bf16 %v2844, %v2857
      %v2860 = vmul.bf16 %v2845, %v2857
      %2863 = vrot.lane.b32.xlu0 %v2859, 1
      %v2864 = vpop.permute.xlu0 %2863
      %2865 = vrot.lane.b32.xlu0 %v2860, 1
      %v2866 = vpop.permute.xlu0 %2865
      %v2867 = vsel %vm1095, %v2864, %v2866
      %2869 = vst.msk [vmem:[#allocation15 + $0x30] sm:$0xff] %vm2763, %v2867
      %v2870 = vld [vmem:[#allocation10 + $0x8] sm:$0xff]
      %v2871 = vld [vmem:[%s13] sm:$0x4]
      %v2873 = vpack.i.b16 %v2871, %v2871
      %v2875 = vlaneseq
      %v2876 = vshrl.u32 %v2875, 7
      %v2877 = vsub.s32 2, %v2876
      %v2878 = vrot.slane %v2873, %v2877
      %v2879 = vmul.bf16 %v2870, %v2878
      %2880 = vst.msk [vmem:[#allocation15 + $0x40] sm:$0xff] %vm2763, %v2879
      %v2881 = vld [vmem:[#allocation10 + $0x8] sm:$0xff]
      %v2882 = vld [vmem:[%s13] sm:$0x4]
      %v2884 = vshrl.u32 %v2882, 16
      %v2885 = vpack.i.b16 %v2884, %v2884
      %v2887 = vlaneseq
      %v2888 = vshrl.u32 %v2887, 7
      %v2889 = vsub.s32 2, %v2888
      %v2890 = vrot.slane %v2885, %v2889
      %2892 = vrot.lane.b32.xlu0 %v2890, 1
      %v2893 = vpop.permute.xlu0 %2892
      %v2895 = vmul.bf16 %v2881, %v2893
      %2897 = vrot.lane.b32.xlu0 %v2895, 127
      %v2898 = vpop.permute.xlu0 %2897
      %2900 = vst.msk [vmem:[#allocation15 + $0x50] sm:$0xff] %vm2763, %v2898
      %v2901 = vld [vmem:[#allocation10 + $0x8] sm:$0xff]
      %v2902 = vld [vmem:[%s13] sm:$0x8]
      %v2904 = vpack.i.b16 %v2902, %v2902
      %v2906 = vlaneseq
      %v2907 = vshrl.u32 %v2906, 7
      %v2908 = vsub.s32 3, %v2907
      %v2909 = vrot.slane %v2904, %v2908
      %2911 = vrot.lane.b32.xlu0 %v2909, 3
      %v2912 = vpop.permute.xlu0 %2911
      %v2914 = vmul.bf16 %v2901, %v2912
      %2916 = vrot.lane.b32.xlu0 %v2914, 125
      %v2917 = vpop.permute.xlu0 %2916
      %2919 = vst.msk [vmem:[#allocation15 + $0x60] sm:$0xff] %vm2763, %v2917
      %v2920 = vld [vmem:[#allocation10 + $0x8] sm:$0xff]
      %v2921 = vld [vmem:[%s13] sm:$0x8]
      %v2923 = vshrl.u32 %v2921, 16
      %v2924 = vpack.i.b16 %v2923, %v2923
      %v2926 = vlaneseq
      %v2927 = vshrl.u32 %v2926, 7
      %v2928 = vsub.s32 3, %v2927
      %v2929 = vrot.slane %v2924, %v2928
      %2931 = vrot.lane.b32.xlu0 %v2929, 4
      %v2932 = vpop.permute.xlu0 %2931
      %v2934 = vmul.bf16 %v2920, %v2932
      %2936 = vrot.lane.b32.xlu0 %v2934, 124
      %v2937 = vpop.permute.xlu0 %2936
      %2939 = vst.msk [vmem:[#allocation15 + $0x70] sm:$0xff] %vm2763, %v2937
      %v2940 = vld [vmem:[#allocation10 + $0x8] sm:$0xff]
      %v2941 = vld [vmem:[%s13 + $0x4] sm:$0x1]
      %v2943 = vpack.i.b16 %v2941, %v2941
      %v2945 = vlaneseq
      %v2946 = vshrl.u32 %v2945, 7
      %v2947 = vsub.s32 0, %v2946
      %v2948 = vrot.slane %v2943, %v2947
      %2950 = vrot.lane.b32.xlu0 %v2948, 5
      %v2951 = vpop.permute.xlu0 %2950
      %v2953 = vmul.bf16 %v2940, %v2951
      %2955 = vrot.lane.b32.xlu0 %v2953, 123
      %v2956 = vpop.permute.xlu0 %2955
      %2958 = vst.msk [vmem:[#allocation15 + $0x80] sm:$0xff] %vm2763, %v2956
      %v2959 = vld [vmem:[%s7] sm:$0xff]
      %v2960 = vld [vmem:[%s7 + $0x8] sm:$0xff]
      %v2961 = vld [vmem:[#allocation15] sm:$0xff]
      %v2962 = vld [vmem:[#allocation15 + $0x10] sm:$0xff]
      %v2963 = vld [vmem:[#allocation15 + $0x20] sm:$0xff]
      %v2964 = vld [vmem:[#allocation15 + $0x30] sm:$0xff]
      %v2965 = vld [vmem:[#allocation15 + $0x40] sm:$0xff]
      %v2966 = vld [vmem:[#allocation15 + $0x50] sm:$0xff]
      %v2967 = vld [vmem:[#allocation15 + $0x60] sm:$0xff]
      %v2968 = vld [vmem:[#allocation15 + $0x70] sm:$0xff]
      %v2969 = vld [vmem:[#allocation15 + $0x80] sm:$0xff]
      %v2970 = vld [vmem:[%s8] sm:$0xff]
      %v2971 = vld [vmem:[%s8 + $0x8] sm:$0xff]
      %2973 = vset.pattern.permute.xlu0 0
      %2974 = vperm.xlu0 %2973, %v2970
      %v2975 = vpop.permute.xlu0 %2974
      %2978 = vset.pattern.permute.xlu0 0
      %2979 = vperm.xlu0 %2978, %v2971
      %v2980 = vpop.permute.xlu0 %2979
      %v2984 = vunpack.c.l.b16 %v2959
      %v2985 = vunpack.c.h.b16 %v2959
      %v2986 = vunpack.c.l.b16 %v2960
      %v2987 = vunpack.c.h.b16 %v2960
      %v2988 = vpack.c.b16 %v2986, %v2984
      %v2989 = vpack.c.b16 %v2987, %v2985
      %v2992 = vsel %vm2763, %v2989, 0
      %2994 = vmatprep.subr.bf16.mxu0 0
      %2995 = vmatpush1.bf16.msra.mxu0 %v2961
      %2996 = vmatprep.subr.bf16.mxu0 0
      %2997 = vmatpush1.bf16.msra.mxu0 %v2962
      %2998 = vmatprep.subr.bf16.mxu0 0
      %2999 = vmatpush1.bf16.msra.mxu0 %v2963
      %3000 = vmatprep.subr.bf16.mxu0 0
      %3001 = vmatpush1.bf16.msra.mxu0 %v2964
      %3002 = vmatprep.subr.bf16.mxu0 0
      %3003 = vmatpush1.bf16.msra.mxu0 %v2965
      %3004 = vmatprep.subr.bf16.mxu0 0
      %3005 = vmatpush1.bf16.msra.mxu0 %v2966
      %3006 = vmatprep.subr.bf16.mxu0 0
      %3007 = vmatpush1.bf16.msra.mxu0 %v2967
      %3008 = vmatprep.subr.bf16.mxu0 0
      %3009 = vmatpush1.bf16.msra.mxu0 %v2968
      %3010 = vmatprep.subr.bf16.mxu0 0
      %3011 = vmatpush1.bf16.msra.mxu0 %v2969
      %3012 = vmatprep.subr.bf16.mxu0 0
      %3013 = vmatpush1.bf16.msra.mxu0 0
      %3014 = vmatprep.subr.bf16.mxu0 0
      %3015 = vmatpush1.bf16.msra.mxu0 0
      %3016 = vmatprep.subr.bf16.mxu0 0
      %3017 = vmatpush1.bf16.msra.mxu0 0
      %3018 = vmatprep.subr.bf16.mxu0 0
      %3019 = vmatpush1.bf16.msra.mxu0 0
      %3020 = vmatprep.subr.bf16.mxu0 0
      %3021 = vmatpush1.bf16.msra.mxu0 0
      %3022 = vmatprep.subr.bf16.mxu0 0
      %3023 = vmatpush1.bf16.msra.mxu0 0
      %3024 = vmatprep.subr.bf16.mxu0 0
      %3025 = vmatpush1.bf16.msra.mxu0 0
      %3026 = vmatprep.mubr.bf16.mxu0 %v2992
      %3027 = vmatmul.mubr.bf16.gmra.mrb[0].mxu0 %v2988
      %v3028 = vpop.f32.mrb[0].mxu0
      %v3029 = vadd.f32 %v2975, %v3028
      %v3030 = vpop.f32.mrb[0].mxu0
      %v3031 = vpop.f32.mrb[0].mxu0
      %v3032 = vadd.f32 %v2980, %v3031
      %v3033 = vpop.f32.mrb[0].mxu0
      %3034 = vdwg.mxu0
      %v3035 = vld [vmem:[#allocation12 + $0x8] sm:$0xff]
      %v3036 = vunpack.c.l.bf16 %v3035
      %v3037 = vunpack.c.h.bf16 %v3035
      %v3038 = vld [vmem:[#allocation11] sm:$0xff]
      %v3039 = vld [vmem:[#allocation11 + $0x8] sm:$0xff]
      %v3040 = vsub.f32 1.0, %v3036
      %v3041 = vsub.f32 1.0, %v3037
      %v3042 = vmul.f32 %v3040, 0.1
      %v3043 = vmul.f32 %v3041, 0.1
      %v3044 = vmul.f32 %v3038, %v3042
      %v3045 = vmul.f32 %v3039, %v3043
      %v3046 = vadd.f32 %v3044, %v3029
      %v3047 = vadd.f32 %v3045, %v3032
      %3048 = vst.msk [vmem:[#allocation11] sm:$0xff] %vm2763, %v3046
      %3049 = vst.msk [vmem:[#allocation11 + $0x8] sm:$0xff] %vm2763, %v3047
      %vm3050 = vcmp.gt.f32.partialorder %v3046, 0.25
      %vm3051 = vcmp.gt.f32.partialorder %v3047, 0.25
      %v3052 = vsel %vm3050, 1, 0
      %v3053 = vsel %vm3051, 1, 0
      %v3054 = vcvt.s32.f32 %v3052
      %v3055 = vcvt.s32.f32 %v3053
      %v3056 = vpack.c.bf16 %v3055, %v3054
      %3057 = vst.msk [vmem:[#allocation12 + $0x8] sm:$0xff] %vm2763, %v3056
      %v3058 = vld [vmem:[#allocation12] sm:$0xff]
      %v3059 = vld [vmem:[#allocation12 + $0x8] sm:$0xff]
      %v3060 = vld [vmem:[%s13] sm:$0x1]
      %v3062 = vpack.i.b16 %v3060, %v3060
      %v3064 = vlaneseq
      %v3065 = vshrl.u32 %v3064, 7
      %v3066 = vsub.s32 0, %v3065
      %v3067 = vrot.slane %v3062, %v3066
      %3069 = vrot.lane.b32.xlu0 %v3067, 123
      %v3070 = vpop.permute.xlu0 %3069
      %v3072 = vmul.bf16 %v3058, %v3070
      %v3073 = vmul.bf16 %v3059, %v3070
      %3076 = vrot.lane.b32.xlu0 %v3072, 5
      %v3077 = vpop.permute.xlu0 %3076
      %3078 = vrot.lane.b32.xlu0 %v3073, 5
      %v3079 = vpop.permute.xlu0 %3078
      %v3080 = vsel %vm2787, %v3077, %v3079
      %3082 = vst.msk [vmem:[#allocation15] sm:$0xff] %vm2763, %v3080
      %v3083 = vld [vmem:[#allocation12] sm:$0xff]
      %v3084 = vld [vmem:[#allocation12 + $0x8] sm:$0xff]
      %v3085 = vld [vmem:[%s13] sm:$0x1]
      %v3087 = vshrl.u32 %v3085, 16
      %v3088 = vpack.i.b16 %v3087, %v3087
      %v3090 = vlaneseq
      %v3091 = vshrl.u32 %v3090, 7
      %v3092 = vsub.s32 0, %v3091
      %v3093 = vrot.slane %v3088, %v3092
      %3095 = vrot.lane.b32.xlu0 %v3093, 124
      %v3096 = vpop.permute.xlu0 %3095
      %v3098 = vmul.bf16 %v3083, %v3096
      %v3099 = vmul.bf16 %v3084, %v3096
      %3102 = vrot.lane.b32.xlu0 %v3098, 4
      %v3103 = vpop.permute.xlu0 %3102
      %3104 = vrot.lane.b32.xlu0 %v3099, 4
      %v3105 = vpop.permute.xlu0 %3104
      %v3106 = vsel %vm2814, %v3103, %v3105
      %3108 = vst.msk [vmem:[#allocation15 + $0x10] sm:$0xff] %vm2763, %v3106
      %v3109 = vld [vmem:[#allocation12] sm:$0xff]
      %v3110 = vld [vmem:[#allocation12 + $0x8] sm:$0xff]
      %v3111 = vld [vmem:[%s13] sm:$0x2]
      %v3113 = vpack.i.b16 %v3111, %v3111
      %v3115 = vlaneseq
      %v3116 = vshrl.u32 %v3115, 7
      %v3117 = vsub.s32 1, %v3116
      %v3118 = vrot.slane %v3113, %v3117
      %3120 = vrot.lane.b32.xlu0 %v3118, 125
      %v3121 = vpop.permute.xlu0 %3120
      %v3123 = vmul.bf16 %v3109, %v3121
      %v3124 = vmul.bf16 %v3110, %v3121
      %3127 = vrot.lane.b32.xlu0 %v3123, 3
      %v3128 = vpop.permute.xlu0 %3127
      %3129 = vrot.lane.b32.xlu0 %v3124, 3
      %v3130 = vpop.permute.xlu0 %3129
      %v3131 = vsel %vm2840, %v3128, %v3130
      %3133 = vst.msk [vmem:[#allocation15 + $0x20] sm:$0xff] %vm2763, %v3131
      %v3134 = vld [vmem:[#allocation12] sm:$0xff]
      %v3135 = vld [vmem:[#allocation12 + $0x8] sm:$0xff]
      %v3136 = vld [vmem:[%s13] sm:$0x2]
      %v3138 = vshrl.u32 %v3136, 16
      %v3139 = vpack.i.b16 %v3138, %v3138
      %v3141 = vlaneseq
      %v3142 = vshrl.u32 %v3141, 7
      %v3143 = vsub.s32 1, %v3142
      %v3144 = vrot.slane %v3139, %v3143
      %3146 = vrot.lane.b32.xlu0 %v3144, 127
      %v3147 = vpop.permute.xlu0 %3146
      %v3149 = vmul.bf16 %v3134, %v3147
      %v3150 = vmul.bf16 %v3135, %v3147
      %3153 = vrot.lane.b32.xlu0 %v3149, 1
      %v3154 = vpop.permute.xlu0 %3153
      %3155 = vrot.lane.b32.xlu0 %v3150, 1
      %v3156 = vpop.permute.xlu0 %3155
      %v3157 = vsel %vm1095, %v3154, %v3156
      %3159 = vst.msk [vmem:[#allocation15 + $0x30] sm:$0xff] %vm2763, %v3157
      %v3160 = vld [vmem:[#allocation12 + $0x8] sm:$0xff]
      %v3161 = vld [vmem:[%s13] sm:$0x4]
      %v3163 = vpack.i.b16 %v3161, %v3161
      %v3165 = vlaneseq
      %v3166 = vshrl.u32 %v3165, 7
      %v3167 = vsub.s32 2, %v3166
      %v3168 = vrot.slane %v3163, %v3167
      %v3169 = vmul.bf16 %v3160, %v3168
      %3170 = vst.msk [vmem:[#allocation15 + $0x40] sm:$0xff] %vm2763, %v3169
      %v3171 = vld [vmem:[#allocation12 + $0x8] sm:$0xff]
      %v3172 = vld [vmem:[%s13] sm:$0x4]
      %v3174 = vshrl.u32 %v3172, 16
      %v3175 = vpack.i.b16 %v3174, %v3174
      %v3177 = vlaneseq
      %v3178 = vshrl.u32 %v3177, 7
      %v3179 = vsub.s32 2, %v3178
      %v3180 = vrot.slane %v3175, %v3179
      %3182 = vrot.lane.b32.xlu0 %v3180, 1
      %v3183 = vpop.permute.xlu0 %3182
      %v3185 = vmul.bf16 %v3171, %v3183
      %3187 = vrot.lane.b32.xlu0 %v3185, 127
      %v3188 = vpop.permute.xlu0 %3187
      %3190 = vst.msk [vmem:[#allocation15 + $0x50] sm:$0xff] %vm2763, %v3188
      %v3191 = vld [vmem:[#allocation12 + $0x8] sm:$0xff]
      %v3192 = vld [vmem:[%s13] sm:$0x8]
      %v3194 = vpack.i.b16 %v3192, %v3192
      %v3196 = vlaneseq
      %v3197 = vshrl.u32 %v3196, 7
      %v3198 = vsub.s32 3, %v3197
      %v3199 = vrot.slane %v3194, %v3198
      %3201 = vrot.lane.b32.xlu0 %v3199, 3
      %v3202 = vpop.permute.xlu0 %3201
      %v3204 = vmul.bf16 %v3191, %v3202
      %3206 = vrot.lane.b32.xlu0 %v3204, 125
      %v3207 = vpop.permute.xlu0 %3206
      %3209 = vst.msk [vmem:[#allocation15 + $0x60] sm:$0xff] %vm2763, %v3207
      %v3210 = vld [vmem:[#allocation12 + $0x8] sm:$0xff]
      %v3211 = vld [vmem:[%s13] sm:$0x8]
      %v3213 = vshrl.u32 %v3211, 16
      %v3214 = vpack.i.b16 %v3213, %v3213
      %v3216 = vlaneseq
      %v3217 = vshrl.u32 %v3216, 7
      %v3218 = vsub.s32 3, %v3217
      %v3219 = vrot.slane %v3214, %v3218
      %3221 = vrot.lane.b32.xlu0 %v3219, 4
      %v3222 = vpop.permute.xlu0 %3221
      %v3224 = vmul.bf16 %v3210, %v3222
      %3226 = vrot.lane.b32.xlu0 %v3224, 124
      %v3227 = vpop.permute.xlu0 %3226
      %3229 = vst.msk [vmem:[#allocation15 + $0x70] sm:$0xff] %vm2763, %v3227
      %v3230 = vld [vmem:[#allocation12 + $0x8] sm:$0xff]
      %v3231 = vld [vmem:[%s13 + $0x4] sm:$0x1]
      %v3233 = vpack.i.b16 %v3231, %v3231
      %v3235 = vlaneseq
      %v3236 = vshrl.u32 %v3235, 7
      %v3237 = vsub.s32 0, %v3236
      %v3238 = vrot.slane %v3233, %v3237
      %3240 = vrot.lane.b32.xlu0 %v3238, 5
      %v3241 = vpop.permute.xlu0 %3240
      %v3243 = vmul.bf16 %v3230, %v3241
      %3245 = vrot.lane.b32.xlu0 %v3243, 123
      %v3246 = vpop.permute.xlu0 %3245
      %3248 = vst.msk [vmem:[#allocation15 + $0x80] sm:$0xff] %vm2763, %v3246
      %v3249 = vld [vmem:[%s9] sm:$0xff]
      %v3250 = vld [vmem:[%s9 + $0x8] sm:$0xff]
      %v3251 = vld [vmem:[#allocation15] sm:$0xff]
      %v3252 = vld [vmem:[#allocation15 + $0x10] sm:$0xff]
      %v3253 = vld [vmem:[#allocation15 + $0x20] sm:$0xff]
      %v3254 = vld [vmem:[#allocation15 + $0x30] sm:$0xff]
      %v3255 = vld [vmem:[#allocation15 + $0x40] sm:$0xff]
      %v3256 = vld [vmem:[#allocation15 + $0x50] sm:$0xff]
      %v3257 = vld [vmem:[#allocation15 + $0x60] sm:$0xff]
      %v3258 = vld [vmem:[#allocation15 + $0x70] sm:$0xff]
      %v3259 = vld [vmem:[#allocation15 + $0x80] sm:$0xff]
      %v3260 = vld [vmem:[%s10] sm:$0xff]
      %v3261 = vld [vmem:[%s10 + $0x8] sm:$0xff]
      %3263 = vset.pattern.permute.xlu0 0
      %3264 = vperm.xlu0 %3263, %v3260
      %v3265 = vpop.permute.xlu0 %3264
      %3268 = vset.pattern.permute.xlu0 0
      %3269 = vperm.xlu0 %3268, %v3261
      %v3270 = vpop.permute.xlu0 %3269
      %v3274 = vunpack.c.l.b16 %v3249
      %v3275 = vunpack.c.h.b16 %v3249
      %v3276 = vunpack.c.l.b16 %v3250
      %v3277 = vunpack.c.h.b16 %v3250
      %v3278 = vpack.c.b16 %v3276, %v3274
      %v3279 = vpack.c.b16 %v3277, %v3275
      %v3282 = vsel %vm2763, %v3279, 0
      %3284 = vmatprep.subr.bf16.mxu0 0
      %3285 = vmatpush1.bf16.msra.mxu0 %v3251
      %3286 = vmatprep.subr.bf16.mxu0 0
      %3287 = vmatpush1.bf16.msra.mxu0 %v3252
      %3288 = vmatprep.subr.bf16.mxu0 0
      %3289 = vmatpush1.bf16.msra.mxu0 %v3253
      %3290 = vmatprep.subr.bf16.mxu0 0
      %3291 = vmatpush1.bf16.msra.mxu0 %v3254
      %3292 = vmatprep.subr.bf16.mxu0 0
      %3293 = vmatpush1.bf16.msra.mxu0 %v3255
      %3294 = vmatprep.subr.bf16.mxu0 0
      %3295 = vmatpush1.bf16.msra.mxu0 %v3256
      %3296 = vmatprep.subr.bf16.mxu0 0
      %3297 = vmatpush1.bf16.msra.mxu0 %v3257
      %3298 = vmatprep.subr.bf16.mxu0 0
      %3299 = vmatpush1.bf16.msra.mxu0 %v3258
      %3300 = vmatprep.subr.bf16.mxu0 0
      %3301 = vmatpush1.bf16.msra.mxu0 %v3259
      %3302 = vmatprep.subr.bf16.mxu0 0
      %3303 = vmatpush1.bf16.msra.mxu0 0
      %3304 = vmatprep.subr.bf16.mxu0 0
      %3305 = vmatpush1.bf16.msra.mxu0 0
      %3306 = vmatprep.subr.bf16.mxu0 0
      %3307 = vmatpush1.bf16.msra.mxu0 0
      %3308 = vmatprep.subr.bf16.mxu0 0
      %3309 = vmatpush1.bf16.msra.mxu0 0
      %3310 = vmatprep.subr.bf16.mxu0 0
      %3311 = vmatpush1.bf16.msra.mxu0 0
      %3312 = vmatprep.subr.bf16.mxu0 0
      %3313 = vmatpush1.bf16.msra.mxu0 0
      %3314 = vmatprep.subr.bf16.mxu0 0
      %3315 = vmatpush1.bf16.msra.mxu0 0
      %3316 = vmatprep.mubr.bf16.mxu0 %v3282
      %3317 = vmatmul.mubr.bf16.gmra.mrb[0].mxu0 %v3278
      %v3318 = vpop.f32.mrb[0].mxu0
      %v3319 = vadd.f32 %v3265, %v3318
      %v3320 = vpop.f32.mrb[0].mxu0
      %v3321 = vpop.f32.mrb[0].mxu0
      %v3322 = vadd.f32 %v3270, %v3321
      %v3323 = vpop.f32.mrb[0].mxu0
      %3324 = vdwg.mxu0
      %v3325 = vld [vmem:[#allocation14 + $0x8] sm:$0xff]
      %v3326 = vunpack.c.l.bf16 %v3325
      %v3327 = vunpack.c.h.bf16 %v3325
      %v3328 = vld [vmem:[#allocation13] sm:$0xff]
      %v3329 = vld [vmem:[#allocation13 + $0x8] sm:$0xff]
      %v3330 = vsub.f32 1.0, %v3326
      %v3331 = vsub.f32 1.0, %v3327
      %v3332 = vmul.f32 %v3330, 0.1
      %v3333 = vmul.f32 %v3331, 0.1
      %v3334 = vmul.f32 %v3328, %v3332
      %v3335 = vmul.f32 %v3329, %v3333
      %v3336 = vadd.f32 %v3334, %v3319
      %v3337 = vadd.f32 %v3335, %v3322
      %3338 = vst.msk [vmem:[#allocation13] sm:$0xff] %vm2763, %v3336
      %3339 = vst.msk [vmem:[#allocation13 + $0x8] sm:$0xff] %vm2763, %v3337
      %vm3340 = vcmp.gt.f32.partialorder %v3336, 0.25
      %vm3341 = vcmp.gt.f32.partialorder %v3337, 0.25
      %v3342 = vsel %vm3340, 1, 0
      %v3343 = vsel %vm3341, 1, 0
      %v3344 = vcvt.s32.f32 %v3342
      %v3345 = vcvt.s32.f32 %v3343
      %v3346 = vpack.c.bf16 %v3345, %v3344
      %3347 = vst.msk [vmem:[#allocation14 + $0x8] sm:$0xff] %vm2763, %v3346
      %v3348 = vld [vmem:[#allocation14 + $0x8] sm:$0xff]
      %3349 = vst.msk [vmem:[#allocation15] sm:$0xff] %vm2763, %v3348
      %v3350 = vld [vmem:[#allocation14 + $0x8] sm:$0xff]
      %3352 = vrot.lane.b32.xlu0 %v3350, 127
      %v3353 = vpop.permute.xlu0 %3352
      %3355 = vst.msk [vmem:[#allocation15 + $0x10] sm:$0xff] %vm2763, %v3353
      %v3356 = vld [vmem:[#allocation14 + $0x8] sm:$0xff]
      %3358 = vrot.lane.b32.xlu0 %v3356, 126
      %v3359 = vpop.permute.xlu0 %3358
      %3361 = vst.msk [vmem:[#allocation15 + $0x20] sm:$0xff] %vm2763, %v3359
      %v3362 = vld [vmem:[#allocation14 + $0x8] sm:$0xff]
      %3364 = vrot.lane.b32.xlu0 %v3362, 125
      %v3365 = vpop.permute.xlu0 %3364
      %3367 = vst.msk [vmem:[#allocation15 + $0x30] sm:$0xff] %vm2763, %v3365
      %v3368 = vld [vmem:[#allocation14 + $0x8] sm:$0xff]
      %3370 = vrot.lane.b32.xlu0 %v3368, 124
      %v3371 = vpop.permute.xlu0 %3370
      %3373 = vst.msk [vmem:[#allocation15 + $0x40] sm:$0xff] %vm2763, %v3371
      %v3374 = vld [vmem:[#allocation14 + $0x8] sm:$0xff]
      %3376 = vrot.lane.b32.xlu0 %v3374, 123
      %v3377 = vpop.permute.xlu0 %3376
      %3379 = vst.msk [vmem:[#allocation15 + $0x50] sm:$0xff] %vm2763, %v3377
      %v3380 = vld [vmem:[#allocation14 + $0x8] sm:$0xff]
      %3382 = vrot.lane.b32.xlu0 %v3380, 122
      %v3383 = vpop.permute.xlu0 %3382
      %3385 = vst.msk [vmem:[#allocation15 + $0x60] sm:$0xff] %vm2763, %v3383
      %v3386 = vld [vmem:[#allocation14 + $0x8] sm:$0xff]
      %3388 = vrot.lane.b32.xlu0 %v3386, 121
      %v3389 = vpop.permute.xlu0 %3388
      %3391 = vst.msk [vmem:[#allocation15 + $0x70] sm:$0xff] %vm2763, %v3389
      %v3392 = vld [vmem:[#allocation14 + $0x8] sm:$0xff]
      %3394 = vrot.lane.b32.xlu0 %v3392, 120
      %v3395 = vpop.permute.xlu0 %3394
      %3397 = vst.msk [vmem:[#allocation15 + $0x80] sm:$0xff] %vm2763, %v3395
      %v3398 = vld [vmem:[#allocation14 + $0x8] sm:$0xff]
      %3400 = vrot.lane.b32.xlu0 %v3398, 119
      %v3401 = vpop.permute.xlu0 %3400
      %3403 = vst.msk [vmem:[#allocation15 + $0x90] sm:$0xff] %vm2763, %v3401
      %v3404 = vld [vmem:[#allocation14 + $0x8] sm:$0xff]
      %3406 = vrot.lane.b32.xlu0 %v3404, 118
      %v3407 = vpop.permute.xlu0 %3406
      %3409 = vst.msk [vmem:[#allocation15 + $0xa0] sm:$0xff] %vm2763, %v3407
      %v3410 = vld [vmem:[#allocation14 + $0x8] sm:$0xff]
      %3412 = vrot.lane.b32.xlu0 %v3410, 117
      %v3413 = vpop.permute.xlu0 %3412
      %3415 = vst.msk [vmem:[#allocation15 + $0xb0] sm:$0xff] %vm2763, %v3413
      %v3416 = vld [vmem:[#allocation14 + $0x8] sm:$0xff]
      %3418 = vrot.lane.b32.xlu0 %v3416, 116
      %v3419 = vpop.permute.xlu0 %3418
      %3421 = vst.msk [vmem:[#allocation15 + $0xc0] sm:$0xff] %vm2763, %v3419
      %v3422 = vld [vmem:[#allocation14 + $0x8] sm:$0xff]
      %3424 = vrot.lane.b32.xlu0 %v3422, 115
      %v3425 = vpop.permute.xlu0 %3424
      %3427 = vst.msk [vmem:[#allocation15 + $0xd0] sm:$0xff] %vm2763, %v3425
      %v3428 = vld [vmem:[#allocation14 + $0x8] sm:$0xff]
      %3430 = vrot.lane.b32.xlu0 %v3428, 114
      %v3431 = vpop.permute.xlu0 %3430
      %3433 = vst.msk [vmem:[#allocation15 + $0xe0] sm:$0xff] %vm2763, %v3431
      %v3434 = vld [vmem:[#allocation14 + $0x8] sm:$0xff]
      %3436 = vrot.lane.b32.xlu0 %v3434, 113
      %v3437 = vpop.permute.xlu0 %3436
      %3439 = vst.msk [vmem:[#allocation15 + $0xf0] sm:$0xff] %vm2763, %v3437
      %v3440 = vld [vmem:[%s16] sm:$0xff]
      %v3441 = vld [vmem:[%s16 + $0x8] sm:$0xff]
      %v3442 = vld [vmem:[%s16 + $0x10] sm:$0xff]
      %v3443 = vld [vmem:[%s16 + $0x18] sm:$0xff]
      %v3444 = vld [vmem:[%s16 + $0x20] sm:$0xff]
      %v3445 = vld [vmem:[%s16 + $0x28] sm:$0xff]
      %v3446 = vld [vmem:[%s16 + $0x30] sm:$0xff]
      %v3447 = vld [vmem:[%s16 + $0x38] sm:$0xff]
      %v3448 = vld [vmem:[#allocation15] sm:$0xff]
      %v3449 = vld [vmem:[#allocation15 + $0x10] sm:$0xff]
      %v3450 = vld [vmem:[#allocation15 + $0x20] sm:$0xff]
      %v3451 = vld [vmem:[#allocation15 + $0x30] sm:$0xff]
      %v3452 = vld [vmem:[#allocation15 + $0x40] sm:$0xff]
      %v3453 = vld [vmem:[#allocation15 + $0x50] sm:$0xff]
      %v3454 = vld [vmem:[#allocation15 + $0x60] sm:$0xff]
      %v3455 = vld [vmem:[#allocation15 + $0x70] sm:$0xff]
      %v3456 = vld [vmem:[#allocation15 + $0x80] sm:$0xff]
      %v3457 = vld [vmem:[#allocation15 + $0x90] sm:$0xff]
      %v3458 = vld [vmem:[#allocation15 + $0xa0] sm:$0xff]
      %v3459 = vld [vmem:[#allocation15 + $0xb0] sm:$0xff]
      %v3460 = vld [vmem:[#allocation15 + $0xc0] sm:$0xff]
      %v3461 = vld [vmem:[#allocation15 + $0xd0] sm:$0xff]
      %v3462 = vld [vmem:[#allocation15 + $0xe0] sm:$0xff]
      %v3463 = vld [vmem:[#allocation15 + $0xf0] sm:$0xff]
      %v3464 = vld [vmem:[%s17] sm:$0xff]
      %v3465 = vld [vmem:[%s17 + $0x8] sm:$0xff]
      %v3466 = vld [vmem:[%s17 + $0x10] sm:$0xff]
      %v3467 = vld [vmem:[%s17 + $0x18] sm:$0xff]
      %v3468 = vld [vmem:[%s17 + $0x20] sm:$0xff]
      %v3469 = vld [vmem:[%s17 + $0x28] sm:$0xff]
      %v3470 = vld [vmem:[%s17 + $0x30] sm:$0xff]
      %v3471 = vld [vmem:[%s17 + $0x38] sm:$0xff]
      %3473 = vset.pattern.permute.xlu0 0
      %3474 = vperm.xlu0 %3473, %v3464
      %v3475 = vpop.permute.xlu0 %3474
      %3478 = vset.pattern.permute.xlu0 0
      %3479 = vperm.xlu0 %3478, %v3465
      %v3480 = vpop.permute.xlu0 %3479
      %3483 = vset.pattern.permute.xlu0 0
      %3484 = vperm.xlu0 %3483, %v3466
      %v3485 = vpop.permute.xlu0 %3484
      %3488 = vset.pattern.permute.xlu0 0
      %3489 = vperm.xlu0 %3488, %v3467
      %v3490 = vpop.permute.xlu0 %3489
      %3493 = vset.pattern.permute.xlu0 0
      %3494 = vperm.xlu0 %3493, %v3468
      %v3495 = vpop.permute.xlu0 %3494
      %3498 = vset.pattern.permute.xlu0 0
      %3499 = vperm.xlu0 %3498, %v3469
      %v3500 = vpop.permute.xlu0 %3499
      %3503 = vset.pattern.permute.xlu0 0
      %3504 = vperm.xlu0 %3503, %v3470
      %v3505 = vpop.permute.xlu0 %3504
      %3508 = vset.pattern.permute.xlu0 0
      %3509 = vperm.xlu0 %3508, %v3471
      %v3510 = vpop.permute.xlu0 %3509
      %v3520 = vunpack.c.l.b16 %v3440
      %v3521 = vunpack.c.h.b16 %v3440
      %v3522 = vunpack.c.l.b16 %v3441
      %v3523 = vunpack.c.h.b16 %v3441
      %v3524 = vunpack.c.l.b16 %v3442
      %v3525 = vunpack.c.h.b16 %v3442
      %v3526 = vunpack.c.l.b16 %v3443
      %v3527 = vunpack.c.h.b16 %v3443
      %v3528 = vunpack.c.l.b16 %v3444
      %v3529 = vunpack.c.h.b16 %v3444
      %v3530 = vunpack.c.l.b16 %v3445
      %v3531 = vunpack.c.h.b16 %v3445
      %v3532 = vunpack.c.l.b16 %v3446
      %v3533 = vunpack.c.h.b16 %v3446
      %v3534 = vunpack.c.l.b16 %v3447
      %v3535 = vunpack.c.h.b16 %v3447
      %v3536 = vpack.c.b16 %v3522, %v3520
      %v3537 = vpack.c.b16 %v3523, %v3521
      %v3538 = vpack.c.b16 %v3526, %v3524
      %v3539 = vpack.c.b16 %v3527, %v3525
      %v3540 = vpack.c.b16 %v3530, %v3528
      %v3541 = vpack.c.b16 %v3531, %v3529
      %v3542 = vpack.c.b16 %v3534, %v3532
      %v3543 = vpack.c.b16 %v3535, %v3533
      %3552 = vmatprep.subr.bf16.mxu0 0
      %3553 = vmatpush1.bf16.msra.mxu0 %v3448
      %3554 = vmatprep.subr.bf16.mxu0 0
      %3555 = vmatpush1.bf16.msra.mxu0 %v3449
      %3556 = vmatprep.subr.bf16.mxu0 0
      %3557 = vmatpush1.bf16.msra.mxu0 %v3450
      %3558 = vmatprep.subr.bf16.mxu0 0
      %3559 = vmatpush1.bf16.msra.mxu0 %v3451
      %3560 = vmatprep.subr.bf16.mxu0 0
      %3561 = vmatpush1.bf16.msra.mxu0 %v3452
      %3562 = vmatprep.subr.bf16.mxu0 0
      %3563 = vmatpush1.bf16.msra.mxu0 %v3453
      %3564 = vmatprep.subr.bf16.mxu0 0
      %3565 = vmatpush1.bf16.msra.mxu0 %v3454
      %3566 = vmatprep.subr.bf16.mxu0 0
      %3567 = vmatpush1.bf16.msra.mxu0 %v3455
      %3568 = vmatprep.subr.bf16.mxu0 0
      %3569 = vmatpush1.bf16.msra.mxu0 %v3456
      %3570 = vmatprep.subr.bf16.mxu0 0
      %3571 = vmatpush1.bf16.msra.mxu0 %v3457
      %3572 = vmatprep.subr.bf16.mxu0 0
      %3573 = vmatpush1.bf16.msra.mxu0 %v3458
      %3574 = vmatprep.subr.bf16.mxu0 0
      %3575 = vmatpush1.bf16.msra.mxu0 %v3459
      %3576 = vmatprep.subr.bf16.mxu0 0
      %3577 = vmatpush1.bf16.msra.mxu0 %v3460
      %3578 = vmatprep.subr.bf16.mxu0 0
      %3579 = vmatpush1.bf16.msra.mxu0 %v3461
      %3580 = vmatprep.subr.bf16.mxu0 0
      %3581 = vmatpush1.bf16.msra.mxu0 %v3462
      %3582 = vmatprep.subr.bf16.mxu0 0
      %3583 = vmatpush1.bf16.msra.mxu0 %v3463
      %3584 = vmatprep.mubr.bf16.mxu0 %v3537
      %3585 = vmatmul.mubr.bf16.gmra.mrb[0].mxu0 %v3536
      %v3586 = vpop.f32.mrb[0].mxu0
      %v3587 = vadd.f32 %v3475, %v3586
      %v3588 = vpop.f32.mrb[0].mxu0
      %v3589 = vpop.f32.mrb[0].mxu0
      %v3590 = vadd.f32 %v3480, %v3589
      %v3591 = vpop.f32.mrb[0].mxu0
      %3592 = vmatprep.mubr.bf16.mxu0 %v3539
      %3593 = vmatmul.mubr.bf16.gmra.mrb[0].mxu0 %v3538
      %v3594 = vpop.f32.mrb[0].mxu0
      %v3595 = vadd.f32 %v3485, %v3594
      %v3596 = vpop.f32.mrb[0].mxu0
      %v3597 = vpop.f32.mrb[0].mxu0
      %v3598 = vadd.f32 %v3490, %v3597
      %v3599 = vpop.f32.mrb[0].mxu0
      %3600 = vmatprep.mubr.bf16.mxu0 %v3541
      %3601 = vmatmul.mubr.bf16.gmra.mrb[0].mxu0 %v3540
      %v3602 = vpop.f32.mrb[0].mxu0
      %v3603 = vadd.f32 %v3495, %v3602
      %v3604 = vpop.f32.mrb[0].mxu0
      %v3605 = vpop.f32.mrb[0].mxu0
      %v3606 = vadd.f32 %v3500, %v3605
      %v3607 = vpop.f32.mrb[0].mxu0
      %3608 = vmatprep.mubr.bf16.mxu0 %v3543
      %3609 = vmatmul.mubr.bf16.gmra.mrb[0].mxu0 %v3542
      %v3610 = vpop.f32.mrb[0].mxu0
      %v3611 = vadd.f32 %v3505, %v3610
      %v3612 = vpop.f32.mrb[0].mxu0
      %v3613 = vpop.f32.mrb[0].mxu0
      %v3614 = vadd.f32 %v3510, %v3613
      %v3615 = vpop.f32.mrb[0].mxu0
      %3616 = vdwg.mxu0
      %v3617 = vld [vmem:[#allocation17] sm:$0xff]
      %v3618 = vld [vmem:[#allocation17 + $0x8] sm:$0xff]
      %v3619 = vld [vmem:[#allocation17 + $0x10] sm:$0xff]
      %v3620 = vld [vmem:[#allocation17 + $0x18] sm:$0xff]
      %v3621 = vunpack.c.l.bf16 %v3617
      %v3622 = vunpack.c.h.bf16 %v3617
      %v3623 = vunpack.c.l.bf16 %v3618
      %v3624 = vunpack.c.h.bf16 %v3618
      %v3625 = vunpack.c.l.bf16 %v3619
      %v3626 = vunpack.c.h.bf16 %v3619
      %v3627 = vunpack.c.l.bf16 %v3620
      %v3628 = vunpack.c.h.bf16 %v3620
      %v3629 = vld [vmem:[#allocation16] sm:$0xff]
      %v3630 = vld [vmem:[#allocation16 + $0x8] sm:$0xff]
      %v3631 = vld [vmem:[#allocation16 + $0x10] sm:$0xff]
      %v3632 = vld [vmem:[#allocation16 + $0x18] sm:$0xff]
      %v3633 = vld [vmem:[#allocation16 + $0x20] sm:$0xff]
      %v3634 = vld [vmem:[#allocation16 + $0x28] sm:$0xff]
      %v3635 = vld [vmem:[#allocation16 + $0x30] sm:$0xff]
      %v3636 = vld [vmem:[#allocation16 + $0x38] sm:$0xff]
      %v3637 = vsub.f32 1.0, %v3621
      %v3638 = vsub.f32 1.0, %v3622
      %v3639 = vsub.f32 1.0, %v3623
      %v3640 = vsub.f32 1.0, %v3624
      %v3641 = vsub.f32 1.0, %v3625
      %v3642 = vsub.f32 1.0, %v3626
      %v3643 = vsub.f32 1.0, %v3627
      %v3644 = vsub.f32 1.0, %v3628
      %v3645 = vmul.f32 %v3637, 0.1
      %v3646 = vmul.f32 %v3638, 0.1
      %v3647 = vmul.f32 %v3639, 0.1
      %v3648 = vmul.f32 %v3640, 0.1
      %v3649 = vmul.f32 %v3641, 0.1
      %v3650 = vmul.f32 %v3642, 0.1
      %v3651 = vmul.f32 %v3643, 0.1
      %v3652 = vmul.f32 %v3644, 0.1
      %v3653 = vmul.f32 %v3629, %v3645
      %v3654 = vmul.f32 %v3630, %v3646
      %v3655 = vmul.f32 %v3631, %v3647
      %v3656 = vmul.f32 %v3632, %v3648
      %v3657 = vmul.f32 %v3633, %v3649
      %v3658 = vmul.f32 %v3634, %v3650
      %v3659 = vmul.f32 %v3635, %v3651
      %v3660 = vmul.f32 %v3636, %v3652
      %v3661 = vadd.f32 %v3653, %v3587
      %v3662 = vadd.f32 %v3654, %v3590
      %v3663 = vadd.f32 %v3655, %v3595
      %v3664 = vadd.f32 %v3656, %v3598
      %v3665 = vadd.f32 %v3657, %v3603
      %v3666 = vadd.f32 %v3658, %v3606
      %v3667 = vadd.f32 %v3659, %v3611
      %v3668 = vadd.f32 %v3660, %v3614
      %3669 = vst.msk [vmem:[#allocation16] sm:$0xff] %vm2763, %v3661
      %3670 = vst.msk [vmem:[#allocation16 + $0x8] sm:$0xff] %vm2763, %v3662
      %3671 = vst.msk [vmem:[#allocation16 + $0x10] sm:$0xff] %vm2763, %v3663
      %3672 = vst.msk [vmem:[#allocation16 + $0x18] sm:$0xff] %vm2763, %v3664
      %3673 = vst.msk [vmem:[#allocation16 + $0x20] sm:$0xff] %vm2763, %v3665
      %3674 = vst.msk [vmem:[#allocation16 + $0x28] sm:$0xff] %vm2763, %v3666
      %3675 = vst.msk [vmem:[#allocation16 + $0x30] sm:$0xff] %vm2763, %v3667
      %3676 = vst.msk [vmem:[#allocation16 + $0x38] sm:$0xff] %vm2763, %v3668
      %vm3677 = vcmp.gt.f32.partialorder %v3661, 0.25
      %vm3678 = vcmp.gt.f32.partialorder %v3662, 0.25
      %vm3679 = vcmp.gt.f32.partialorder %v3663, 0.25
      %vm3680 = vcmp.gt.f32.partialorder %v3664, 0.25
      %vm3681 = vcmp.gt.f32.partialorder %v3665, 0.25
      %vm3682 = vcmp.gt.f32.partialorder %v3666, 0.25
      %vm3683 = vcmp.gt.f32.partialorder %v3667, 0.25
      %vm3684 = vcmp.gt.f32.partialorder %v3668, 0.25
      %v3685 = vsel %vm3677, 1, 0
      %v3686 = vsel %vm3678, 1, 0
      %v3687 = vsel %vm3679, 1, 0
      %v3688 = vsel %vm3680, 1, 0
      %v3689 = vsel %vm3681, 1, 0
      %v3690 = vsel %vm3682, 1, 0
      %v3691 = vsel %vm3683, 1, 0
      %v3692 = vsel %vm3684, 1, 0
      %v3693 = vcvt.s32.f32 %v3685
      %v3694 = vcvt.s32.f32 %v3686
      %v3695 = vcvt.s32.f32 %v3687
      %v3696 = vcvt.s32.f32 %v3688
      %v3697 = vcvt.s32.f32 %v3689
      %v3698 = vcvt.s32.f32 %v3690
      %v3699 = vcvt.s32.f32 %v3691
      %v3700 = vcvt.s32.f32 %v3692
      %v3701 = vpack.c.bf16 %v3694, %v3693
      %v3702 = vpack.c.bf16 %v3696, %v3695
      %v3703 = vpack.c.bf16 %v3698, %v3697
      %v3704 = vpack.c.bf16 %v3700, %v3699
      %3705 = vst.msk [vmem:[#allocation17] sm:$0xff] %vm2763, %v3701
      %3706 = vst.msk [vmem:[#allocation17 + $0x8] sm:$0xff] %vm2763, %v3702
      %3707 = vst.msk [vmem:[#allocation17 + $0x10] sm:$0xff] %vm2763, %v3703
      %3708 = vst.msk [vmem:[#allocation17 + $0x18] sm:$0xff] %vm2763, %v3704
      %v3709 = vld [vmem:[%s18] sm:$0xf]
      %v3710 = vld [vmem:[%s18 + $0x4] sm:$0xf]
      %v3711 = vld [vmem:[%s18 + $0x8] sm:$0xf]
      %v3712 = vld [vmem:[%s18 + $0xc] sm:$0xf]
      %v3713 = vld [vmem:[%s19] sm:$0xff]
      %v3714 = vld [vmem:[%s19 + $0x8] sm:$0xff]
      %v3715 = vld [vmem:[%s19 + $0x10] sm:$0xff]
      %v3716 = vld [vmem:[%s19 + $0x18] sm:$0xff]
      %3718 = vset.pattern.permute.xlu0 0
      %3719 = vperm.xlu0 %3718, %v3713
      %v3720 = vpop.permute.xlu0 %3719
      %3723 = vset.pattern.permute.xlu0 0
      %3724 = vperm.xlu0 %3723, %v3714
      %v3725 = vpop.permute.xlu0 %3724
      %3728 = vset.pattern.permute.xlu0 0
      %3729 = vperm.xlu0 %3728, %v3715
      %v3730 = vpop.permute.xlu0 %3729
      %3733 = vset.pattern.permute.xlu0 0
      %3734 = vperm.xlu0 %3733, %v3716
      %v3735 = vpop.permute.xlu0 %3734
      %v3741 = vunpack.c.l.b16 %v3709
      %v3742 = vunpack.c.l.b16 %v3710
      %v3743 = vunpack.c.l.b16 %v3711
      %v3744 = vunpack.c.l.b16 %v3712
      %v3745 = vpack.c.b16 %v3742, %v3741
      %v3746 = vpack.c.b16 %v3744, %v3743
      %v3748 = vsel %vm2674, %v3745, 0
      %v3751 = vsel %vm2674, %v3746, 0
      %3753 = vmatprep.subr.bf16.mxu0 0
      %3754 = vmatpush1.bf16.msra.mxu0 %v3701
      %3755 = vmatprep.subr.bf16.mxu0 0
      %3756 = vmatpush1.bf16.msra.mxu0 %v3702
      %3757 = vmatprep.subr.bf16.mxu0 0
      %3758 = vmatpush1.bf16.msra.mxu0 %v3703
      %3759 = vmatprep.subr.bf16.mxu0 0
      %3760 = vmatpush1.bf16.msra.mxu0 %v3704
      %3761 = vmatprep.subr.bf16.mxu0 0
      %3762 = vmatpush1.bf16.msra.mxu0 0
      %3763 = vmatprep.subr.bf16.mxu0 0
      %3764 = vmatpush1.bf16.msra.mxu0 0
      %3765 = vmatprep.subr.bf16.mxu0 0
      %3766 = vmatpush1.bf16.msra.mxu0 0
      %3767 = vmatprep.subr.bf16.mxu0 0
      %3768 = vmatpush1.bf16.msra.mxu0 0
      %3769 = vmatprep.subr.bf16.mxu0 0
      %3770 = vmatpush1.bf16.msra.mxu0 0
      %3771 = vmatprep.subr.bf16.mxu0 0
      %3772 = vmatpush1.bf16.msra.mxu0 0
      %3773 = vmatprep.subr.bf16.mxu0 0
      %3774 = vmatpush1.bf16.msra.mxu0 0
      %3775 = vmatprep.subr.bf16.mxu0 0
      %3776 = vmatpush1.bf16.msra.mxu0 0
      %3777 = vmatprep.subr.bf16.mxu0 0
      %3778 = vmatpush1.bf16.msra.mxu0 0
      %3779 = vmatprep.subr.bf16.mxu0 0
      %3780 = vmatpush1.bf16.msra.mxu0 0
      %3781 = vmatprep.subr.bf16.mxu0 0
      %3782 = vmatpush1.bf16.msra.mxu0 0
      %3783 = vmatprep.subr.bf16.mxu0 0
      %3784 = vmatpush1.bf16.msra.mxu0 0
      %3785 = vmatprep.mubr.bf16.mxu0 0
      %3786 = vmatmul.mubr.bf16.gmra.mrb[0].mxu0 %v3748
      %v3787 = vpop.f32.mrb[0].mxu0
      %v3788 = vadd.f32 %v3720, %v3787
      %v3789 = vpop.f32.mrb[0].mxu0
      %v3790 = vpop.f32.mrb[0].mxu0
      %v3791 = vadd.f32 %v3725, %v3790
      %v3792 = vpop.f32.mrb[0].mxu0
      %3793 = vmatprep.mubr.bf16.mxu0 0
      %3794 = vmatmul.mubr.bf16.gmra.mrb[0].mxu0 %v3751
      %v3795 = vpop.f32.mrb[0].mxu0
      %v3796 = vadd.f32 %v3730, %v3795
      %v3797 = vpop.f32.mrb[0].mxu0
      %v3798 = vpop.f32.mrb[0].mxu0
      %v3799 = vadd.f32 %v3735, %v3798
      %v3800 = vpop.f32.mrb[0].mxu0
      %3801 = vdwg.mxu0
      %v3802 = vld [vmem:[#allocation19] sm:$0xff]
      %v3803 = vld [vmem:[#allocation19 + $0x8] sm:$0xff]
      %v3804 = vunpack.c.l.bf16 %v3802
      %v3805 = vunpack.c.h.bf16 %v3802
      %v3806 = vunpack.c.l.bf16 %v3803
      %v3807 = vunpack.c.h.bf16 %v3803
      %v3808 = vld [vmem:[#allocation18] sm:$0xff]
      %v3809 = vld [vmem:[#allocation18 + $0x8] sm:$0xff]
      %v3810 = vld [vmem:[#allocation18 + $0x10] sm:$0xff]
      %v3811 = vld [vmem:[#allocation18 + $0x18] sm:$0xff]
      %v3812 = vsub.f32 1.0, %v3804
      %v3813 = vsub.f32 1.0, %v3805
      %v3814 = vsub.f32 1.0, %v3806
      %v3815 = vsub.f32 1.0, %v3807
      %v3816 = vmul.f32 %v3812, 0.1
      %v3817 = vmul.f32 %v3813, 0.1
      %v3818 = vmul.f32 %v3814, 0.1
      %v3819 = vmul.f32 %v3815, 0.1
      %v3820 = vmul.f32 %v3808, %v3816
      %v3821 = vmul.f32 %v3809, %v3817
      %v3822 = vmul.f32 %v3810, %v3818
      %v3823 = vmul.f32 %v3811, %v3819
      %v3824 = vadd.f32 %v3820, %v3788
      %v3825 = vadd.f32 %v3821, %v3791
      %v3826 = vadd.f32 %v3822, %v3796
      %v3827 = vadd.f32 %v3823, %v3799
      %3828 = vst.msk [vmem:[#allocation18] sm:$0xff] %vm2763, %v3824
      %3829 = vst.msk [vmem:[#allocation18 + $0x8] sm:$0xff] %vm2763, %v3825
      %3830 = vst.msk [vmem:[#allocation18 + $0x10] sm:$0xff] %vm2763, %v3826
      %3831 = vst.msk [vmem:[#allocation18 + $0x18] sm:$0xff] %vm2763, %v3827
      %vm3832 = vcmp.gt.f32.partialorder %v3824, 0.25
      %vm3833 = vcmp.gt.f32.partialorder %v3825, 0.25
      %vm3834 = vcmp.gt.f32.partialorder %v3826, 0.25
      %vm3835 = vcmp.gt.f32.partialorder %v3827, 0.25
      %v3836 = vsel %vm3832, 1, 0
      %v3837 = vsel %vm3833, 1, 0
      %v3838 = vsel %vm3834, 1, 0
      %v3839 = vsel %vm3835, 1, 0
      %v3840 = vcvt.s32.f32 %v3836
      %v3841 = vcvt.s32.f32 %v3837
      %v3842 = vcvt.s32.f32 %v3838
      %v3843 = vcvt.s32.f32 %v3839
      %v3844 = vpack.c.bf16 %v3841, %v3840
      %v3845 = vpack.c.bf16 %v3843, %v3842
      %3846 = vst.msk [vmem:[#allocation19] sm:$0xff] %vm2763, %v3844
      %3847 = vst.msk [vmem:[#allocation19 + $0x8] sm:$0xff] %vm2763, %v3845
      %v3848 = vld [vmem:[%s20] sm:$0xf]
      %v3849 = vld [vmem:[%s20 + $0x4] sm:$0x1]
      %v3850 = vld [vmem:[%s21] sm:$0xff]
      %v3851 = vld [vmem:[%s21 + $0x8] sm:$0x3]
      %3853 = vset.pattern.permute.xlu0 0
      %3854 = vperm.xlu0 %3853, %v3850
      %v3855 = vpop.permute.xlu0 %3854
      %3858 = vset.pattern.permute.xlu0 0
      %3859 = vperm.xlu0 %3858, %v3851
      %v3860 = vpop.permute.xlu0 %3859
      %v3864 = vunpack.c.l.b16 %v3848
      %v3865 = vunpack.c.l.b16 %v3849
      %v3866 = vpack.c.b16 %v3865, %v3864
      %vm3867 = vcmask 261120
      %v3869 = vsel %vm3867, %v3866, 0
      %3871 = vmatprep.subr.bf16.mxu0 0
      %3872 = vmatpush1.bf16.msra.mxu0 %v3844
      %3873 = vmatprep.subr.bf16.mxu0 0
      %3874 = vmatpush1.bf16.msra.mxu0 %v3845
      %3875 = vmatprep.subr.bf16.mxu0 0
      %3876 = vmatpush1.bf16.msra.mxu0 0
      %3877 = vmatprep.subr.bf16.mxu0 0
      %3878 = vmatpush1.bf16.msra.mxu0 0
      %3879 = vmatprep.subr.bf16.mxu0 0
      %3880 = vmatpush1.bf16.msra.mxu0 0
      %3881 = vmatprep.subr.bf16.mxu0 0
      %3882 = vmatpush1.bf16.msra.mxu0 0
      %3883 = vmatprep.subr.bf16.mxu0 0
      %3884 = vmatpush1.bf16.msra.mxu0 0
      %3885 = vmatprep.subr.bf16.mxu0 0
      %3886 = vmatpush1.bf16.msra.mxu0 0
      %3887 = vmatprep.subr.bf16.mxu0 0
      %3888 = vmatpush1.bf16.msra.mxu0 0
      %3889 = vmatprep.subr.bf16.mxu0 0
      %3890 = vmatpush1.bf16.msra.mxu0 0
      %3891 = vmatprep.subr.bf16.mxu0 0
      %3892 = vmatpush1.bf16.msra.mxu0 0
      %3893 = vmatprep.subr.bf16.mxu0 0
      %3894 = vmatpush1.bf16.msra.mxu0 0
      %3895 = vmatprep.subr.bf16.mxu0 0
      %3896 = vmatpush1.bf16.msra.mxu0 0
      %3897 = vmatprep.subr.bf16.mxu0 0
      %3898 = vmatpush1.bf16.msra.mxu0 0
      %3899 = vmatprep.subr.bf16.mxu0 0
      %3900 = vmatpush1.bf16.msra.mxu0 0
      %3901 = vmatprep.subr.bf16.mxu0 0
      %3902 = vmatpush1.bf16.msra.mxu0 0
      %3903 = vmatprep.mubr.bf16.mxu0 0
      %3904 = vmatmul.mubr.bf16.gmra.mrb[0].mxu0 %v3869
      %v3905 = vpop.f32.mrb[0].mxu0
      %v3906 = vadd.f32 %v3855, %v3905
      %v3907 = vpop.f32.mrb[0].mxu0
      %v3908 = vpop.f32.mrb[0].mxu0
      %v3909 = vadd.f32 %v3860, %v3908
      %v3910 = vpop.f32.mrb[0].mxu0
      %3911 = vdwg.mxu0
      %v3912 = vld [vmem:[#allocation20] sm:$0xff]
      %v3913 = vld [vmem:[#allocation20 + $0x8] sm:$0x3]
      %v3914 = vld [vmem:[#allocation21] sm:$0xff]
      %v3915 = vld [vmem:[#allocation21 + $0x8] sm:$0x3]
      %v3916 = vsub.f32 1.0, %v3914
      %v3917 = vsub.f32 1.0, %v3915
      %v3918 = vmul.f32 %v3916, 0.1
      %v3919 = vmul.f32 %v3917, 0.1
      %v3920 = vmul.f32 %v3912, %v3918
      %v3921 = vmul.f32 %v3913, %v3919
      %v3922 = vadd.f32 %v3920, %v3906
      %v3923 = vadd.f32 %v3921, %v3909
      %vm3924 = vcmp.gt.f32.partialorder %v3922, 0.25
      %vm3925 = vcmp.gt.f32.partialorder %v3923, 0.25
      %v3926 = vsel %vm3924, 1, 0
      %v3927 = vsel %vm3925, 1, 0
      %v3928 = vcvt.s32.f32 %v3926
      %v3929 = vcvt.s32.f32 %v3927
      %3930 = vst.msk [vmem:[#allocation20] sm:$0xff] %vm2763, %v3922
      %vm3931 = vcmask 123904
      %3932 = vst.msk [vmem:[#allocation20 + $0x8] sm:$0x3] %vm3931, %v3923
      %3933 = vst.msk [vmem:[#allocation21] sm:$0xff] %vm2763, %v3928
      %3934 = vst.msk [vmem:[#allocation21 + $0x8] sm:$0x3] %vm3931, %v3929
      %v3935 = vld [vmem:[%s706] sm:$0xff]
      %v3936 = vld [vmem:[%s706 + $0x8] sm:$0x3]
      %v3937 = vadd.f32 %v3935, %v3928
      %v3938 = vadd.f32 %v3936, %v3929
      %3939 = vst.msk [vmem:[%s706] sm:$0xff] %vm2763, %v3937
      %3940 = vst.msk [vmem:[%s706 + $0x8] sm:$0x3] %vm3931, %v3938
      %p3941 = scmp.lt.s32.totalorder %s37, 1
      %s3942 = scalar_select %p3941, %s37, 1
      %s3943 = smul.addr %s3942, 2
      %s3944 = smul.addr %s3943, 8
      %s3945 = scalar_lea.vmem %s22, %s3944
      // Predicated region
      $region113: #{scnn_forward.1} parent=107 // pred_check
        %p3946 = pneg %p532
      $region114: #{scnn_forward.1} parent=107 // pred_check_branch
        %3948 = sbr.rel (%p3946) target = $region116
      $region115: #{scnn_forward.1} parent=107 // pred_region
        _
      $region116: #{scnn_forward.1} parent=107 // pred_fallthru
        _
    $region108: #{scnn_forward.1} parent=5 // pred_fallthru
      _
    %p3949 = scmp.le.s32.totalorder 2, %s28
    // Predicated region
    $region117: #{scnn_forward.1} parent=5 // pred_check
      %p3950 = pneg %p3949
    $region118: #{scnn_forward.1} parent=5 // pred_check_branch
      %3952 = sbr.rel (%p3950) target = $region120
    $region119: #{scnn_forward.1} parent=5 // pred_region
      %s3953 = ssub.s32 %s28, 2
      // Predicated region
      $region121: #{scnn_forward.1} parent=119 // pred_check
        %p3954 = pneg %p538
      $region122: #{scnn_forward.1} parent=119 // pred_check_branch
        %3956 = sbr.rel (%p3954) target = $region124
      $region123: #{scnn_forward.1} parent=119 // pred_region
        %p3957 = scmp.lt.s32.totalorder %s39, 1
        %s3958 = scalar_select %p3957, %s39, 1
        %s3959 = smul.addr %s3958, 2
        %s3960 = smul.addr %s3959, 8
        %s3961 = scalar_lea.vmem %s22, %s3960
      $region124: #{scnn_forward.1} parent=119 // pred_fallthru
        _
    $region120: #{scnn_forward.1} parent=5 // pred_fallthru
      _
  $region6: #{scnn_forward.1} parent=0 // loop_footer
    %s32 = sadd.s32 1, %s28
  $region7: #{scnn_forward.1} parent=0 // loop_footer_branch
    %27 = sbr.rel target = $region3
  $region8: #{scnn_forward.1} parent=0 // loop_exit
    _

</llo_original>
